<compile_context>
chip_gen: v7x
topology: tpu7x:2x2x1
jax: 0.10.0
libtpu: 0.0.40
codegen_flags: <defaults>
</compile_context>

<pallas_src>
import functools

import jax
import jax.numpy as jnp
from jax import lax
from jax.experimental import pallas as pl
from jax.experimental.pallas import tpu as pltpu


def _argmax_first(x, axis, keepdims=False):
    # first-index argmax using only max/min/iota/where (robust Mosaic lowering)
    m = jnp.max(x, axis=axis, keepdims=True)
    idx = lax.broadcasted_iota(jnp.int32, x.shape, axis)
    cand = jnp.where(x == m, idx, jnp.int32(x.shape[axis]))
    return jnp.min(cand, axis=axis, keepdims=keepdims)


def _pick_batch_tile(B, requested):
    if requested is not None:
        assert B % requested == 0
        return requested
    # Prefer large MXU-filling tiles, but keep >=2 grid steps when possible so the
    # "parallel" grid axis can shard across both v7x TensorCores.
    for cand in (256, 128, 64, 32, 16, 8):
        if B % cand == 0 and B // cand >= 2:
            return cand
    for cand in (256, 128, 64, 32, 16, 8):
        if B % cand == 0:
            return cand
    return B


def _gate_major(w_f, w_b):
    """Interleave forward/backward columns at gate granularity.

    Inputs are (n_in, 4H) with PyTorch gate order [i f g o]; output is (n_in, 8H)
    with column blocks [ i_f i_b | f_f f_b | g_f g_b | o_f o_b ] (each width H).
    """
    n_in, h4 = w_f.shape
    h = h4 // 4
    wf = w_f.reshape(n_in, 4, h)
    wb = w_b.reshape(n_in, 4, h)
    return jnp.concatenate([wf, wb], axis=2).reshape(n_in, 8 * h)


# ----------------------------------------------------------------------------
# Fused kernel: BiLSTM + hidden2tag + CRF Viterbi decode
# ----------------------------------------------------------------------------
def _ner_fused_kernel(x_ref, lens_ref, wih_ref, whh_ref, bias_ref,
                      wtf_ref, wtb_ref, bt_ref,
                      trans_ref, start_ref, end_ref,
                      tags_ref,
                      xg_ref, outf_ref, outb_ref, emis_ref, hist_ref,
                      *, T, TB, E, H, K, unroll):
    H2 = 2 * H
    H8 = 8 * H

    # ---- 1) hoisted input projection: one bf16 MXU matmul covers both directions ----
    x_flat = x_ref[...].reshape(T * TB, E)                              # bf16
    xg = jnp.dot(x_flat, wih_ref[...], preferred_element_type=jnp.float32)
    xg_ref[...] = (xg + bias_ref[...]).reshape(T, TB, H8)               # f32 scratch

    whh = whh_ref[...]                                                  # (2H, 8H) bf16

    # lane masks (hoisted; loop-invariant)
    lane = lax.broadcasted_iota(jnp.int32, (TB, H8), 1)
    fwd_mask = (lane % H2) < H                       # forward-direction lanes per gate block
    g_mask = (lane >= 2 * H2) & (lane < 3 * H2)      # the "g" (cell) gate block -> tanh

    # ---- 2) merged forward/backward recurrence: one (TB,2H)@(2H,8H) matmul per step ----
    def step(i, carry):
        h_cat, c_cat = carry                         # (TB, 2H) f32: [fwd | bwd]
        t_f = i
        t_b = T - 1 - i
        # forward lanes take x-gates from time t_f, backward lanes from time t_b
        xg_t = jnp.where(fwd_mask, xg_ref[t_f], xg_ref[t_b])            # (TB, 8H) f32
        g = xg_t + jnp.dot(h_cat.astype(jnp.bfloat16), whh,
                           preferred_element_type=jnp.float32)          # (TB, 8H) f32
        # full-width activations + lane-select instead of 8 narrow gate slices
        act = jnp.where(g_mask, jnp.tanh(g), jax.nn.sigmoid(g))
        i_g = act[:, 0:H2]
        f_g = act[:, H2:2 * H2]
        g_g = act[:, 2 * H2:3 * H2]
        o_g = act[:, 3 * H2:4 * H2]
        c_cat = f_g * c_cat + i_g * g_g
        h_cat = o_g * jnp.tanh(c_cat)
        outf_ref[t_f] = h_cat[:, :H]
        outb_ref[t_b] = h_cat[:, H:]
        return h_cat, c_cat

    z = jnp.zeros((TB, H2), jnp.float32)
    lax.fori_loop(0, T, step, (z, z), unroll=unroll)

    # TODO(synk): nn.Dropout is identity in eval mode; training-mode dropout not modeled.
    # ---- 3) hidden2tag projection -> emissions (kept in VMEM) ----
    flat_f = outf_ref[...].reshape(T * TB, H).astype(jnp.bfloat16)
    flat_b = outb_ref[...].reshape(T * TB, H).astype(jnp.bfloat16)
    logits = (jnp.dot(flat_f, wtf_ref[...], preferred_element_type=jnp.float32)
              + jnp.dot(flat_b, wtb_ref[...], preferred_element_type=jnp.float32)
              + bt_ref[...])
    emis_ref[...] = logits.reshape(T, TB, K)

    # ---- 4) CRF Viterbi decode (torchcrf semantics, contiguous mask from lengths) ----
    lens = lens_ref[...]                             # (TB, 1) int32 = sum(char != 0)
    seq_end = lens - 1
    trans = trans_ref[...]                           # (K, K) f32 [prev, next]

    score0 = start_ref[...] + emis_ref[0]            # (TB, K)

    def fwd_step(t, score):
        # running max/argmax over the tiny static prev-tag axis: pure 2-D VPU work,
        # no (TB, K, K) padded intermediate.
        best = score[:, 0:1] + trans[0:1, :]
        argbest = jnp.zeros((TB, K), jnp.int32)
        for p in range(1, K):
            cand = score[:, p:p + 1] + trans[p:p + 1, :]
            upd = cand > best                        # strict > keeps first-index argmax
            argbest = jnp.where(upd, jnp.int32(p), argbest)
            best = jnp.maximum(best, cand)
        hist_ref[t] = argbest
        nxt = best + emis_ref[t]
        return jnp.where(t < lens, nxt, score)

    score = lax.fori_loop(1, T, fwd_step, score0, unroll=unroll)
    score = score + end_ref[...]

    best_tag = _argmax_first(score, axis=1, keepdims=True)              # (TB, 1)
    col = lax.broadcasted_iota(jnp.int32, (TB, T), 1)
    tags = jnp.where(col == seq_end, best_tag, jnp.zeros((TB, T), jnp.int32))

    def bwd_step(i, carry):
        tags, best = carry
        t = T - 1 - i                                                   # t: T-1 .. 1
        hist_t = hist_ref[t]                                            # (TB, K)
        onehot = lax.broadcasted_iota(jnp.int32, (TB, K), 1) == best
        prev = jnp.sum(jnp.where(onehot, hist_t, 0), axis=1, keepdims=True)
        active = t <= seq_end                                           # (TB, 1)
        new_best = jnp.where(active, prev, best)
        tags = jnp.where((col == (t - 1)) & active, new_best, tags)
        return tags, new_best

    tags, _ = lax.fori_loop(0, T - 1, bwd_step, (tags, best_tag), unroll=unroll)
    tags_ref[...] = tags


def ner_decode(x_tbe, lens_b1, params, *, batch_tile=None):
    T, B, E = x_tbe.shape
    H = params["whh_f"].shape[0]
    K = params["trans"].shape[0]
    tb = _pick_batch_tile(B, batch_tile)
    grid = (B // tb,)
    unroll = True if T <= 32 else 8

    # combined weights (gate-major, fwd/bwd interleaved per gate), bf16 MXU operands
    wih = _gate_major(params["wih_f"], params["wih_b"]).astype(jnp.bfloat16)   # (E, 8H)
    zeros_h = jnp.zeros((H, 4 * H), jnp.float32)
    whh = _gate_major(jnp.concatenate([params["whh_f"], zeros_h], axis=0),
                      jnp.concatenate([zeros_h, params["whh_b"]], axis=0)
                      ).astype(jnp.bfloat16)                                   # (2H, 8H)
    bias = _gate_major(params["b_f"], params["b_b"])                           # (1, 8H) f32
    wt_f = params["wt"][:H].astype(jnp.bfloat16)                               # (H, K)
    wt_b = params["wt"][H:].astype(jnp.bfloat16)                               # (H, K)

    kernel = functools.partial(_ner_fused_kernel, T=T, TB=tb, E=E, H=H, K=K, unroll=unroll)

    def full(a):
        return pl.BlockSpec(a.shape, lambda b, _n=a.ndim: (0,) * _n)

    return pl.pallas_call(
        kernel,
        out_shape=jax.ShapeDtypeStruct((B, T), jnp.int32),
        grid=grid,
        in_specs=[
            pl.BlockSpec((T, tb, E), lambda b: (0, b, 0)),   # embeddings (time-major)
            pl.BlockSpec((tb, 1), lambda b: (b, 0)),         # sequence lengths
            full(wih), full(whh), full(bias),
            full(wt_f), full(wt_b), full(params["bt"]),
            full(params["trans"]), full(params["start"]), full(params["end"]),
        ],
        out_specs=pl.BlockSpec((tb, T), lambda b: (b, 0)),
        scratch_shapes=[
            pltpu.VMEM((T, tb, 8 * H), jnp.float32),   # hoisted x-gates (+bias)
            pltpu.VMEM((T, tb, H), jnp.float32),       # forward hidden states
            pltpu.VMEM((T, tb, H), jnp.float32),       # backward hidden states
            pltpu.VMEM((T, tb, K), jnp.float32),       # emissions (never leave VMEM)
            pltpu.VMEM((T, tb, K), jnp.int32),         # Viterbi backpointers
        ],
        compiler_params=pltpu.CompilerParams(
            dimension_semantics=("parallel",),
            vmem_limit_bytes=64 * 1024 * 1024),
    )(x_tbe.astype(jnp.bfloat16), lens_b1, wih, whh, bias,
      wt_f, wt_b, params["bt"], params["trans"], params["start"], params["end"])


# ----------------------------------------------------------------------------
# NER forward wrapper (embedding lookups + fused kernel)
# ----------------------------------------------------------------------------
def ner_forward(params, char_ids, word_ids, *, batch_tile=None):
    # mask = (char != 0) as in the PyTorch module; assumed left-aligned/contiguous,
    # represented by per-sequence lengths (torchcrf decode semantics preserved).
    lens = jnp.sum((char_ids != 0).astype(jnp.int32), axis=1, keepdims=True)   # (B, 1)
    emb_c = jnp.take(params["char_emb"], char_ids, axis=0)                     # (B, T, Dc)
    emb_w = jnp.take(params["word_emb"], word_ids, axis=0)                     # (B, T, Dw)
    x = jnp.concatenate([emb_c, emb_w], axis=-1).astype(jnp.float32)           # (B, T, E)
    x_tbe = jnp.transpose(x, (1, 0, 2))                                        # (T, B, E)
    # Output is int32; PyTorch returns LongTensor (int64) — identical values.
    return ner_decode(x_tbe, lens, params, batch_tile=batch_tile)


def init_params(key, char_vocab, word_vocab, char_dim, word_dim, hidden, tags):
    keys = jax.random.split(key, 16)
    E = char_dim + word_dim
    k_lstm = 1.0 / jnp.sqrt(hidden)

    def uni(k, shape, bound):
        return jax.random.uniform(k, shape, jnp.float32, -bound, bound)

    return {
        "char_emb": jax.random.normal(keys[0], (char_vocab, char_dim), jnp.float32),
        "word_emb": jax.random.normal(keys[1], (word_vocab, word_dim), jnp.float32),
        # forward direction (weights stored transposed: (in, out), gate order [i f g o])
        "wih_f": uni(keys[2], (E, 4 * hidden), k_lstm),
        "whh_f": uni(keys[3], (hidden, 4 * hidden), k_lstm),
        "b_f":   uni(keys[4], (1, 4 * hidden), k_lstm) + uni(keys[5], (1, 4 * hidden), k_lstm),
        # backward direction
        "wih_b": uni(keys[6], (E, 4 * hidden), k_lstm),
        "whh_b": uni(keys[7], (hidden, 4 * hidden), k_lstm),
        "b_b":   uni(keys[8], (1, 4 * hidden), k_lstm) + uni(keys[9], (1, 4 * hidden), k_lstm),
        # hidden2tag linear (stored transposed: (2H, K))
        "wt": uni(keys[10], (2 * hidden, tags), 1.0 / jnp.sqrt(2 * hidden)),
        "bt": uni(keys[11], (1, tags), 1.0 / jnp.sqrt(2 * hidden)),
        # CRF params (torchcrf init: uniform(-0.1, 0.1))
        "trans": uni(keys[12], (tags, tags), 0.1),
        "start": uni(keys[13], (1, tags), 0.1),
        "end":   uni(keys[14], (1, tags), 0.1),
    }


if __name__ == "__main__":
    B, T = 16, 8
    char_vocab, word_vocab = 20, 20
    char_dim, word_dim = 16, 16
    hidden, tags = 32, 5
    dropout_rate = 0.1  # eval-mode dropout => identity

    key = jax.random.PRNGKey(0)
    kp, kc, kw = jax.random.split(key, 3)
    params = init_params(kp, char_vocab, word_vocab, char_dim, word_dim, hidden, tags)

    char_ids = jax.random.randint(kc, (B, T), 1, char_vocab, dtype=jnp.int32)
    word_ids = jax.random.randint(kw, (B, T), 1, word_vocab, dtype=jnp.int32)
    # give a couple of sequences trailing padding (char id 0 -> masked out)
    char_ids = char_ids.at[0, 5:].set(0)
    char_ids = char_ids.at[1, 3:].set(0)

    tags_out = ner_forward(params, char_ids, word_ids)
    tags_out = jax.block_until_ready(tags_out)
    assert tags_out.shape == (B, T)
    assert tags_out.dtype == jnp.int32
    assert bool(jnp.all((tags_out >= 0) & (tags_out < tags)))
    print("KERNEL_OK")
</pallas_src>

<mosaic_0001>
module attributes {stable_mosaic.version = 11 : i64} {
  func.func @_ner_fused_kernel(%arg0: i32, %arg1: memref<8x8x32xbf16, #tpu.memory_space<vmem>>, %arg2: memref<8x1xi32, #tpu.memory_space<vmem>>, %arg3: memref<32x256xbf16, #tpu.memory_space<vmem>>, %arg4: memref<64x256xbf16, #tpu.memory_space<vmem>>, %arg5: memref<1x256xf32, #tpu.memory_space<vmem>>, %arg6: memref<32x5xbf16, #tpu.memory_space<vmem>>, %arg7: memref<32x5xbf16, #tpu.memory_space<vmem>>, %arg8: memref<1x5xf32, #tpu.memory_space<vmem>>, %arg9: memref<5x5xf32, #tpu.memory_space<vmem>>, %arg10: memref<1x5xf32, #tpu.memory_space<vmem>>, %arg11: memref<1x5xf32, #tpu.memory_space<vmem>>, %arg12: memref<8x8xi32, #tpu.memory_space<vmem>>, %arg13: memref<8x8x256xf32, #tpu.memory_space<vmem>>, %arg14: memref<8x8x32xf32, #tpu.memory_space<vmem>>, %arg15: memref<8x8x32xf32, #tpu.memory_space<vmem>>, %arg16: memref<8x8x5xf32, #tpu.memory_space<vmem>>, %arg17: memref<8x8x5xi32, #tpu.memory_space<vmem>>) attributes {dimension_semantics = [#tpu.dimension_semantics<parallel>], iteration_bounds = array<i64: 2>, scalar_prefetch = 0 : i64, scratch_operands = 5 : i64, tpu.core_type = #tpu.core_type<tc>, window_params = [{transform_indices = @transform_0, window_bounds = array<i64: 8, 8, 32>}, {transform_indices = @transform_1, window_bounds = array<i64: 8, 1>}, {pipeline_mode = #tpu.pipeline_mode<synchronous>, transform_indices = @transform_2, window_bounds = array<i64: 32, 256>}, {pipeline_mode = #tpu.pipeline_mode<synchronous>, transform_indices = @transform_3, window_bounds = array<i64: 64, 256>}, {pipeline_mode = #tpu.pipeline_mode<synchronous>, transform_indices = @transform_4, window_bounds = array<i64: 1, 256>}, {pipeline_mode = #tpu.pipeline_mode<synchronous>, transform_indices = @transform_5, window_bounds = array<i64: 32, 5>}, {pipeline_mode = #tpu.pipeline_mode<synchronous>, transform_indices = @transform_6, window_bounds = array<i64: 32, 5>}, {pipeline_mode = #tpu.pipeline_mode<synchronous>, transform_indices = @transform_7, window_bounds = array<i64: 1, 5>}, {pipeline_mode = #tpu.pipeline_mode<synchronous>, transform_indices = @transform_8, window_bounds = array<i64: 5, 5>}, {pipeline_mode = #tpu.pipeline_mode<synchronous>, transform_indices = @transform_9, window_bounds = array<i64: 1, 5>}, {pipeline_mode = #tpu.pipeline_mode<synchronous>, transform_indices = @transform_10, window_bounds = array<i64: 1, 5>}, {transform_indices = @transform_11, window_bounds = array<i64: 8, 8>}]} {
    %c0 = arith.constant 0 : index
    %c0_0 = arith.constant 0 : index
    %c0_1 = arith.constant 0 : index
    %0 = vector.load %arg1[%c0, %c0_0, %c0_1] : memref<8x8x32xbf16, #tpu.memory_space<vmem>>, vector<8x8x32xbf16>
    %1 = vector.shape_cast %0 : vector<8x8x32xbf16> to vector<64x32xbf16>
    %c0_2 = arith.constant 0 : index
    %c0_3 = arith.constant 0 : index
    %2 = vector.load %arg3[%c0_2, %c0_3] : memref<32x256xbf16, #tpu.memory_space<vmem>>, vector<32x256xbf16>
    %cst = arith.constant dense<0.000000e+00> : vector<64x256xf32>
    %3 = tpu.matmul %1, %2, %cst {dimension_numbers = #tpu.dot_dimension_numbers<[1], [0], [0], [1], [0, 0, 1, 1], [], []>} : vector<64x32xbf16>, vector<32x256xbf16>, vector<64x256xf32> -> vector<64x256xf32>
    %c0_4 = arith.constant 0 : index
    %c0_5 = arith.constant 0 : index
    %4 = vector.load %arg5[%c0_4, %c0_5] : memref<1x256xf32, #tpu.memory_space<vmem>>, vector<1x256xf32>
    %5 = vector.broadcast %4 : vector<1x256xf32> to vector<64x256xf32>
    %6 = arith.addf %3, %5 : vector<64x256xf32>
    %7 = vector.shape_cast %6 : vector<64x256xf32> to vector<8x8x256xf32>
    %c0_6 = arith.constant 0 : index
    %c0_7 = arith.constant 0 : index
    %c0_8 = arith.constant 0 : index
    %8 = vector.load %arg13[%c0_6, %c0_7, %c0_8] : memref<8x8x256xf32, #tpu.memory_space<vmem>>, vector<8x8x256xf32>
    tpu.vector_store %arg13[%c0_6, %c0_7, %c0_8], %7 {strides = array<i32>} : memref<8x8x256xf32, #tpu.memory_space<vmem>>, vector<8x8x256xf32>,
    %c0_9 = arith.constant 0 : index
    %c0_10 = arith.constant 0 : index
    %9 = vector.load %arg4[%c0_9, %c0_10] : memref<64x256xbf16, #tpu.memory_space<vmem>>, vector<64x256xbf16>
    %10 = tpu.iota {dimensions = array<i32: 1>} : vector<8x256xi32>
    %c64_i32 = arith.constant 64 : i32
    %c0_i32 = arith.constant 0 : i32
    %11 = arith.cmpi eq, %c64_i32, %c0_i32 : i32
    %c1_i32 = arith.constant 1 : i32
    %12 = arith.select %11, %c1_i32, %c64_i32 : i32
    %13 = vector.broadcast %12 : i32 to vector<8x256xi32>
    %14 = arith.remsi %10, %13 : vector<8x256xi32>
    %c0_i32_11 = arith.constant 0 : i32
    %15 = vector.broadcast %c0_i32_11 : i32 to vector<8x256xi32>
    %16 = arith.cmpi ne, %14, %15 : vector<8x256xi32>
    %c0_i32_12 = arith.constant 0 : i32
    %17 = vector.broadcast %c0_i32_12 : i32 to vector<8x256xi32>
    %18 = arith.cmpi slt, %14, %17 : vector<8x256xi32>
    %c0_i32_13 = arith.constant 0 : i32
    %19 = arith.cmpi slt, %12, %c0_i32_13 : i32
    %20 = vector.broadcast %19 : i1 to vector<8x256xi1>
    %21 = vector.broadcast %20 : vector<8x256xi1> to vector<8x256xi1>
    %22 = arith.xori %18, %21 : vector<8x256xi1>
    %23 = arith.andi %22, %16 : vector<8x256xi1>
    %24 = vector.broadcast %12 : i32 to vector<8x256xi32>
    %25 = arith.addi %14, %24 : vector<8x256xi32>
    %26 = arith.select %23, %25, %14 : vector<8x256xi1>, vector<8x256xi32>
    %c32_i32 = arith.constant 32 : i32
    %27 = vector.broadcast %c32_i32 : i32 to vector<8x256xi32>
    %28 = arith.cmpi slt, %26, %27 : vector<8x256xi32>
    %c128_i32 = arith.constant 128 : i32
    %29 = vector.broadcast %c128_i32 : i32 to vector<8x256xi32>
    %30 = arith.cmpi sge, %10, %29 : vector<8x256xi32>
    %c192_i32 = arith.constant 192 : i32
    %31 = vector.broadcast %c192_i32 : i32 to vector<8x256xi32>
    %32 = arith.cmpi slt, %10, %31 : vector<8x256xi32>
    %33 = arith.andi %30, %32 : vector<8x256xi1>
    %cst_14 = arith.constant 0.000000e+00 : f32
    %34 = vector.broadcast %cst_14 : f32 to vector<8x64xf32>
    %c0_i32_15 = arith.constant 0 : i32
    %c7_i32 = arith.constant 7 : i32
    %35 = arith.subi %c7_i32, %c0_i32_15 : i32
    %36 = arith.index_cast %c0_i32_15 : i32 to index
    %c0_16 = arith.constant 0 : index
    %c0_17 = arith.constant 0 : index
    %37 = vector.load %arg13[%36, %c0_16, %c0_17] : memref<8x8x256xf32, #tpu.memory_space<vmem>>, vector<1x8x256xf32>
    %38 = vector.shape_cast %37 : vector<1x8x256xf32> to vector<8x256xf32>
    %39 = arith.index_cast %35 : i32 to index
    %c0_18 = arith.constant 0 : index
    %c0_19 = arith.constant 0 : index
    %40 = vector.load %arg13[%39, %c0_18, %c0_19] : memref<8x8x256xf32, #tpu.memory_space<vmem>>, vector<1x8x256xf32>
    %41 = vector.shape_cast %40 : vector<1x8x256xf32> to vector<8x256xf32>
    %42 = arith.select %28, %38, %41 : vector<8x256xi1>, vector<8x256xf32>
    %43 = arith.truncf %34 : vector<8x64xf32> to vector<8x64xbf16>
    %cst_20 = arith.constant dense<0.000000e+00> : vector<8x256xf32>
    %44 = tpu.matmul %43, %9, %cst_20 {dimension_numbers = #tpu.dot_dimension_numbers<[1], [0], [0], [1], [0, 0, 1, 1], [], []>} : vector<8x64xbf16>, vector<64x256xbf16>, vector<8x256xf32> -> vector<8x256xf32>
    %45 = arith.addf %42, %44 : vector<8x256xf32>
    %46 = math.tanh %45 : vector<8x256xf32>
    %47 = arith.negf %45 : vector<8x256xf32>
    %48 = math.exp %47 : vector<8x256xf32>
    %cst_21 = arith.constant 1.000000e+00 : f32
    %49 = vector.broadcast %cst_21 : f32 to vector<8x256xf32>
    %50 = arith.addf %49, %48 : vector<8x256xf32>
    %51 = arith.divf %49, %50 : vector<8x256xf32>
    %52 = arith.select %33, %46, %51 : vector<8x256xi1>, vector<8x256xf32>
    %53 = vector.extract_strided_slice %52 {offsets = [0, 0], sizes = [8, 64], strides = [1, 1]} : vector<8x256xf32> to vector<8x64xf32>
    %54 = vector.extract_strided_slice %52 {offsets = [0, 64], sizes = [8, 64], strides = [1, 1]} : vector<8x256xf32> to vector<8x64xf32>
    %55 = vector.extract_strided_slice %52 {offsets = [0, 128], sizes = [8, 64], strides = [1, 1]} : vector<8x256xf32> to vector<8x64xf32>
    %56 = vector.extract_strided_slice %52 {offsets = [0, 192], sizes = [8, 64], strides = [1, 1]} : vector<8x256xf32> to vector<8x64xf32>
    %57 = arith.mulf %54, %34 : vector<8x64xf32>
    %58 = arith.mulf %53, %55 : vector<8x64xf32>
    %59 = arith.addf %57, %58 : vector<8x64xf32>
    %60 = math.tanh %59 : vector<8x64xf32>
    %61 = arith.mulf %56, %60 : vector<8x64xf32>
    %62 = vector.extract_strided_slice %61 {offsets = [0, 0], sizes = [8, 32], strides = [1, 1]} : vector<8x64xf32> to vector<8x32xf32>
    %63 = arith.index_cast %c0_i32_15 : i32 to index
    %c0_22 = arith.constant 0 : index
    %c0_23 = arith.constant 0 : index
    %64 = vector.load %arg14[%63, %c0_22, %c0_23] : memref<8x8x32xf32, #tpu.memory_space<vmem>>, vector<1x8x32xf32>
    %65 = vector.shape_cast %64 : vector<1x8x32xf32> to vector<8x32xf32>
    %66 = vector.shape_cast %62 : vector<8x32xf32> to vector<1x8x32xf32>
    tpu.vector_store %arg14[%63, %c0_22, %c0_23], %66 {strides = array<i32>} : memref<8x8x32xf32, #tpu.memory_space<vmem>>, vector<1x8x32xf32>,
    %67 = vector.extract_strided_slice %61 {offsets = [0, 32], sizes = [8, 32], strides = [1, 1]} : vector<8x64xf32> to vector<8x32xf32>
    %68 = arith.index_cast %35 : i32 to index
    %c0_24 = arith.constant 0 : index
    %c0_25 = arith.constant 0 : index
    %69 = vector.load %arg15[%68, %c0_24, %c0_25] : memref<8x8x32xf32, #tpu.memory_space<vmem>>, vector<1x8x32xf32>
    %70 = vector.shape_cast %69 : vector<1x8x32xf32> to vector<8x32xf32>
    %71 = vector.shape_cast %67 : vector<8x32xf32> to vector<1x8x32xf32>
    tpu.vector_store %arg15[%68, %c0_24, %c0_25], %71 {strides = array<i32>} : memref<8x8x32xf32, #tpu.memory_space<vmem>>, vector<1x8x32xf32>,
    %c1_i32_26 = arith.constant 1 : i32
    %c7_i32_27 = arith.constant 7 : i32
    %72 = arith.subi %c7_i32_27, %c1_i32_26 : i32
    %73 = arith.index_cast %c1_i32_26 : i32 to index
    %c0_28 = arith.constant 0 : index
    %c0_29 = arith.constant 0 : index
    %74 = vector.load %arg13[%73, %c0_28, %c0_29] : memref<8x8x256xf32, #tpu.memory_space<vmem>>, vector<1x8x256xf32>
    %75 = vector.shape_cast %74 : vector<1x8x256xf32> to vector<8x256xf32>
    %76 = arith.index_cast %72 : i32 to index
    %c0_30 = arith.constant 0 : index
    %c0_31 = arith.constant 0 : index
    %77 = vector.load %arg13[%76, %c0_30, %c0_31] : memref<8x8x256xf32, #tpu.memory_space<vmem>>, vector<1x8x256xf32>
    %78 = vector.shape_cast %77 : vector<1x8x256xf32> to vector<8x256xf32>
    %79 = arith.select %28, %75, %78 : vector<8x256xi1>, vector<8x256xf32>
    %80 = arith.truncf %61 : vector<8x64xf32> to vector<8x64xbf16>
    %cst_32 = arith.constant dense<0.000000e+00> : vector<8x256xf32>
    %81 = tpu.matmul %80, %9, %cst_32 {dimension_numbers = #tpu.dot_dimension_numbers<[1], [0], [0], [1], [0, 0, 1, 1], [], []>} : vector<8x64xbf16>, vector<64x256xbf16>, vector<8x256xf32> -> vector<8x256xf32>
    %82 = arith.addf %79, %81 : vector<8x256xf32>
    %83 = math.tanh %82 : vector<8x256xf32>
    %84 = arith.negf %82 : vector<8x256xf32>
    %85 = math.exp %84 : vector<8x256xf32>
    %cst_33 = arith.constant 1.000000e+00 : f32
    %86 = vector.broadcast %cst_33 : f32 to vector<8x256xf32>
    %87 = arith.addf %86, %85 : vector<8x256xf32>
    %88 = arith.divf %86, %87 : vector<8x256xf32>
    %89 = arith.select %33, %83, %88 : vector<8x256xi1>, vector<8x256xf32>
    %90 = vector.extract_strided_slice %89 {offsets = [0, 0], sizes = [8, 64], strides = [1, 1]} : vector<8x256xf32> to vector<8x64xf32>
    %91 = vector.extract_strided_slice %89 {offsets = [0, 64], sizes = [8, 64], strides = [1, 1]} : vector<8x256xf32> to vector<8x64xf32>
    %92 = vector.extract_strided_slice %89 {offsets = [0, 128], sizes = [8, 64], strides = [1, 1]} : vector<8x256xf32> to vector<8x64xf32>
    %93 = vector.extract_strided_slice %89 {offsets = [0, 192], sizes = [8, 64], strides = [1, 1]} : vector<8x256xf32> to vector<8x64xf32>
    %94 = arith.mulf %91, %59 : vector<8x64xf32>
    %95 = arith.mulf %90, %92 : vector<8x64xf32>
    %96 = arith.addf %94, %95 : vector<8x64xf32>
    %97 = math.tanh %96 : vector<8x64xf32>
    %98 = arith.mulf %93, %97 : vector<8x64xf32>
    %99 = vector.extract_strided_slice %98 {offsets = [0, 0], sizes = [8, 32], strides = [1, 1]} : vector<8x64xf32> to vector<8x32xf32>
    %100 = arith.index_cast %c1_i32_26 : i32 to index
    %c0_34 = arith.constant 0 : index
    %c0_35 = arith.constant 0 : index
    %101 = vector.load %arg14[%100, %c0_34, %c0_35] : memref<8x8x32xf32, #tpu.memory_space<vmem>>, vector<1x8x32xf32>
    %102 = vector.shape_cast %101 : vector<1x8x32xf32> to vector<8x32xf32>
    %103 = vector.shape_cast %99 : vector<8x32xf32> to vector<1x8x32xf32>
    tpu.vector_store %arg14[%100, %c0_34, %c0_35], %103 {strides = array<i32>} : memref<8x8x32xf32, #tpu.memory_space<vmem>>, vector<1x8x32xf32>,
    %104 = vector.extract_strided_slice %98 {offsets = [0, 32], sizes = [8, 32], strides = [1, 1]} : vector<8x64xf32> to vector<8x32xf32>
    %105 = arith.index_cast %72 : i32 to index
    %c0_36 = arith.constant 0 : index
    %c0_37 = arith.constant 0 : index
    %106 = vector.load %arg15[%105, %c0_36, %c0_37] : memref<8x8x32xf32, #tpu.memory_space<vmem>>, vector<1x8x32xf32>
    %107 = vector.shape_cast %106 : vector<1x8x32xf32> to vector<8x32xf32>
    %108 = vector.shape_cast %104 : vector<8x32xf32> to vector<1x8x32xf32>
    tpu.vector_store %arg15[%105, %c0_36, %c0_37], %108 {strides = array<i32>} : memref<8x8x32xf32, #tpu.memory_space<vmem>>, vector<1x8x32xf32>,
    %c2_i32 = arith.constant 2 : i32
    %c7_i32_38 = arith.constant 7 : i32
    %109 = arith.subi %c7_i32_38, %c2_i32 : i32
    %110 = arith.index_cast %c2_i32 : i32 to index
    %c0_39 = arith.constant 0 : index
    %c0_40 = arith.constant 0 : index
    %111 = vector.load %arg13[%110, %c0_39, %c0_40] : memref<8x8x256xf32, #tpu.memory_space<vmem>>, vector<1x8x256xf32>
    %112 = vector.shape_cast %111 : vector<1x8x256xf32> to vector<8x256xf32>
    %113 = arith.index_cast %109 : i32 to index
    %c0_41 = arith.constant 0 : index
    %c0_42 = arith.constant 0 : index
    %114 = vector.load %arg13[%113, %c0_41, %c0_42] : memref<8x8x256xf32, #tpu.memory_space<vmem>>, vector<1x8x256xf32>
    %115 = vector.shape_cast %114 : vector<1x8x256xf32> to vector<8x256xf32>
    %116 = arith.select %28, %112, %115 : vector<8x256xi1>, vector<8x256xf32>
    %117 = arith.truncf %98 : vector<8x64xf32> to vector<8x64xbf16>
    %cst_43 = arith.constant dense<0.000000e+00> : vector<8x256xf32>
    %118 = tpu.matmul %117, %9, %cst_43 {dimension_numbers = #tpu.dot_dimension_numbers<[1], [0], [0], [1], [0, 0, 1, 1], [], []>} : vector<8x64xbf16>, vector<64x256xbf16>, vector<8x256xf32> -> vector<8x256xf32>
    %119 = arith.addf %116, %118 : vector<8x256xf32>
    %120 = math.tanh %119 : vector<8x256xf32>
    %121 = arith.negf %119 : vector<8x256xf32>
    %122 = math.exp %121 : vector<8x256xf32>
    %cst_44 = arith.constant 1.000000e+00 : f32
    %123 = vector.broadcast %cst_44 : f32 to vector<8x256xf32>
    %124 = arith.addf %123, %122 : vector<8x256xf32>
    %125 = arith.divf %123, %124 : vector<8x256xf32>
    %126 = arith.select %33, %120, %125 : vector<8x256xi1>, vector<8x256xf32>
    %127 = vector.extract_strided_slice %126 {offsets = [0, 0], sizes = [8, 64], strides = [1, 1]} : vector<8x256xf32> to vector<8x64xf32>
    %128 = vector.extract_strided_slice %126 {offsets = [0, 64], sizes = [8, 64], strides = [1, 1]} : vector<8x256xf32> to vector<8x64xf32>
    %129 = vector.extract_strided_slice %126 {offsets = [0, 128], sizes = [8, 64], strides = [1, 1]} : vector<8x256xf32> to vector<8x64xf32>
    %130 = vector.extract_strided_slice %126 {offsets = [0, 192], sizes = [8, 64], strides = [1, 1]} : vector<8x256xf32> to vector<8x64xf32>
    %131 = arith.mulf %128, %96 : vector<8x64xf32>
    %132 = arith.mulf %127, %129 : vector<8x64xf32>
    %133 = arith.addf %131, %132 : vector<8x64xf32>
    %134 = math.tanh %133 : vector<8x64xf32>
    %135 = arith.mulf %130, %134 : vector<8x64xf32>
    %136 = vector.extract_strided_slice %135 {offsets = [0, 0], sizes = [8, 32], strides = [1, 1]} : vector<8x64xf32> to vector<8x32xf32>
    %137 = arith.index_cast %c2_i32 : i32 to index
    %c0_45 = arith.constant 0 : index
    %c0_46 = arith.constant 0 : index
    %138 = vector.load %arg14[%137, %c0_45, %c0_46] : memref<8x8x32xf32, #tpu.memory_space<vmem>>, vector<1x8x32xf32>
    %139 = vector.shape_cast %138 : vector<1x8x32xf32> to vector<8x32xf32>
    %140 = vector.shape_cast %136 : vector<8x32xf32> to vector<1x8x32xf32>
    tpu.vector_store %arg14[%137, %c0_45, %c0_46], %140 {strides = array<i32>} : memref<8x8x32xf32, #tpu.memory_space<vmem>>, vector<1x8x32xf32>,
    %141 = vector.extract_strided_slice %135 {offsets = [0, 32], sizes = [8, 32], strides = [1, 1]} : vector<8x64xf32> to vector<8x32xf32>
    %142 = arith.index_cast %109 : i32 to index
    %c0_47 = arith.constant 0 : index
    %c0_48 = arith.constant 0 : index
    %143 = vector.load %arg15[%142, %c0_47, %c0_48] : memref<8x8x32xf32, #tpu.memory_space<vmem>>, vector<1x8x32xf32>
    %144 = vector.shape_cast %143 : vector<1x8x32xf32> to vector<8x32xf32>
    %145 = vector.shape_cast %141 : vector<8x32xf32> to vector<1x8x32xf32>
    tpu.vector_store %arg15[%142, %c0_47, %c0_48], %145 {strides = array<i32>} : memref<8x8x32xf32, #tpu.memory_space<vmem>>, vector<1x8x32xf32>,
    %c3_i32 = arith.constant 3 : i32
    %c7_i32_49 = arith.constant 7 : i32
    %146 = arith.subi %c7_i32_49, %c3_i32 : i32
    %147 = arith.index_cast %c3_i32 : i32 to index
    %c0_50 = arith.constant 0 : index
    %c0_51 = arith.constant 0 : index
    %148 = vector.load %arg13[%147, %c0_50, %c0_51] : memref<8x8x256xf32, #tpu.memory_space<vmem>>, vector<1x8x256xf32>
    %149 = vector.shape_cast %148 : vector<1x8x256xf32> to vector<8x256xf32>
    %150 = arith.index_cast %146 : i32 to index
    %c0_52 = arith.constant 0 : index
    %c0_53 = arith.constant 0 : index
    %151 = vector.load %arg13[%150, %c0_52, %c0_53] : memref<8x8x256xf32, #tpu.memory_space<vmem>>, vector<1x8x256xf32>
    %152 = vector.shape_cast %151 : vector<1x8x256xf32> to vector<8x256xf32>
    %153 = arith.select %28, %149, %152 : vector<8x256xi1>, vector<8x256xf32>
    %154 = arith.truncf %135 : vector<8x64xf32> to vector<8x64xbf16>
    %cst_54 = arith.constant dense<0.000000e+00> : vector<8x256xf32>
    %155 = tpu.matmul %154, %9, %cst_54 {dimension_numbers = #tpu.dot_dimension_numbers<[1], [0], [0], [1], [0, 0, 1, 1], [], []>} : vector<8x64xbf16>, vector<64x256xbf16>, vector<8x256xf32> -> vector<8x256xf32>
    %156 = arith.addf %153, %155 : vector<8x256xf32>
    %157 = math.tanh %156 : vector<8x256xf32>
    %158 = arith.negf %156 : vector<8x256xf32>
    %159 = math.exp %158 : vector<8x256xf32>
    %cst_55 = arith.constant 1.000000e+00 : f32
    %160 = vector.broadcast %cst_55 : f32 to vector<8x256xf32>
    %161 = arith.addf %160, %159 : vector<8x256xf32>
    %162 = arith.divf %160, %161 : vector<8x256xf32>
    %163 = arith.select %33, %157, %162 : vector<8x256xi1>, vector<8x256xf32>
    %164 = vector.extract_strided_slice %163 {offsets = [0, 0], sizes = [8, 64], strides = [1, 1]} : vector<8x256xf32> to vector<8x64xf32>
    %165 = vector.extract_strided_slice %163 {offsets = [0, 64], sizes = [8, 64], strides = [1, 1]} : vector<8x256xf32> to vector<8x64xf32>
    %166 = vector.extract_strided_slice %163 {offsets = [0, 128], sizes = [8, 64], strides = [1, 1]} : vector<8x256xf32> to vector<8x64xf32>
    %167 = vector.extract_strided_slice %163 {offsets = [0, 192], sizes = [8, 64], strides = [1, 1]} : vector<8x256xf32> to vector<8x64xf32>
    %168 = arith.mulf %165, %133 : vector<8x64xf32>
    %169 = arith.mulf %164, %166 : vector<8x64xf32>
    %170 = arith.addf %168, %169 : vector<8x64xf32>
    %171 = math.tanh %170 : vector<8x64xf32>
    %172 = arith.mulf %167, %171 : vector<8x64xf32>
    %173 = vector.extract_strided_slice %172 {offsets = [0, 0], sizes = [8, 32], strides = [1, 1]} : vector<8x64xf32> to vector<8x32xf32>
    %174 = arith.index_cast %c3_i32 : i32 to index
    %c0_56 = arith.constant 0 : index
    %c0_57 = arith.constant 0 : index
    %175 = vector.load %arg14[%174, %c0_56, %c0_57] : memref<8x8x32xf32, #tpu.memory_space<vmem>>, vector<1x8x32xf32>
    %176 = vector.shape_cast %175 : vector<1x8x32xf32> to vector<8x32xf32>
    %177 = vector.shape_cast %173 : vector<8x32xf32> to vector<1x8x32xf32>
    tpu.vector_store %arg14[%174, %c0_56, %c0_57], %177 {strides = array<i32>} : memref<8x8x32xf32, #tpu.memory_space<vmem>>, vector<1x8x32xf32>,
    %178 = vector.extract_strided_slice %172 {offsets = [0, 32], sizes = [8, 32], strides = [1, 1]} : vector<8x64xf32> to vector<8x32xf32>
    %179 = arith.index_cast %146 : i32 to index
    %c0_58 = arith.constant 0 : index
    %c0_59 = arith.constant 0 : index
    %180 = vector.load %arg15[%179, %c0_58, %c0_59] : memref<8x8x32xf32, #tpu.memory_space<vmem>>, vector<1x8x32xf32>
    %181 = vector.shape_cast %180 : vector<1x8x32xf32> to vector<8x32xf32>
    %182 = vector.shape_cast %178 : vector<8x32xf32> to vector<1x8x32xf32>
    tpu.vector_store %arg15[%179, %c0_58, %c0_59], %182 {strides = array<i32>} : memref<8x8x32xf32, #tpu.memory_space<vmem>>, vector<1x8x32xf32>,
    %c4_i32 = arith.constant 4 : i32
    %c7_i32_60 = arith.constant 7 : i32
    %183 = arith.subi %c7_i32_60, %c4_i32 : i32
    %184 = arith.index_cast %c4_i32 : i32 to index
    %c0_61 = arith.constant 0 : index
    %c0_62 = arith.constant 0 : index
    %185 = vector.load %arg13[%184, %c0_61, %c0_62] : memref<8x8x256xf32, #tpu.memory_space<vmem>>, vector<1x8x256xf32>
    %186 = vector.shape_cast %185 : vector<1x8x256xf32> to vector<8x256xf32>
    %187 = arith.index_cast %183 : i32 to index
    %c0_63 = arith.constant 0 : index
    %c0_64 = arith.constant 0 : index
    %188 = vector.load %arg13[%187, %c0_63, %c0_64] : memref<8x8x256xf32, #tpu.memory_space<vmem>>, vector<1x8x256xf32>
    %189 = vector.shape_cast %188 : vector<1x8x256xf32> to vector<8x256xf32>
    %190 = arith.select %28, %186, %189 : vector<8x256xi1>, vector<8x256xf32>
    %191 = arith.truncf %172 : vector<8x64xf32> to vector<8x64xbf16>
    %cst_65 = arith.constant dense<0.000000e+00> : vector<8x256xf32>
    %192 = tpu.matmul %191, %9, %cst_65 {dimension_numbers = #tpu.dot_dimension_numbers<[1], [0], [0], [1], [0, 0, 1, 1], [], []>} : vector<8x64xbf16>, vector<64x256xbf16>, vector<8x256xf32> -> vector<8x256xf32>
    %193 = arith.addf %190, %192 : vector<8x256xf32>
    %194 = math.tanh %193 : vector<8x256xf32>
    %195 = arith.negf %193 : vector<8x256xf32>
    %196 = math.exp %195 : vector<8x256xf32>
    %cst_66 = arith.constant 1.000000e+00 : f32
    %197 = vector.broadcast %cst_66 : f32 to vector<8x256xf32>
    %198 = arith.addf %197, %196 : vector<8x256xf32>
    %199 = arith.divf %197, %198 : vector<8x256xf32>
    %200 = arith.select %33, %194, %199 : vector<8x256xi1>, vector<8x256xf32>
    %201 = vector.extract_strided_slice %200 {offsets = [0, 0], sizes = [8, 64], strides = [1, 1]} : vector<8x256xf32> to vector<8x64xf32>
    %202 = vector.extract_strided_slice %200 {offsets = [0, 64], sizes = [8, 64], strides = [1, 1]} : vector<8x256xf32> to vector<8x64xf32>
    %203 = vector.extract_strided_slice %200 {offsets = [0, 128], sizes = [8, 64], strides = [1, 1]} : vector<8x256xf32> to vector<8x64xf32>
    %204 = vector.extract_strided_slice %200 {offsets = [0, 192], sizes = [8, 64], strides = [1, 1]} : vector<8x256xf32> to vector<8x64xf32>
    %205 = arith.mulf %202, %170 : vector<8x64xf32>
    %206 = arith.mulf %201, %203 : vector<8x64xf32>
    %207 = arith.addf %205, %206 : vector<8x64xf32>
    %208 = math.tanh %207 : vector<8x64xf32>
    %209 = arith.mulf %204, %208 : vector<8x64xf32>
    %210 = vector.extract_strided_slice %209 {offsets = [0, 0], sizes = [8, 32], strides = [1, 1]} : vector<8x64xf32> to vector<8x32xf32>
    %211 = arith.index_cast %c4_i32 : i32 to index
    %c0_67 = arith.constant 0 : index
    %c0_68 = arith.constant 0 : index
    %212 = vector.load %arg14[%211, %c0_67, %c0_68] : memref<8x8x32xf32, #tpu.memory_space<vmem>>, vector<1x8x32xf32>
    %213 = vector.shape_cast %212 : vector<1x8x32xf32> to vector<8x32xf32>
    %214 = vector.shape_cast %210 : vector<8x32xf32> to vector<1x8x32xf32>
    tpu.vector_store %arg14[%211, %c0_67, %c0_68], %214 {strides = array<i32>} : memref<8x8x32xf32, #tpu.memory_space<vmem>>, vector<1x8x32xf32>,
    %215 = vector.extract_strided_slice %209 {offsets = [0, 32], sizes = [8, 32], strides = [1, 1]} : vector<8x64xf32> to vector<8x32xf32>
    %216 = arith.index_cast %183 : i32 to index
    %c0_69 = arith.constant 0 : index
    %c0_70 = arith.constant 0 : index
    %217 = vector.load %arg15[%216, %c0_69, %c0_70] : memref<8x8x32xf32, #tpu.memory_space<vmem>>, vector<1x8x32xf32>
    %218 = vector.shape_cast %217 : vector<1x8x32xf32> to vector<8x32xf32>
    %219 = vector.shape_cast %215 : vector<8x32xf32> to vector<1x8x32xf32>
    tpu.vector_store %arg15[%216, %c0_69, %c0_70], %219 {strides = array<i32>} : memref<8x8x32xf32, #tpu.memory_space<vmem>>, vector<1x8x32xf32>,
    %c5_i32 = arith.constant 5 : i32
    %c7_i32_71 = arith.constant 7 : i32
    %220 = arith.subi %c7_i32_71, %c5_i32 : i32
    %221 = arith.index_cast %c5_i32 : i32 to index
    %c0_72 = arith.constant 0 : index
    %c0_73 = arith.constant 0 : index
    %222 = vector.load %arg13[%221, %c0_72, %c0_73] : memref<8x8x256xf32, #tpu.memory_space<vmem>>, vector<1x8x256xf32>
    %223 = vector.shape_cast %222 : vector<1x8x256xf32> to vector<8x256xf32>
    %224 = arith.index_cast %220 : i32 to index
    %c0_74 = arith.constant 0 : index
    %c0_75 = arith.constant 0 : index
    %225 = vector.load %arg13[%224, %c0_74, %c0_75] : memref<8x8x256xf32, #tpu.memory_space<vmem>>, vector<1x8x256xf32>
    %226 = vector.shape_cast %225 : vector<1x8x256xf32> to vector<8x256xf32>
    %227 = arith.select %28, %223, %226 : vector<8x256xi1>, vector<8x256xf32>
    %228 = arith.truncf %209 : vector<8x64xf32> to vector<8x64xbf16>
    %cst_76 = arith.constant dense<0.000000e+00> : vector<8x256xf32>
    %229 = tpu.matmul %228, %9, %cst_76 {dimension_numbers = #tpu.dot_dimension_numbers<[1], [0], [0], [1], [0, 0, 1, 1], [], []>} : vector<8x64xbf16>, vector<64x256xbf16>, vector<8x256xf32> -> vector<8x256xf32>
    %230 = arith.addf %227, %229 : vector<8x256xf32>
    %231 = math.tanh %230 : vector<8x256xf32>
    %232 = arith.negf %230 : vector<8x256xf32>
    %233 = math.exp %232 : vector<8x256xf32>
    %cst_77 = arith.constant 1.000000e+00 : f32
    %234 = vector.broadcast %cst_77 : f32 to vector<8x256xf32>
    %235 = arith.addf %234, %233 : vector<8x256xf32>
    %236 = arith.divf %234, %235 : vector<8x256xf32>
    %237 = arith.select %33, %231, %236 : vector<8x256xi1>, vector<8x256xf32>
    %238 = vector.extract_strided_slice %237 {offsets = [0, 0], sizes = [8, 64], strides = [1, 1]} : vector<8x256xf32> to vector<8x64xf32>
    %239 = vector.extract_strided_slice %237 {offsets = [0, 64], sizes = [8, 64], strides = [1, 1]} : vector<8x256xf32> to vector<8x64xf32>
    %240 = vector.extract_strided_slice %237 {offsets = [0, 128], sizes = [8, 64], strides = [1, 1]} : vector<8x256xf32> to vector<8x64xf32>
    %241 = vector.extract_strided_slice %237 {offsets = [0, 192], sizes = [8, 64], strides = [1, 1]} : vector<8x256xf32> to vector<8x64xf32>
    %242 = arith.mulf %239, %207 : vector<8x64xf32>
    %243 = arith.mulf %238, %240 : vector<8x64xf32>
    %244 = arith.addf %242, %243 : vector<8x64xf32>
    %245 = math.tanh %244 : vector<8x64xf32>
    %246 = arith.mulf %241, %245 : vector<8x64xf32>
    %247 = vector.extract_strided_slice %246 {offsets = [0, 0], sizes = [8, 32], strides = [1, 1]} : vector<8x64xf32> to vector<8x32xf32>
    %248 = arith.index_cast %c5_i32 : i32 to index
    %c0_78 = arith.constant 0 : index
    %c0_79 = arith.constant 0 : index
    %249 = vector.load %arg14[%248, %c0_78, %c0_79] : memref<8x8x32xf32, #tpu.memory_space<vmem>>, vector<1x8x32xf32>
    %250 = vector.shape_cast %249 : vector<1x8x32xf32> to vector<8x32xf32>
    %251 = vector.shape_cast %247 : vector<8x32xf32> to vector<1x8x32xf32>
    tpu.vector_store %arg14[%248, %c0_78, %c0_79], %251 {strides = array<i32>} : memref<8x8x32xf32, #tpu.memory_space<vmem>>, vector<1x8x32xf32>,
    %252 = vector.extract_strided_slice %246 {offsets = [0, 32], sizes = [8, 32], strides = [1, 1]} : vector<8x64xf32> to vector<8x32xf32>
    %253 = arith.index_cast %220 : i32 to index
    %c0_80 = arith.constant 0 : index
    %c0_81 = arith.constant 0 : index
    %254 = vector.load %arg15[%253, %c0_80, %c0_81] : memref<8x8x32xf32, #tpu.memory_space<vmem>>, vector<1x8x32xf32>
    %255 = vector.shape_cast %254 : vector<1x8x32xf32> to vector<8x32xf32>
    %256 = vector.shape_cast %252 : vector<8x32xf32> to vector<1x8x32xf32>
    tpu.vector_store %arg15[%253, %c0_80, %c0_81], %256 {strides = array<i32>} : memref<8x8x32xf32, #tpu.memory_space<vmem>>, vector<1x8x32xf32>,
    %c6_i32 = arith.constant 6 : i32
    %c7_i32_82 = arith.constant 7 : i32
    %257 = arith.subi %c7_i32_82, %c6_i32 : i32
    %258 = arith.index_cast %c6_i32 : i32 to index
    %c0_83 = arith.constant 0 : index
    %c0_84 = arith.constant 0 : index
    %259 = vector.load %arg13[%258, %c0_83, %c0_84] : memref<8x8x256xf32, #tpu.memory_space<vmem>>, vector<1x8x256xf32>
    %260 = vector.shape_cast %259 : vector<1x8x256xf32> to vector<8x256xf32>
    %261 = arith.index_cast %257 : i32 to index
    %c0_85 = arith.constant 0 : index
    %c0_86 = arith.constant 0 : index
    %262 = vector.load %arg13[%261, %c0_85, %c0_86] : memref<8x8x256xf32, #tpu.memory_space<vmem>>, vector<1x8x256xf32>
    %263 = vector.shape_cast %262 : vector<1x8x256xf32> to vector<8x256xf32>
    %264 = arith.select %28, %260, %263 : vector<8x256xi1>, vector<8x256xf32>
    %265 = arith.truncf %246 : vector<8x64xf32> to vector<8x64xbf16>
    %cst_87 = arith.constant dense<0.000000e+00> : vector<8x256xf32>
    %266 = tpu.matmul %265, %9, %cst_87 {dimension_numbers = #tpu.dot_dimension_numbers<[1], [0], [0], [1], [0, 0, 1, 1], [], []>} : vector<8x64xbf16>, vector<64x256xbf16>, vector<8x256xf32> -> vector<8x256xf32>
    %267 = arith.addf %264, %266 : vector<8x256xf32>
    %268 = math.tanh %267 : vector<8x256xf32>
    %269 = arith.negf %267 : vector<8x256xf32>
    %270 = math.exp %269 : vector<8x256xf32>
    %cst_88 = arith.constant 1.000000e+00 : f32
    %271 = vector.broadcast %cst_88 : f32 to vector<8x256xf32>
    %272 = arith.addf %271, %270 : vector<8x256xf32>
    %273 = arith.divf %271, %272 : vector<8x256xf32>
    %274 = arith.select %33, %268, %273 : vector<8x256xi1>, vector<8x256xf32>
    %275 = vector.extract_strided_slice %274 {offsets = [0, 0], sizes = [8, 64], strides = [1, 1]} : vector<8x256xf32> to vector<8x64xf32>
    %276 = vector.extract_strided_slice %274 {offsets = [0, 64], sizes = [8, 64], strides = [1, 1]} : vector<8x256xf32> to vector<8x64xf32>
    %277 = vector.extract_strided_slice %274 {offsets = [0, 128], sizes = [8, 64], strides = [1, 1]} : vector<8x256xf32> to vector<8x64xf32>
    %278 = vector.extract_strided_slice %274 {offsets = [0, 192], sizes = [8, 64], strides = [1, 1]} : vector<8x256xf32> to vector<8x64xf32>
    %279 = arith.mulf %276, %244 : vector<8x64xf32>
    %280 = arith.mulf %275, %277 : vector<8x64xf32>
    %281 = arith.addf %279, %280 : vector<8x64xf32>
    %282 = math.tanh %281 : vector<8x64xf32>
    %283 = arith.mulf %278, %282 : vector<8x64xf32>
    %284 = vector.extract_strided_slice %283 {offsets = [0, 0], sizes = [8, 32], strides = [1, 1]} : vector<8x64xf32> to vector<8x32xf32>
    %285 = arith.index_cast %c6_i32 : i32 to index
    %c0_89 = arith.constant 0 : index
    %c0_90 = arith.constant 0 : index
    %286 = vector.load %arg14[%285, %c0_89, %c0_90] : memref<8x8x32xf32, #tpu.memory_space<vmem>>, vector<1x8x32xf32>
    %287 = vector.shape_cast %286 : vector<1x8x32xf32> to vector<8x32xf32>
    %288 = vector.shape_cast %284 : vector<8x32xf32> to vector<1x8x32xf32>
    tpu.vector_store %arg14[%285, %c0_89, %c0_90], %288 {strides = array<i32>} : memref<8x8x32xf32, #tpu.memory_space<vmem>>, vector<1x8x32xf32>,
    %289 = vector.extract_strided_slice %283 {offsets = [0, 32], sizes = [8, 32], strides = [1, 1]} : vector<8x64xf32> to vector<8x32xf32>
    %290 = arith.index_cast %257 : i32 to index
    %c0_91 = arith.constant 0 : index
    %c0_92 = arith.constant 0 : index
    %291 = vector.load %arg15[%290, %c0_91, %c0_92] : memref<8x8x32xf32, #tpu.memory_space<vmem>>, vector<1x8x32xf32>
    %292 = vector.shape_cast %291 : vector<1x8x32xf32> to vector<8x32xf32>
    %293 = vector.shape_cast %289 : vector<8x32xf32> to vector<1x8x32xf32>
    tpu.vector_store %arg15[%290, %c0_91, %c0_92], %293 {strides = array<i32>} : memref<8x8x32xf32, #tpu.memory_space<vmem>>, vector<1x8x32xf32>,
    %c7_i32_93 = arith.constant 7 : i32
    %c7_i32_94 = arith.constant 7 : i32
    %294 = arith.subi %c7_i32_94, %c7_i32_93 : i32
    %295 = arith.index_cast %c7_i32_93 : i32 to index
    %c0_95 = arith.constant 0 : index
    %c0_96 = arith.constant 0 : index
    %296 = vector.load %arg13[%295, %c0_95, %c0_96] : memref<8x8x256xf32, #tpu.memory_space<vmem>>, vector<1x8x256xf32>
    %297 = vector.shape_cast %296 : vector<1x8x256xf32> to vector<8x256xf32>
    %298 = arith.index_cast %294 : i32 to index
    %c0_97 = arith.constant 0 : index
    %c0_98 = arith.constant 0 : index
    %299 = vector.load %arg13[%298, %c0_97, %c0_98] : memref<8x8x256xf32, #tpu.memory_space<vmem>>, vector<1x8x256xf32>
    %300 = vector.shape_cast %299 : vector<1x8x256xf32> to vector<8x256xf32>
    %301 = arith.select %28, %297, %300 : vector<8x256xi1>, vector<8x256xf32>
    %302 = arith.truncf %283 : vector<8x64xf32> to vector<8x64xbf16>
    %cst_99 = arith.constant dense<0.000000e+00> : vector<8x256xf32>
    %303 = tpu.matmul %302, %9, %cst_99 {dimension_numbers = #tpu.dot_dimension_numbers<[1], [0], [0], [1], [0, 0, 1, 1], [], []>} : vector<8x64xbf16>, vector<64x256xbf16>, vector<8x256xf32> -> vector<8x256xf32>
    %304 = arith.addf %301, %303 : vector<8x256xf32>
    %305 = math.tanh %304 : vector<8x256xf32>
    %306 = arith.negf %304 : vector<8x256xf32>
    %307 = math.exp %306 : vector<8x256xf32>
    %cst_100 = arith.constant 1.000000e+00 : f32
    %308 = vector.broadcast %cst_100 : f32 to vector<8x256xf32>
    %309 = arith.addf %308, %307 : vector<8x256xf32>
    %310 = arith.divf %308, %309 : vector<8x256xf32>
    %311 = arith.select %33, %305, %310 : vector<8x256xi1>, vector<8x256xf32>
    %312 = vector.extract_strided_slice %311 {offsets = [0, 0], sizes = [8, 64], strides = [1, 1]} : vector<8x256xf32> to vector<8x64xf32>
    %313 = vector.extract_strided_slice %311 {offsets = [0, 64], sizes = [8, 64], strides = [1, 1]} : vector<8x256xf32> to vector<8x64xf32>
    %314 = vector.extract_strided_slice %311 {offsets = [0, 128], sizes = [8, 64], strides = [1, 1]} : vector<8x256xf32> to vector<8x64xf32>
    %315 = vector.extract_strided_slice %311 {offsets = [0, 192], sizes = [8, 64], strides = [1, 1]} : vector<8x256xf32> to vector<8x64xf32>
    %316 = arith.mulf %313, %281 : vector<8x64xf32>
    %317 = arith.mulf %312, %314 : vector<8x64xf32>
    %318 = arith.addf %316, %317 : vector<8x64xf32>
    %319 = math.tanh %318 : vector<8x64xf32>
    %320 = arith.mulf %315, %319 : vector<8x64xf32>
    %321 = vector.extract_strided_slice %320 {offsets = [0, 0], sizes = [8, 32], strides = [1, 1]} : vector<8x64xf32> to vector<8x32xf32>
    %322 = arith.index_cast %c7_i32_93 : i32 to index
    %c0_101 = arith.constant 0 : index
    %c0_102 = arith.constant 0 : index
    %323 = vector.load %arg14[%322, %c0_101, %c0_102] : memref<8x8x32xf32, #tpu.memory_space<vmem>>, vector<1x8x32xf32>
    %324 = vector.shape_cast %323 : vector<1x8x32xf32> to vector<8x32xf32>
    %325 = vector.shape_cast %321 : vector<8x32xf32> to vector<1x8x32xf32>
    tpu.vector_store %arg14[%322, %c0_101, %c0_102], %325 {strides = array<i32>} : memref<8x8x32xf32, #tpu.memory_space<vmem>>, vector<1x8x32xf32>,
    %326 = vector.extract_strided_slice %320 {offsets = [0, 32], sizes = [8, 32], strides = [1, 1]} : vector<8x64xf32> to vector<8x32xf32>
    %327 = arith.index_cast %294 : i32 to index
    %c0_103 = arith.constant 0 : index
    %c0_104 = arith.constant 0 : index
    %328 = vector.load %arg15[%327, %c0_103, %c0_104] : memref<8x8x32xf32, #tpu.memory_space<vmem>>, vector<1x8x32xf32>
    %329 = vector.shape_cast %328 : vector<1x8x32xf32> to vector<8x32xf32>
    %330 = vector.shape_cast %326 : vector<8x32xf32> to vector<1x8x32xf32>
    tpu.vector_store %arg15[%327, %c0_103, %c0_104], %330 {strides = array<i32>} : memref<8x8x32xf32, #tpu.memory_space<vmem>>, vector<1x8x32xf32>,
    %c8_i32 = arith.constant 8 : i32
    %c0_105 = arith.constant 0 : index
    %c0_106 = arith.constant 0 : index
    %c0_107 = arith.constant 0 : index
    %331 = vector.load %arg14[%c0_105, %c0_106, %c0_107] : memref<8x8x32xf32, #tpu.memory_space<vmem>>, vector<8x8x32xf32>
    %332 = vector.shape_cast %331 : vector<8x8x32xf32> to vector<64x32xf32>
    %333 = arith.truncf %332 : vector<64x32xf32> to vector<64x32xbf16>
    %c0_108 = arith.constant 0 : index
    %c0_109 = arith.constant 0 : index
    %c0_110 = arith.constant 0 : index
    %334 = vector.load %arg15[%c0_108, %c0_109, %c0_110] : memref<8x8x32xf32, #tpu.memory_space<vmem>>, vector<8x8x32xf32>
    %335 = vector.shape_cast %334 : vector<8x8x32xf32> to vector<64x32xf32>
    %336 = arith.truncf %335 : vector<64x32xf32> to vector<64x32xbf16>
    %c0_111 = arith.constant 0 : index
    %c0_112 = arith.constant 0 : index
    %337 = vector.load %arg6[%c0_111, %c0_112] : memref<32x5xbf16, #tpu.memory_space<vmem>>, vector<32x5xbf16>
    %cst_113 = arith.constant dense<0.000000e+00> : vector<64x5xf32>
    %338 = tpu.matmul %333, %337, %cst_113 {dimension_numbers = #tpu.dot_dimension_numbers<[1], [0], [0], [1], [0, 0, 1, 1], [], []>} : vector<64x32xbf16>, vector<32x5xbf16>, vector<64x5xf32> -> vector<64x5xf32>
    %c0_114 = arith.constant 0 : index
    %c0_115 = arith.constant 0 : index
    %339 = vector.load %arg7[%c0_114, %c0_115] : memref<32x5xbf16, #tpu.memory_space<vmem>>, vector<32x5xbf16>
    %cst_116 = arith.constant dense<0.000000e+00> : vector<64x5xf32>
    %340 = tpu.matmul %336, %339, %cst_116 {dimension_numbers = #tpu.dot_dimension_numbers<[1], [0], [0], [1], [0, 0, 1, 1], [], []>} : vector<64x32xbf16>, vector<32x5xbf16>, vector<64x5xf32> -> vector<64x5xf32>
    %341 = arith.addf %338, %340 : vector<64x5xf32>
    %c0_117 = arith.constant 0 : index
    %c0_118 = arith.constant 0 : index
    %342 = vector.load %arg8[%c0_117, %c0_118] : memref<1x5xf32, #tpu.memory_space<vmem>>, vector<1x5xf32>
    %343 = vector.broadcast %342 : vector<1x5xf32> to vector<64x5xf32>
    %344 = arith.addf %341, %343 : vector<64x5xf32>
    %345 = vector.shape_cast %344 : vector<64x5xf32> to vector<8x8x5xf32>
    %c0_119 = arith.constant 0 : index
    %c0_120 = arith.constant 0 : index
    %c0_121 = arith.constant 0 : index
    %346 = vector.load %arg16[%c0_119, %c0_120, %c0_121] : memref<8x8x5xf32, #tpu.memory_space<vmem>>, vector<8x8x5xf32>
    tpu.vector_store %arg16[%c0_119, %c0_120, %c0_121], %345 {strides = array<i32>} : memref<8x8x5xf32, #tpu.memory_space<vmem>>, vector<8x8x5xf32>,
    %c0_122 = arith.constant 0 : index
    %c0_123 = arith.constant 0 : index
    %347 = vector.load %arg2[%c0_122, %c0_123] : memref<8x1xi32, #tpu.memory_space<vmem>>, vector<8x1xi32>
    %c1_i32_124 = arith.constant 1 : i32
    %348 = vector.broadcast %c1_i32_124 : i32 to vector<8x1xi32>
    %349 = arith.subi %347, %348 : vector<8x1xi32>
    %c0_125 = arith.constant 0 : index
    %c0_126 = arith.constant 0 : index
    %350 = vector.load %arg9[%c0_125, %c0_126] : memref<5x5xf32, #tpu.memory_space<vmem>>, vector<5x5xf32>
    %c0_127 = arith.constant 0 : index
    %c0_128 = arith.constant 0 : index
    %351 = vector.load %arg10[%c0_127, %c0_128] : memref<1x5xf32, #tpu.memory_space<vmem>>, vector<1x5xf32>
    %c0_129 = arith.constant 0 : index
    %c0_130 = arith.constant 0 : index
    %c0_131 = arith.constant 0 : index
    %352 = vector.load %arg16[%c0_129, %c0_130, %c0_131] : memref<8x8x5xf32, #tpu.memory_space<vmem>>, vector<1x8x5xf32>
    %353 = vector.shape_cast %352 : vector<1x8x5xf32> to vector<8x5xf32>
    %354 = vector.broadcast %351 : vector<1x5xf32> to vector<8x5xf32>
    %355 = arith.addf %354, %353 : vector<8x5xf32>
    %c1_i32_132 = arith.constant 1 : i32
    %356 = vector.extract_strided_slice %355 {offsets = [0, 0], sizes = [8, 1], strides = [1, 1]} : vector<8x5xf32> to vector<8x1xf32>
    %357 = vector.extract_strided_slice %350 {offsets = [0, 0], sizes = [1, 5], strides = [1, 1]} : vector<5x5xf32> to vector<1x5xf32>
    %358 = vector.broadcast %356 : vector<8x1xf32> to vector<8x5xf32>
    %359 = vector.broadcast %357 : vector<1x5xf32> to vector<8x5xf32>
    %360 = arith.addf %358, %359 : vector<8x5xf32>
    %c0_i32_133 = arith.constant 0 : i32
    %361 = vector.broadcast %c0_i32_133 : i32 to vector<8x5xi32>
    %362 = vector.extract_strided_slice %355 {offsets = [0, 1], sizes = [8, 1], strides = [1, 1]} : vector<8x5xf32> to vector<8x1xf32>
    %363 = vector.extract_strided_slice %350 {offsets = [1, 0], sizes = [1, 5], strides = [1, 1]} : vector<5x5xf32> to vector<1x5xf32>
    %364 = vector.broadcast %362 : vector<8x1xf32> to vector<8x5xf32>
    %365 = vector.broadcast %363 : vector<1x5xf32> to vector<8x5xf32>
    %366 = arith.addf %364, %365 : vector<8x5xf32>
    %367 = arith.cmpf ogt, %366, %360 : vector<8x5xf32>
    %c1_i32_134 = arith.constant 1 : i32
    %368 = vector.broadcast %c1_i32_134 : i32 to vector<8x5xi32>
    %369 = arith.select %367, %368, %361 : vector<8x5xi1>, vector<8x5xi32>
    %370 = arith.maximumf %360, %366 : vector<8x5xf32>
    %371 = vector.extract_strided_slice %355 {offsets = [0, 2], sizes = [8, 1], strides = [1, 1]} : vector<8x5xf32> to vector<8x1xf32>
    %372 = vector.extract_strided_slice %350 {offsets = [2, 0], sizes = [1, 5], strides = [1, 1]} : vector<5x5xf32> to vector<1x5xf32>
    %373 = vector.broadcast %371 : vector<8x1xf32> to vector<8x5xf32>
    %374 = vector.broadcast %372 : vector<1x5xf32> to vector<8x5xf32>
    %375 = arith.addf %373, %374 : vector<8x5xf32>
    %376 = arith.cmpf ogt, %375, %370 : vector<8x5xf32>
    %c2_i32_135 = arith.constant 2 : i32
    %377 = vector.broadcast %c2_i32_135 : i32 to vector<8x5xi32>
    %378 = arith.select %376, %377, %369 : vector<8x5xi1>, vector<8x5xi32>
    %379 = arith.maximumf %370, %375 : vector<8x5xf32>
    %380 = vector.extract_strided_slice %355 {offsets = [0, 3], sizes = [8, 1], strides = [1, 1]} : vector<8x5xf32> to vector<8x1xf32>
    %381 = vector.extract_strided_slice %350 {offsets = [3, 0], sizes = [1, 5], strides = [1, 1]} : vector<5x5xf32> to vector<1x5xf32>
    %382 = vector.broadcast %380 : vector<8x1xf32> to vector<8x5xf32>
    %383 = vector.broadcast %381 : vector<1x5xf32> to vector<8x5xf32>
    %384 = arith.addf %382, %383 : vector<8x5xf32>
    %385 = arith.cmpf ogt, %384, %379 : vector<8x5xf32>
    %c3_i32_136 = arith.constant 3 : i32
    %386 = vector.broadcast %c3_i32_136 : i32 to vector<8x5xi32>
    %387 = arith.select %385, %386, %378 : vector<8x5xi1>, vector<8x5xi32>
    %388 = arith.maximumf %379, %384 : vector<8x5xf32>
    %389 = vector.extract_strided_slice %355 {offsets = [0, 4], sizes = [8, 1], strides = [1, 1]} : vector<8x5xf32> to vector<8x1xf32>
    %390 = vector.extract_strided_slice %350 {offsets = [4, 0], sizes = [1, 5], strides = [1, 1]} : vector<5x5xf32> to vector<1x5xf32>
    %391 = vector.broadcast %389 : vector<8x1xf32> to vector<8x5xf32>
    %392 = vector.broadcast %390 : vector<1x5xf32> to vector<8x5xf32>
    %393 = arith.addf %391, %392 : vector<8x5xf32>
    %394 = arith.cmpf ogt, %393, %388 : vector<8x5xf32>
    %c4_i32_137 = arith.constant 4 : i32
    %395 = vector.broadcast %c4_i32_137 : i32 to vector<8x5xi32>
    %396 = arith.select %394, %395, %387 : vector<8x5xi1>, vector<8x5xi32>
    %397 = arith.maximumf %388, %393 : vector<8x5xf32>
    %398 = arith.index_cast %c1_i32_132 : i32 to index
    %c0_138 = arith.constant 0 : index
    %c0_139 = arith.constant 0 : index
    %399 = vector.load %arg17[%398, %c0_138, %c0_139] : memref<8x8x5xi32, #tpu.memory_space<vmem>>, vector<1x8x5xi32>
    %400 = vector.shape_cast %399 : vector<1x8x5xi32> to vector<8x5xi32>
    %401 = vector.shape_cast %396 : vector<8x5xi32> to vector<1x8x5xi32>
    tpu.vector_store %arg17[%398, %c0_138, %c0_139], %401 {strides = array<i32>} : memref<8x8x5xi32, #tpu.memory_space<vmem>>, vector<1x8x5xi32>,
    %402 = arith.index_cast %c1_i32_132 : i32 to index
    %c0_140 = arith.constant 0 : index
    %c0_141 = arith.constant 0 : index
    %403 = vector.load %arg16[%402, %c0_140, %c0_141] : memref<8x8x5xf32, #tpu.memory_space<vmem>>, vector<1x8x5xf32>
    %404 = vector.shape_cast %403 : vector<1x8x5xf32> to vector<8x5xf32>
    %405 = arith.addf %397, %404 : vector<8x5xf32>
    %406 = vector.broadcast %c1_i32_132 : i32 to vector<8x1xi32>
    %407 = arith.cmpi slt, %406, %347 : vector<8x1xi32>
    %408 = vector.shape_cast %407 : vector<8x1xi1> to vector<8x1xi1>
    %409 = vector.broadcast %408 : vector<8x1xi1> to vector<8x5xi1>
    %410 = arith.select %409, %405, %355 : vector<8x5xi1>, vector<8x5xf32>
    %c2_i32_142 = arith.constant 2 : i32
    %411 = vector.extract_strided_slice %410 {offsets = [0, 0], sizes = [8, 1], strides = [1, 1]} : vector<8x5xf32> to vector<8x1xf32>
    %412 = vector.extract_strided_slice %350 {offsets = [0, 0], sizes = [1, 5], strides = [1, 1]} : vector<5x5xf32> to vector<1x5xf32>
    %413 = vector.broadcast %411 : vector<8x1xf32> to vector<8x5xf32>
    %414 = vector.broadcast %412 : vector<1x5xf32> to vector<8x5xf32>
    %415 = arith.addf %413, %414 : vector<8x5xf32>
    %c0_i32_143 = arith.constant 0 : i32
    %416 = vector.broadcast %c0_i32_143 : i32 to vector<8x5xi32>
    %417 = vector.extract_strided_slice %410 {offsets = [0, 1], sizes = [8, 1], strides = [1, 1]} : vector<8x5xf32> to vector<8x1xf32>
    %418 = vector.extract_strided_slice %350 {offsets = [1, 0], sizes = [1, 5], strides = [1, 1]} : vector<5x5xf32> to vector<1x5xf32>
    %419 = vector.broadcast %417 : vector<8x1xf32> to vector<8x5xf32>
    %420 = vector.broadcast %418 : vector<1x5xf32> to vector<8x5xf32>
    %421 = arith.addf %419, %420 : vector<8x5xf32>
    %422 = arith.cmpf ogt, %421, %415 : vector<8x5xf32>
    %c1_i32_144 = arith.constant 1 : i32
    %423 = vector.broadcast %c1_i32_144 : i32 to vector<8x5xi32>
    %424 = arith.select %422, %423, %416 : vector<8x5xi1>, vector<8x5xi32>
    %425 = arith.maximumf %415, %421 : vector<8x5xf32>
    %426 = vector.extract_strided_slice %410 {offsets = [0, 2], sizes = [8, 1], strides = [1, 1]} : vector<8x5xf32> to vector<8x1xf32>
    %427 = vector.extract_strided_slice %350 {offsets = [2, 0], sizes = [1, 5], strides = [1, 1]} : vector<5x5xf32> to vector<1x5xf32>
    %428 = vector.broadcast %426 : vector<8x1xf32> to vector<8x5xf32>
    %429 = vector.broadcast %427 : vector<1x5xf32> to vector<8x5xf32>
    %430 = arith.addf %428, %429 : vector<8x5xf32>
    %431 = arith.cmpf ogt, %430, %425 : vector<8x5xf32>
    %c2_i32_145 = arith.constant 2 : i32
    %432 = vector.broadcast %c2_i32_145 : i32 to vector<8x5xi32>
    %433 = arith.select %431, %432, %424 : vector<8x5xi1>, vector<8x5xi32>
    %434 = arith.maximumf %425, %430 : vector<8x5xf32>
    %435 = vector.extract_strided_slice %410 {offsets = [0, 3], sizes = [8, 1], strides = [1, 1]} : vector<8x5xf32> to vector<8x1xf32>
    %436 = vector.extract_strided_slice %350 {offsets = [3, 0], sizes = [1, 5], strides = [1, 1]} : vector<5x5xf32> to vector<1x5xf32>
    %437 = vector.broadcast %435 : vector<8x1xf32> to vector<8x5xf32>
    %438 = vector.broadcast %436 : vector<1x5xf32> to vector<8x5xf32>
    %439 = arith.addf %437, %438 : vector<8x5xf32>
    %440 = arith.cmpf ogt, %439, %434 : vector<8x5xf32>
    %c3_i32_146 = arith.constant 3 : i32
    %441 = vector.broadcast %c3_i32_146 : i32 to vector<8x5xi32>
    %442 = arith.select %440, %441, %433 : vector<8x5xi1>, vector<8x5xi32>
    %443 = arith.maximumf %434, %439 : vector<8x5xf32>
    %444 = vector.extract_strided_slice %410 {offsets = [0, 4], sizes = [8, 1], strides = [1, 1]} : vector<8x5xf32> to vector<8x1xf32>
    %445 = vector.extract_strided_slice %350 {offsets = [4, 0], sizes = [1, 5], strides = [1, 1]} : vector<5x5xf32> to vector<1x5xf32>
    %446 = vector.broadcast %444 : vector<8x1xf32> to vector<8x5xf32>
    %447 = vector.broadcast %445 : vector<1x5xf32> to vector<8x5xf32>
    %448 = arith.addf %446, %447 : vector<8x5xf32>
    %449 = arith.cmpf ogt, %448, %443 : vector<8x5xf32>
    %c4_i32_147 = arith.constant 4 : i32
    %450 = vector.broadcast %c4_i32_147 : i32 to vector<8x5xi32>
    %451 = arith.select %449, %450, %442 : vector<8x5xi1>, vector<8x5xi32>
    %452 = arith.maximumf %443, %448 : vector<8x5xf32>
    %453 = arith.index_cast %c2_i32_142 : i32 to index
    %c0_148 = arith.constant 0 : index
    %c0_149 = arith.constant 0 : index
    %454 = vector.load %arg17[%453, %c0_148, %c0_149] : memref<8x8x5xi32, #tpu.memory_space<vmem>>, vector<1x8x5xi32>
    %455 = vector.shape_cast %454 : vector<1x8x5xi32> to vector<8x5xi32>
    %456 = vector.shape_cast %451 : vector<8x5xi32> to vector<1x8x5xi32>
    tpu.vector_store %arg17[%453, %c0_148, %c0_149], %456 {strides = array<i32>} : memref<8x8x5xi32, #tpu.memory_space<vmem>>, vector<1x8x5xi32>,
    %457 = arith.index_cast %c2_i32_142 : i32 to index
    %c0_150 = arith.constant 0 : index
    %c0_151 = arith.constant 0 : index
    %458 = vector.load %arg16[%457, %c0_150, %c0_151] : memref<8x8x5xf32, #tpu.memory_space<vmem>>, vector<1x8x5xf32>
    %459 = vector.shape_cast %458 : vector<1x8x5xf32> to vector<8x5xf32>
    %460 = arith.addf %452, %459 : vector<8x5xf32>
    %461 = vector.broadcast %c2_i32_142 : i32 to vector<8x1xi32>
    %462 = arith.cmpi slt, %461, %347 : vector<8x1xi32>
    %463 = vector.shape_cast %462 : vector<8x1xi1> to vector<8x1xi1>
    %464 = vector.broadcast %463 : vector<8x1xi1> to vector<8x5xi1>
    %465 = arith.select %464, %460, %410 : vector<8x5xi1>, vector<8x5xf32>
    %c3_i32_152 = arith.constant 3 : i32
    %466 = vector.extract_strided_slice %465 {offsets = [0, 0], sizes = [8, 1], strides = [1, 1]} : vector<8x5xf32> to vector<8x1xf32>
    %467 = vector.extract_strided_slice %350 {offsets = [0, 0], sizes = [1, 5], strides = [1, 1]} : vector<5x5xf32> to vector<1x5xf32>
    %468 = vector.broadcast %466 : vector<8x1xf32> to vector<8x5xf32>
    %469 = vector.broadcast %467 : vector<1x5xf32> to vector<8x5xf32>
    %470 = arith.addf %468, %469 : vector<8x5xf32>
    %c0_i32_153 = arith.constant 0 : i32
    %471 = vector.broadcast %c0_i32_153 : i32 to vector<8x5xi32>
    %472 = vector.extract_strided_slice %465 {offsets = [0, 1], sizes = [8, 1], strides = [1, 1]} : vector<8x5xf32> to vector<8x1xf32>
    %473 = vector.extract_strided_slice %350 {offsets = [1, 0], sizes = [1, 5], strides = [1, 1]} : vector<5x5xf32> to vector<1x5xf32>
    %474 = vector.broadcast %472 : vector<8x1xf32> to vector<8x5xf32>
    %475 = vector.broadcast %473 : vector<1x5xf32> to vector<8x5xf32>
    %476 = arith.addf %474, %475 : vector<8x5xf32>
    %477 = arith.cmpf ogt, %476, %470 : vector<8x5xf32>
    %c1_i32_154 = arith.constant 1 : i32
    %478 = vector.broadcast %c1_i32_154 : i32 to vector<8x5xi32>
    %479 = arith.select %477, %478, %471 : vector<8x5xi1>, vector<8x5xi32>
    %480 = arith.maximumf %470, %476 : vector<8x5xf32>
    %481 = vector.extract_strided_slice %465 {offsets = [0, 2], sizes = [8, 1], strides = [1, 1]} : vector<8x5xf32> to vector<8x1xf32>
    %482 = vector.extract_strided_slice %350 {offsets = [2, 0], sizes = [1, 5], strides = [1, 1]} : vector<5x5xf32> to vector<1x5xf32>
    %483 = vector.broadcast %481 : vector<8x1xf32> to vector<8x5xf32>
    %484 = vector.broadcast %482 : vector<1x5xf32> to vector<8x5xf32>
    %485 = arith.addf %483, %484 : vector<8x5xf32>
    %486 = arith.cmpf ogt, %485, %480 : vector<8x5xf32>
    %c2_i32_155 = arith.constant 2 : i32
    %487 = vector.broadcast %c2_i32_155 : i32 to vector<8x5xi32>
    %488 = arith.select %486, %487, %479 : vector<8x5xi1>, vector<8x5xi32>
    %489 = arith.maximumf %480, %485 : vector<8x5xf32>
    %490 = vector.extract_strided_slice %465 {offsets = [0, 3], sizes = [8, 1], strides = [1, 1]} : vector<8x5xf32> to vector<8x1xf32>
    %491 = vector.extract_strided_slice %350 {offsets = [3, 0], sizes = [1, 5], strides = [1, 1]} : vector<5x5xf32> to vector<1x5xf32>
    %492 = vector.broadcast %490 : vector<8x1xf32> to vector<8x5xf32>
    %493 = vector.broadcast %491 : vector<1x5xf32> to vector<8x5xf32>
    %494 = arith.addf %492, %493 : vector<8x5xf32>
    %495 = arith.cmpf ogt, %494, %489 : vector<8x5xf32>
    %c3_i32_156 = arith.constant 3 : i32
    %496 = vector.broadcast %c3_i32_156 : i32 to vector<8x5xi32>
    %497 = arith.select %495, %496, %488 : vector<8x5xi1>, vector<8x5xi32>
    %498 = arith.maximumf %489, %494 : vector<8x5xf32>
    %499 = vector.extract_strided_slice %465 {offsets = [0, 4], sizes = [8, 1], strides = [1, 1]} : vector<8x5xf32> to vector<8x1xf32>
    %500 = vector.extract_strided_slice %350 {offsets = [4, 0], sizes = [1, 5], strides = [1, 1]} : vector<5x5xf32> to vector<1x5xf32>
    %501 = vector.broadcast %499 : vector<8x1xf32> to vector<8x5xf32>
    %502 = vector.broadcast %500 : vector<1x5xf32> to vector<8x5xf32>
    %503 = arith.addf %501, %502 : vector<8x5xf32>
    %504 = arith.cmpf ogt, %503, %498 : vector<8x5xf32>
    %c4_i32_157 = arith.constant 4 : i32
    %505 = vector.broadcast %c4_i32_157 : i32 to vector<8x5xi32>
    %506 = arith.select %504, %505, %497 : vector<8x5xi1>, vector<8x5xi32>
    %507 = arith.maximumf %498, %503 : vector<8x5xf32>
    %508 = arith.index_cast %c3_i32_152 : i32 to index
    %c0_158 = arith.constant 0 : index
    %c0_159 = arith.constant 0 : index
    %509 = vector.load %arg17[%508, %c0_158, %c0_159] : memref<8x8x5xi32, #tpu.memory_space<vmem>>, vector<1x8x5xi32>
    %510 = vector.shape_cast %509 : vector<1x8x5xi32> to vector<8x5xi32>
    %511 = vector.shape_cast %506 : vector<8x5xi32> to vector<1x8x5xi32>
    tpu.vector_store %arg17[%508, %c0_158, %c0_159], %511 {strides = array<i32>} : memref<8x8x5xi32, #tpu.memory_space<vmem>>, vector<1x8x5xi32>,
    %512 = arith.index_cast %c3_i32_152 : i32 to index
    %c0_160 = arith.constant 0 : index
    %c0_161 = arith.constant 0 : index
    %513 = vector.load %arg16[%512, %c0_160, %c0_161] : memref<8x8x5xf32, #tpu.memory_space<vmem>>, vector<1x8x5xf32>
    %514 = vector.shape_cast %513 : vector<1x8x5xf32> to vector<8x5xf32>
    %515 = arith.addf %507, %514 : vector<8x5xf32>
    %516 = vector.broadcast %c3_i32_152 : i32 to vector<8x1xi32>
    %517 = arith.cmpi slt, %516, %347 : vector<8x1xi32>
    %518 = vector.shape_cast %517 : vector<8x1xi1> to vector<8x1xi1>
    %519 = vector.broadcast %518 : vector<8x1xi1> to vector<8x5xi1>
    %520 = arith.select %519, %515, %465 : vector<8x5xi1>, vector<8x5xf32>
    %c4_i32_162 = arith.constant 4 : i32
    %521 = vector.extract_strided_slice %520 {offsets = [0, 0], sizes = [8, 1], strides = [1, 1]} : vector<8x5xf32> to vector<8x1xf32>
    %522 = vector.extract_strided_slice %350 {offsets = [0, 0], sizes = [1, 5], strides = [1, 1]} : vector<5x5xf32> to vector<1x5xf32>
    %523 = vector.broadcast %521 : vector<8x1xf32> to vector<8x5xf32>
    %524 = vector.broadcast %522 : vector<1x5xf32> to vector<8x5xf32>
    %525 = arith.addf %523, %524 : vector<8x5xf32>
    %c0_i32_163 = arith.constant 0 : i32
    %526 = vector.broadcast %c0_i32_163 : i32 to vector<8x5xi32>
    %527 = vector.extract_strided_slice %520 {offsets = [0, 1], sizes = [8, 1], strides = [1, 1]} : vector<8x5xf32> to vector<8x1xf32>
    %528 = vector.extract_strided_slice %350 {offsets = [1, 0], sizes = [1, 5], strides = [1, 1]} : vector<5x5xf32> to vector<1x5xf32>
    %529 = vector.broadcast %527 : vector<8x1xf32> to vector<8x5xf32>
    %530 = vector.broadcast %528 : vector<1x5xf32> to vector<8x5xf32>
    %531 = arith.addf %529, %530 : vector<8x5xf32>
    %532 = arith.cmpf ogt, %531, %525 : vector<8x5xf32>
    %c1_i32_164 = arith.constant 1 : i32
    %533 = vector.broadcast %c1_i32_164 : i32 to vector<8x5xi32>
    %534 = arith.select %532, %533, %526 : vector<8x5xi1>, vector<8x5xi32>
    %535 = arith.maximumf %525, %531 : vector<8x5xf32>
    %536 = vector.extract_strided_slice %520 {offsets = [0, 2], sizes = [8, 1], strides = [1, 1]} : vector<8x5xf32> to vector<8x1xf32>
    %537 = vector.extract_strided_slice %350 {offsets = [2, 0], sizes = [1, 5], strides = [1, 1]} : vector<5x5xf32> to vector<1x5xf32>
    %538 = vector.broadcast %536 : vector<8x1xf32> to vector<8x5xf32>
    %539 = vector.broadcast %537 : vector<1x5xf32> to vector<8x5xf32>
    %540 = arith.addf %538, %539 : vector<8x5xf32>
    %541 = arith.cmpf ogt, %540, %535 : vector<8x5xf32>
    %c2_i32_165 = arith.constant 2 : i32
    %542 = vector.broadcast %c2_i32_165 : i32 to vector<8x5xi32>
    %543 = arith.select %541, %542, %534 : vector<8x5xi1>, vector<8x5xi32>
    %544 = arith.maximumf %535, %540 : vector<8x5xf32>
    %545 = vector.extract_strided_slice %520 {offsets = [0, 3], sizes = [8, 1], strides = [1, 1]} : vector<8x5xf32> to vector<8x1xf32>
    %546 = vector.extract_strided_slice %350 {offsets = [3, 0], sizes = [1, 5], strides = [1, 1]} : vector<5x5xf32> to vector<1x5xf32>
    %547 = vector.broadcast %545 : vector<8x1xf32> to vector<8x5xf32>
    %548 = vector.broadcast %546 : vector<1x5xf32> to vector<8x5xf32>
    %549 = arith.addf %547, %548 : vector<8x5xf32>
    %550 = arith.cmpf ogt, %549, %544 : vector<8x5xf32>
    %c3_i32_166 = arith.constant 3 : i32
    %551 = vector.broadcast %c3_i32_166 : i32 to vector<8x5xi32>
    %552 = arith.select %550, %551, %543 : vector<8x5xi1>, vector<8x5xi32>
    %553 = arith.maximumf %544, %549 : vector<8x5xf32>
    %554 = vector.extract_strided_slice %520 {offsets = [0, 4], sizes = [8, 1], strides = [1, 1]} : vector<8x5xf32> to vector<8x1xf32>
    %555 = vector.extract_strided_slice %350 {offsets = [4, 0], sizes = [1, 5], strides = [1, 1]} : vector<5x5xf32> to vector<1x5xf32>
    %556 = vector.broadcast %554 : vector<8x1xf32> to vector<8x5xf32>
    %557 = vector.broadcast %555 : vector<1x5xf32> to vector<8x5xf32>
    %558 = arith.addf %556, %557 : vector<8x5xf32>
    %559 = arith.cmpf ogt, %558, %553 : vector<8x5xf32>
    %c4_i32_167 = arith.constant 4 : i32
    %560 = vector.broadcast %c4_i32_167 : i32 to vector<8x5xi32>
    %561 = arith.select %559, %560, %552 : vector<8x5xi1>, vector<8x5xi32>
    %562 = arith.maximumf %553, %558 : vector<8x5xf32>
    %563 = arith.index_cast %c4_i32_162 : i32 to index
    %c0_168 = arith.constant 0 : index
    %c0_169 = arith.constant 0 : index
    %564 = vector.load %arg17[%563, %c0_168, %c0_169] : memref<8x8x5xi32, #tpu.memory_space<vmem>>, vector<1x8x5xi32>
    %565 = vector.shape_cast %564 : vector<1x8x5xi32> to vector<8x5xi32>
    %566 = vector.shape_cast %561 : vector<8x5xi32> to vector<1x8x5xi32>
    tpu.vector_store %arg17[%563, %c0_168, %c0_169], %566 {strides = array<i32>} : memref<8x8x5xi32, #tpu.memory_space<vmem>>, vector<1x8x5xi32>,
    %567 = arith.index_cast %c4_i32_162 : i32 to index
    %c0_170 = arith.constant 0 : index
    %c0_171 = arith.constant 0 : index
    %568 = vector.load %arg16[%567, %c0_170, %c0_171] : memref<8x8x5xf32, #tpu.memory_space<vmem>>, vector<1x8x5xf32>
    %569 = vector.shape_cast %568 : vector<1x8x5xf32> to vector<8x5xf32>
    %570 = arith.addf %562, %569 : vector<8x5xf32>
    %571 = vector.broadcast %c4_i32_162 : i32 to vector<8x1xi32>
    %572 = arith.cmpi slt, %571, %347 : vector<8x1xi32>
    %573 = vector.shape_cast %572 : vector<8x1xi1> to vector<8x1xi1>
    %574 = vector.broadcast %573 : vector<8x1xi1> to vector<8x5xi1>
    %575 = arith.select %574, %570, %520 : vector<8x5xi1>, vector<8x5xf32>
    %c5_i32_172 = arith.constant 5 : i32
    %576 = vector.extract_strided_slice %575 {offsets = [0, 0], sizes = [8, 1], strides = [1, 1]} : vector<8x5xf32> to vector<8x1xf32>
    %577 = vector.extract_strided_slice %350 {offsets = [0, 0], sizes = [1, 5], strides = [1, 1]} : vector<5x5xf32> to vector<1x5xf32>
    %578 = vector.broadcast %576 : vector<8x1xf32> to vector<8x5xf32>
    %579 = vector.broadcast %577 : vector<1x5xf32> to vector<8x5xf32>
    %580 = arith.addf %578, %579 : vector<8x5xf32>
    %c0_i32_173 = arith.constant 0 : i32
    %581 = vector.broadcast %c0_i32_173 : i32 to vector<8x5xi32>
    %582 = vector.extract_strided_slice %575 {offsets = [0, 1], sizes = [8, 1], strides = [1, 1]} : vector<8x5xf32> to vector<8x1xf32>
    %583 = vector.extract_strided_slice %350 {offsets = [1, 0], sizes = [1, 5], strides = [1, 1]} : vector<5x5xf32> to vector<1x5xf32>
    %584 = vector.broadcast %582 : vector<8x1xf32> to vector<8x5xf32>
    %585 = vector.broadcast %583 : vector<1x5xf32> to vector<8x5xf32>
    %586 = arith.addf %584, %585 : vector<8x5xf32>
    %587 = arith.cmpf ogt, %586, %580 : vector<8x5xf32>
    %c1_i32_174 = arith.constant 1 : i32
    %588 = vector.broadcast %c1_i32_174 : i32 to vector<8x5xi32>
    %589 = arith.select %587, %588, %581 : vector<8x5xi1>, vector<8x5xi32>
    %590 = arith.maximumf %580, %586 : vector<8x5xf32>
    %591 = vector.extract_strided_slice %575 {offsets = [0, 2], sizes = [8, 1], strides = [1, 1]} : vector<8x5xf32> to vector<8x1xf32>
    %592 = vector.extract_strided_slice %350 {offsets = [2, 0], sizes = [1, 5], strides = [1, 1]} : vector<5x5xf32> to vector<1x5xf32>
    %593 = vector.broadcast %591 : vector<8x1xf32> to vector<8x5xf32>
    %594 = vector.broadcast %592 : vector<1x5xf32> to vector<8x5xf32>
    %595 = arith.addf %593, %594 : vector<8x5xf32>
    %596 = arith.cmpf ogt, %595, %590 : vector<8x5xf32>
    %c2_i32_175 = arith.constant 2 : i32
    %597 = vector.broadcast %c2_i32_175 : i32 to vector<8x5xi32>
    %598 = arith.select %596, %597, %589 : vector<8x5xi1>, vector<8x5xi32>
    %599 = arith.maximumf %590, %595 : vector<8x5xf32>
    %600 = vector.extract_strided_slice %575 {offsets = [0, 3], sizes = [8, 1], strides = [1, 1]} : vector<8x5xf32> to vector<8x1xf32>
    %601 = vector.extract_strided_slice %350 {offsets = [3, 0], sizes = [1, 5], strides = [1, 1]} : vector<5x5xf32> to vector<1x5xf32>
    %602 = vector.broadcast %600 : vector<8x1xf32> to vector<8x5xf32>
    %603 = vector.broadcast %601 : vector<1x5xf32> to vector<8x5xf32>
    %604 = arith.addf %602, %603 : vector<8x5xf32>
    %605 = arith.cmpf ogt, %604, %599 : vector<8x5xf32>
    %c3_i32_176 = arith.constant 3 : i32
    %606 = vector.broadcast %c3_i32_176 : i32 to vector<8x5xi32>
    %607 = arith.select %605, %606, %598 : vector<8x5xi1>, vector<8x5xi32>
    %608 = arith.maximumf %599, %604 : vector<8x5xf32>
    %609 = vector.extract_strided_slice %575 {offsets = [0, 4], sizes = [8, 1], strides = [1, 1]} : vector<8x5xf32> to vector<8x1xf32>
    %610 = vector.extract_strided_slice %350 {offsets = [4, 0], sizes = [1, 5], strides = [1, 1]} : vector<5x5xf32> to vector<1x5xf32>
    %611 = vector.broadcast %609 : vector<8x1xf32> to vector<8x5xf32>
    %612 = vector.broadcast %610 : vector<1x5xf32> to vector<8x5xf32>
    %613 = arith.addf %611, %612 : vector<8x5xf32>
    %614 = arith.cmpf ogt, %613, %608 : vector<8x5xf32>
    %c4_i32_177 = arith.constant 4 : i32
    %615 = vector.broadcast %c4_i32_177 : i32 to vector<8x5xi32>
    %616 = arith.select %614, %615, %607 : vector<8x5xi1>, vector<8x5xi32>
    %617 = arith.maximumf %608, %613 : vector<8x5xf32>
    %618 = arith.index_cast %c5_i32_172 : i32 to index
    %c0_178 = arith.constant 0 : index
    %c0_179 = arith.constant 0 : index
    %619 = vector.load %arg17[%618, %c0_178, %c0_179] : memref<8x8x5xi32, #tpu.memory_space<vmem>>, vector<1x8x5xi32>
    %620 = vector.shape_cast %619 : vector<1x8x5xi32> to vector<8x5xi32>
    %621 = vector.shape_cast %616 : vector<8x5xi32> to vector<1x8x5xi32>
    tpu.vector_store %arg17[%618, %c0_178, %c0_179], %621 {strides = array<i32>} : memref<8x8x5xi32, #tpu.memory_space<vmem>>, vector<1x8x5xi32>,
    %622 = arith.index_cast %c5_i32_172 : i32 to index
    %c0_180 = arith.constant 0 : index
    %c0_181 = arith.constant 0 : index
    %623 = vector.load %arg16[%622, %c0_180, %c0_181] : memref<8x8x5xf32, #tpu.memory_space<vmem>>, vector<1x8x5xf32>
    %624 = vector.shape_cast %623 : vector<1x8x5xf32> to vector<8x5xf32>
    %625 = arith.addf %617, %624 : vector<8x5xf32>
    %626 = vector.broadcast %c5_i32_172 : i32 to vector<8x1xi32>
    %627 = arith.cmpi slt, %626, %347 : vector<8x1xi32>
    %628 = vector.shape_cast %627 : vector<8x1xi1> to vector<8x1xi1>
    %629 = vector.broadcast %628 : vector<8x1xi1> to vector<8x5xi1>
    %630 = arith.select %629, %625, %575 : vector<8x5xi1>, vector<8x5xf32>
    %c6_i32_182 = arith.constant 6 : i32
    %631 = vector.extract_strided_slice %630 {offsets = [0, 0], sizes = [8, 1], strides = [1, 1]} : vector<8x5xf32> to vector<8x1xf32>
    %632 = vector.extract_strided_slice %350 {offsets = [0, 0], sizes = [1, 5], strides = [1, 1]} : vector<5x5xf32> to vector<1x5xf32>
    %633 = vector.broadcast %631 : vector<8x1xf32> to vector<8x5xf32>
    %634 = vector.broadcast %632 : vector<1x5xf32> to vector<8x5xf32>
    %635 = arith.addf %633, %634 : vector<8x5xf32>
    %c0_i32_183 = arith.constant 0 : i32
    %636 = vector.broadcast %c0_i32_183 : i32 to vector<8x5xi32>
    %637 = vector.extract_strided_slice %630 {offsets = [0, 1], sizes = [8, 1], strides = [1, 1]} : vector<8x5xf32> to vector<8x1xf32>
    %638 = vector.extract_strided_slice %350 {offsets = [1, 0], sizes = [1, 5], strides = [1, 1]} : vector<5x5xf32> to vector<1x5xf32>
    %639 = vector.broadcast %637 : vector<8x1xf32> to vector<8x5xf32>
    %640 = vector.broadcast %638 : vector<1x5xf32> to vector<8x5xf32>
    %641 = arith.addf %639, %640 : vector<8x5xf32>
    %642 = arith.cmpf ogt, %641, %635 : vector<8x5xf32>
    %c1_i32_184 = arith.constant 1 : i32
    %643 = vector.broadcast %c1_i32_184 : i32 to vector<8x5xi32>
    %644 = arith.select %642, %643, %636 : vector<8x5xi1>, vector<8x5xi32>
    %645 = arith.maximumf %635, %641 : vector<8x5xf32>
    %646 = vector.extract_strided_slice %630 {offsets = [0, 2], sizes = [8, 1], strides = [1, 1]} : vector<8x5xf32> to vector<8x1xf32>
    %647 = vector.extract_strided_slice %350 {offsets = [2, 0], sizes = [1, 5], strides = [1, 1]} : vector<5x5xf32> to vector<1x5xf32>
    %648 = vector.broadcast %646 : vector<8x1xf32> to vector<8x5xf32>
    %649 = vector.broadcast %647 : vector<1x5xf32> to vector<8x5xf32>
    %650 = arith.addf %648, %649 : vector<8x5xf32>
    %651 = arith.cmpf ogt, %650, %645 : vector<8x5xf32>
    %c2_i32_185 = arith.constant 2 : i32
    %652 = vector.broadcast %c2_i32_185 : i32 to vector<8x5xi32>
    %653 = arith.select %651, %652, %644 : vector<8x5xi1>, vector<8x5xi32>
    %654 = arith.maximumf %645, %650 : vector<8x5xf32>
    %655 = vector.extract_strided_slice %630 {offsets = [0, 3], sizes = [8, 1], strides = [1, 1]} : vector<8x5xf32> to vector<8x1xf32>
    %656 = vector.extract_strided_slice %350 {offsets = [3, 0], sizes = [1, 5], strides = [1, 1]} : vector<5x5xf32> to vector<1x5xf32>
    %657 = vector.broadcast %655 : vector<8x1xf32> to vector<8x5xf32>
    %658 = vector.broadcast %656 : vector<1x5xf32> to vector<8x5xf32>
    %659 = arith.addf %657, %658 : vector<8x5xf32>
    %660 = arith.cmpf ogt, %659, %654 : vector<8x5xf32>
    %c3_i32_186 = arith.constant 3 : i32
    %661 = vector.broadcast %c3_i32_186 : i32 to vector<8x5xi32>
    %662 = arith.select %660, %661, %653 : vector<8x5xi1>, vector<8x5xi32>
    %663 = arith.maximumf %654, %659 : vector<8x5xf32>
    %664 = vector.extract_strided_slice %630 {offsets = [0, 4], sizes = [8, 1], strides = [1, 1]} : vector<8x5xf32> to vector<8x1xf32>
    %665 = vector.extract_strided_slice %350 {offsets = [4, 0], sizes = [1, 5], strides = [1, 1]} : vector<5x5xf32> to vector<1x5xf32>
    %666 = vector.broadcast %664 : vector<8x1xf32> to vector<8x5xf32>
    %667 = vector.broadcast %665 : vector<1x5xf32> to vector<8x5xf32>
    %668 = arith.addf %666, %667 : vector<8x5xf32>
    %669 = arith.cmpf ogt, %668, %663 : vector<8x5xf32>
    %c4_i32_187 = arith.constant 4 : i32
    %670 = vector.broadcast %c4_i32_187 : i32 to vector<8x5xi32>
    %671 = arith.select %669, %670, %662 : vector<8x5xi1>, vector<8x5xi32>
    %672 = arith.maximumf %663, %668 : vector<8x5xf32>
    %673 = arith.index_cast %c6_i32_182 : i32 to index
    %c0_188 = arith.constant 0 : index
    %c0_189 = arith.constant 0 : index
    %674 = vector.load %arg17[%673, %c0_188, %c0_189] : memref<8x8x5xi32, #tpu.memory_space<vmem>>, vector<1x8x5xi32>
    %675 = vector.shape_cast %674 : vector<1x8x5xi32> to vector<8x5xi32>
    %676 = vector.shape_cast %671 : vector<8x5xi32> to vector<1x8x5xi32>
    tpu.vector_store %arg17[%673, %c0_188, %c0_189], %676 {strides = array<i32>} : memref<8x8x5xi32, #tpu.memory_space<vmem>>, vector<1x8x5xi32>,
    %677 = arith.index_cast %c6_i32_182 : i32 to index
    %c0_190 = arith.constant 0 : index
    %c0_191 = arith.constant 0 : index
    %678 = vector.load %arg16[%677, %c0_190, %c0_191] : memref<8x8x5xf32, #tpu.memory_space<vmem>>, vector<1x8x5xf32>
    %679 = vector.shape_cast %678 : vector<1x8x5xf32> to vector<8x5xf32>
    %680 = arith.addf %672, %679 : vector<8x5xf32>
    %681 = vector.broadcast %c6_i32_182 : i32 to vector<8x1xi32>
    %682 = arith.cmpi slt, %681, %347 : vector<8x1xi32>
    %683 = vector.shape_cast %682 : vector<8x1xi1> to vector<8x1xi1>
    %684 = vector.broadcast %683 : vector<8x1xi1> to vector<8x5xi1>
    %685 = arith.select %684, %680, %630 : vector<8x5xi1>, vector<8x5xf32>
    %c7_i32_192 = arith.constant 7 : i32
    %686 = vector.extract_strided_slice %685 {offsets = [0, 0], sizes = [8, 1], strides = [1, 1]} : vector<8x5xf32> to vector<8x1xf32>
    %687 = vector.extract_strided_slice %350 {offsets = [0, 0], sizes = [1, 5], strides = [1, 1]} : vector<5x5xf32> to vector<1x5xf32>
    %688 = vector.broadcast %686 : vector<8x1xf32> to vector<8x5xf32>
    %689 = vector.broadcast %687 : vector<1x5xf32> to vector<8x5xf32>
    %690 = arith.addf %688, %689 : vector<8x5xf32>
    %c0_i32_193 = arith.constant 0 : i32
    %691 = vector.broadcast %c0_i32_193 : i32 to vector<8x5xi32>
    %692 = vector.extract_strided_slice %685 {offsets = [0, 1], sizes = [8, 1], strides = [1, 1]} : vector<8x5xf32> to vector<8x1xf32>
    %693 = vector.extract_strided_slice %350 {offsets = [1, 0], sizes = [1, 5], strides = [1, 1]} : vector<5x5xf32> to vector<1x5xf32>
    %694 = vector.broadcast %692 : vector<8x1xf32> to vector<8x5xf32>
    %695 = vector.broadcast %693 : vector<1x5xf32> to vector<8x5xf32>
    %696 = arith.addf %694, %695 : vector<8x5xf32>
    %697 = arith.cmpf ogt, %696, %690 : vector<8x5xf32>
    %c1_i32_194 = arith.constant 1 : i32
    %698 = vector.broadcast %c1_i32_194 : i32 to vector<8x5xi32>
    %699 = arith.select %697, %698, %691 : vector<8x5xi1>, vector<8x5xi32>
    %700 = arith.maximumf %690, %696 : vector<8x5xf32>
    %701 = vector.extract_strided_slice %685 {offsets = [0, 2], sizes = [8, 1], strides = [1, 1]} : vector<8x5xf32> to vector<8x1xf32>
    %702 = vector.extract_strided_slice %350 {offsets = [2, 0], sizes = [1, 5], strides = [1, 1]} : vector<5x5xf32> to vector<1x5xf32>
    %703 = vector.broadcast %701 : vector<8x1xf32> to vector<8x5xf32>
    %704 = vector.broadcast %702 : vector<1x5xf32> to vector<8x5xf32>
    %705 = arith.addf %703, %704 : vector<8x5xf32>
    %706 = arith.cmpf ogt, %705, %700 : vector<8x5xf32>
    %c2_i32_195 = arith.constant 2 : i32
    %707 = vector.broadcast %c2_i32_195 : i32 to vector<8x5xi32>
    %708 = arith.select %706, %707, %699 : vector<8x5xi1>, vector<8x5xi32>
    %709 = arith.maximumf %700, %705 : vector<8x5xf32>
    %710 = vector.extract_strided_slice %685 {offsets = [0, 3], sizes = [8, 1], strides = [1, 1]} : vector<8x5xf32> to vector<8x1xf32>
    %711 = vector.extract_strided_slice %350 {offsets = [3, 0], sizes = [1, 5], strides = [1, 1]} : vector<5x5xf32> to vector<1x5xf32>
    %712 = vector.broadcast %710 : vector<8x1xf32> to vector<8x5xf32>
    %713 = vector.broadcast %711 : vector<1x5xf32> to vector<8x5xf32>
    %714 = arith.addf %712, %713 : vector<8x5xf32>
    %715 = arith.cmpf ogt, %714, %709 : vector<8x5xf32>
    %c3_i32_196 = arith.constant 3 : i32
    %716 = vector.broadcast %c3_i32_196 : i32 to vector<8x5xi32>
    %717 = arith.select %715, %716, %708 : vector<8x5xi1>, vector<8x5xi32>
    %718 = arith.maximumf %709, %714 : vector<8x5xf32>
    %719 = vector.extract_strided_slice %685 {offsets = [0, 4], sizes = [8, 1], strides = [1, 1]} : vector<8x5xf32> to vector<8x1xf32>
    %720 = vector.extract_strided_slice %350 {offsets = [4, 0], sizes = [1, 5], strides = [1, 1]} : vector<5x5xf32> to vector<1x5xf32>
    %721 = vector.broadcast %719 : vector<8x1xf32> to vector<8x5xf32>
    %722 = vector.broadcast %720 : vector<1x5xf32> to vector<8x5xf32>
    %723 = arith.addf %721, %722 : vector<8x5xf32>
    %724 = arith.cmpf ogt, %723, %718 : vector<8x5xf32>
    %c4_i32_197 = arith.constant 4 : i32
    %725 = vector.broadcast %c4_i32_197 : i32 to vector<8x5xi32>
    %726 = arith.select %724, %725, %717 : vector<8x5xi1>, vector<8x5xi32>
    %727 = arith.maximumf %718, %723 : vector<8x5xf32>
    %728 = arith.index_cast %c7_i32_192 : i32 to index
    %c0_198 = arith.constant 0 : index
    %c0_199 = arith.constant 0 : index
    %729 = vector.load %arg17[%728, %c0_198, %c0_199] : memref<8x8x5xi32, #tpu.memory_space<vmem>>, vector<1x8x5xi32>
    %730 = vector.shape_cast %729 : vector<1x8x5xi32> to vector<8x5xi32>
    %731 = vector.shape_cast %726 : vector<8x5xi32> to vector<1x8x5xi32>
    tpu.vector_store %arg17[%728, %c0_198, %c0_199], %731 {strides = array<i32>} : memref<8x8x5xi32, #tpu.memory_space<vmem>>, vector<1x8x5xi32>,
    %732 = arith.index_cast %c7_i32_192 : i32 to index
    %c0_200 = arith.constant 0 : index
    %c0_201 = arith.constant 0 : index
    %733 = vector.load %arg16[%732, %c0_200, %c0_201] : memref<8x8x5xf32, #tpu.memory_space<vmem>>, vector<1x8x5xf32>
    %734 = vector.shape_cast %733 : vector<1x8x5xf32> to vector<8x5xf32>
    %735 = arith.addf %727, %734 : vector<8x5xf32>
    %736 = vector.broadcast %c7_i32_192 : i32 to vector<8x1xi32>
    %737 = arith.cmpi slt, %736, %347 : vector<8x1xi32>
    %738 = vector.shape_cast %737 : vector<8x1xi1> to vector<8x1xi1>
    %739 = vector.broadcast %738 : vector<8x1xi1> to vector<8x5xi1>
    %740 = arith.select %739, %735, %685 : vector<8x5xi1>, vector<8x5xf32>
    %c7_i32_202 = arith.constant 7 : i32
    %c0_203 = arith.constant 0 : index
    %c0_204 = arith.constant 0 : index
    %741 = vector.load %arg11[%c0_203, %c0_204] : memref<1x5xf32, #tpu.memory_space<vmem>>, vector<1x5xf32>
    %742 = vector.broadcast %741 : vector<1x5xf32> to vector<8x5xf32>
    %743 = arith.addf %740, %742 : vector<8x5xf32>
    %cst_205 = arith.constant dense<0xFF800000> : vector<8xf32>
    %744 = vector.multi_reduction <maximumf>, %743, %cst_205 [1] : vector<8x5xf32> to vector<8xf32>
    %745 = vector.shape_cast %744 : vector<8xf32> to vector<8x1xf32>
    %746 = tpu.iota {dimensions = array<i32: 1>} : vector<8x5xi32>
    %747 = vector.broadcast %745 : vector<8x1xf32> to vector<8x5xf32>
    %748 = arith.cmpf oeq, %743, %747 : vector<8x5xf32>
    %c5_i32_206 = arith.constant 5 : i32
    %749 = vector.broadcast %c5_i32_206 : i32 to vector<8x5xi32>
    %750 = arith.select %748, %746, %749 : vector<8x5xi1>, vector<8x5xi32>
    %cst_207 = arith.constant dense<2147483647> : vector<8xi32>
    %751 = vector.multi_reduction <minsi>, %750, %cst_207 [1] : vector<8x5xi32> to vector<8xi32>
    %752 = vector.shape_cast %751 : vector<8xi32> to vector<8x1xi32>
    %753 = tpu.iota {dimensions = array<i32: 1>} : vector<8x8xi32>
    %754 = vector.broadcast %349 : vector<8x1xi32> to vector<8x8xi32>
    %755 = arith.cmpi eq, %753, %754 : vector<8x8xi32>
    %c0_i32_208 = arith.constant 0 : i32
    %756 = vector.broadcast %c0_i32_208 : i32 to vector<8x8xi32>
    %757 = vector.shape_cast %752 : vector<8x1xi32> to vector<8x1xi32>
    %758 = vector.broadcast %757 : vector<8x1xi32> to vector<8x8xi32>
    %759 = arith.select %755, %758, %756 : vector<8x8xi1>, vector<8x8xi32>
    %c0_i32_209 = arith.constant 0 : i32
    %c7_i32_210 = arith.constant 7 : i32
    %760 = arith.subi %c7_i32_210, %c0_i32_209 : i32
    %761 = arith.index_cast %760 : i32 to index
    %c0_211 = arith.constant 0 : index
    %c0_212 = arith.constant 0 : index
    %762 = vector.load %arg17[%761, %c0_211, %c0_212] : memref<8x8x5xi32, #tpu.memory_space<vmem>>, vector<1x8x5xi32>
    %763 = vector.shape_cast %762 : vector<1x8x5xi32> to vector<8x5xi32>
    %764 = tpu.iota {dimensions = array<i32: 1>} : vector<8x5xi32>
    %765 = vector.broadcast %752 : vector<8x1xi32> to vector<8x5xi32>
    %766 = arith.cmpi eq, %764, %765 : vector<8x5xi32>
    %c0_i32_213 = arith.constant 0 : i32
    %767 = vector.broadcast %c0_i32_213 : i32 to vector<8x5xi32>
    %768 = arith.select %766, %763, %767 : vector<8x5xi1>, vector<8x5xi32>
    %cst_214 = arith.constant dense<0> : vector<8xi32>
    %769 = vector.multi_reduction <add>, %768, %cst_214 [1] : vector<8x5xi32> to vector<8xi32>
    %770 = vector.shape_cast %769 : vector<8xi32> to vector<8x1xi32>
    %771 = vector.broadcast %760 : i32 to vector<8x1xi32>
    %772 = arith.cmpi sle, %771, %349 : vector<8x1xi32>
    %773 = arith.select %772, %770, %752 : vector<8x1xi1>, vector<8x1xi32>
    %c1_i32_215 = arith.constant 1 : i32
    %774 = arith.subi %760, %c1_i32_215 : i32
    %775 = vector.broadcast %774 : i32 to vector<8x8xi32>
    %776 = arith.cmpi eq, %753, %775 : vector<8x8xi32>
    %777 = vector.broadcast %772 : vector<8x1xi1> to vector<8x8xi1>
    %778 = arith.andi %776, %777 : vector<8x8xi1>
    %779 = vector.shape_cast %773 : vector<8x1xi32> to vector<8x1xi32>
    %780 = vector.broadcast %779 : vector<8x1xi32> to vector<8x8xi32>
    %781 = arith.select %778, %780, %759 : vector<8x8xi1>, vector<8x8xi32>
    %c1_i32_216 = arith.constant 1 : i32
    %c7_i32_217 = arith.constant 7 : i32
    %782 = arith.subi %c7_i32_217, %c1_i32_216 : i32
    %783 = arith.index_cast %782 : i32 to index
    %c0_218 = arith.constant 0 : index
    %c0_219 = arith.constant 0 : index
    %784 = vector.load %arg17[%783, %c0_218, %c0_219] : memref<8x8x5xi32, #tpu.memory_space<vmem>>, vector<1x8x5xi32>
    %785 = vector.shape_cast %784 : vector<1x8x5xi32> to vector<8x5xi32>
    %786 = tpu.iota {dimensions = array<i32: 1>} : vector<8x5xi32>
    %787 = vector.broadcast %773 : vector<8x1xi32> to vector<8x5xi32>
    %788 = arith.cmpi eq, %786, %787 : vector<8x5xi32>
    %c0_i32_220 = arith.constant 0 : i32
    %789 = vector.broadcast %c0_i32_220 : i32 to vector<8x5xi32>
    %790 = arith.select %788, %785, %789 : vector<8x5xi1>, vector<8x5xi32>
    %cst_221 = arith.constant dense<0> : vector<8xi32>
    %791 = vector.multi_reduction <add>, %790, %cst_221 [1] : vector<8x5xi32> to vector<8xi32>
    %792 = vector.shape_cast %791 : vector<8xi32> to vector<8x1xi32>
    %793 = vector.broadcast %782 : i32 to vector<8x1xi32>
    %794 = arith.cmpi sle, %793, %349 : vector<8x1xi32>
    %795 = arith.select %794, %792, %773 : vector<8x1xi1>, vector<8x1xi32>
    %c1_i32_222 = arith.constant 1 : i32
    %796 = arith.subi %782, %c1_i32_222 : i32
    %797 = vector.broadcast %796 : i32 to vector<8x8xi32>
    %798 = arith.cmpi eq, %753, %797 : vector<8x8xi32>
    %799 = vector.broadcast %794 : vector<8x1xi1> to vector<8x8xi1>
    %800 = arith.andi %798, %799 : vector<8x8xi1>
    %801 = vector.shape_cast %795 : vector<8x1xi32> to vector<8x1xi32>
    %802 = vector.broadcast %801 : vector<8x1xi32> to vector<8x8xi32>
    %803 = arith.select %800, %802, %781 : vector<8x8xi1>, vector<8x8xi32>
    %c2_i32_223 = arith.constant 2 : i32
    %c7_i32_224 = arith.constant 7 : i32
    %804 = arith.subi %c7_i32_224, %c2_i32_223 : i32
    %805 = arith.index_cast %804 : i32 to index
    %c0_225 = arith.constant 0 : index
    %c0_226 = arith.constant 0 : index
    %806 = vector.load %arg17[%805, %c0_225, %c0_226] : memref<8x8x5xi32, #tpu.memory_space<vmem>>, vector<1x8x5xi32>
    %807 = vector.shape_cast %806 : vector<1x8x5xi32> to vector<8x5xi32>
    %808 = tpu.iota {dimensions = array<i32: 1>} : vector<8x5xi32>
    %809 = vector.broadcast %795 : vector<8x1xi32> to vector<8x5xi32>
    %810 = arith.cmpi eq, %808, %809 : vector<8x5xi32>
    %c0_i32_227 = arith.constant 0 : i32
    %811 = vector.broadcast %c0_i32_227 : i32 to vector<8x5xi32>
    %812 = arith.select %810, %807, %811 : vector<8x5xi1>, vector<8x5xi32>
    %cst_228 = arith.constant dense<0> : vector<8xi32>
    %813 = vector.multi_reduction <add>, %812, %cst_228 [1] : vector<8x5xi32> to vector<8xi32>
    %814 = vector.shape_cast %813 : vector<8xi32> to vector<8x1xi32>
    %815 = vector.broadcast %804 : i32 to vector<8x1xi32>
    %816 = arith.cmpi sle, %815, %349 : vector<8x1xi32>
    %817 = arith.select %816, %814, %795 : vector<8x1xi1>, vector<8x1xi32>
    %c1_i32_229 = arith.constant 1 : i32
    %818 = arith.subi %804, %c1_i32_229 : i32
    %819 = vector.broadcast %818 : i32 to vector<8x8xi32>
    %820 = arith.cmpi eq, %753, %819 : vector<8x8xi32>
    %821 = vector.broadcast %816 : vector<8x1xi1> to vector<8x8xi1>
    %822 = arith.andi %820, %821 : vector<8x8xi1>
    %823 = vector.shape_cast %817 : vector<8x1xi32> to vector<8x1xi32>
    %824 = vector.broadcast %823 : vector<8x1xi32> to vector<8x8xi32>
    %825 = arith.select %822, %824, %803 : vector<8x8xi1>, vector<8x8xi32>
    %c3_i32_230 = arith.constant 3 : i32
    %c7_i32_231 = arith.constant 7 : i32
    %826 = arith.subi %c7_i32_231, %c3_i32_230 : i32
    %827 = arith.index_cast %826 : i32 to index
    %c0_232 = arith.constant 0 : index
    %c0_233 = arith.constant 0 : index
    %828 = vector.load %arg17[%827, %c0_232, %c0_233] : memref<8x8x5xi32, #tpu.memory_space<vmem>>, vector<1x8x5xi32>
    %829 = vector.shape_cast %828 : vector<1x8x5xi32> to vector<8x5xi32>
    %830 = tpu.iota {dimensions = array<i32: 1>} : vector<8x5xi32>
    %831 = vector.broadcast %817 : vector<8x1xi32> to vector<8x5xi32>
    %832 = arith.cmpi eq, %830, %831 : vector<8x5xi32>
    %c0_i32_234 = arith.constant 0 : i32
    %833 = vector.broadcast %c0_i32_234 : i32 to vector<8x5xi32>
    %834 = arith.select %832, %829, %833 : vector<8x5xi1>, vector<8x5xi32>
    %cst_235 = arith.constant dense<0> : vector<8xi32>
    %835 = vector.multi_reduction <add>, %834, %cst_235 [1] : vector<8x5xi32> to vector<8xi32>
    %836 = vector.shape_cast %835 : vector<8xi32> to vector<8x1xi32>
    %837 = vector.broadcast %826 : i32 to vector<8x1xi32>
    %838 = arith.cmpi sle, %837, %349 : vector<8x1xi32>
    %839 = arith.select %838, %836, %817 : vector<8x1xi1>, vector<8x1xi32>
    %c1_i32_236 = arith.constant 1 : i32
    %840 = arith.subi %826, %c1_i32_236 : i32
    %841 = vector.broadcast %840 : i32 to vector<8x8xi32>
    %842 = arith.cmpi eq, %753, %841 : vector<8x8xi32>
    %843 = vector.broadcast %838 : vector<8x1xi1> to vector<8x8xi1>
    %844 = arith.andi %842, %843 : vector<8x8xi1>
    %845 = vector.shape_cast %839 : vector<8x1xi32> to vector<8x1xi32>
    %846 = vector.broadcast %845 : vector<8x1xi32> to vector<8x8xi32>
    %847 = arith.select %844, %846, %825 : vector<8x8xi1>, vector<8x8xi32>
    %c4_i32_237 = arith.constant 4 : i32
    %c7_i32_238 = arith.constant 7 : i32
    %848 = arith.subi %c7_i32_238, %c4_i32_237 : i32
    %849 = arith.index_cast %848 : i32 to index
    %c0_239 = arith.constant 0 : index
    %c0_240 = arith.constant 0 : index
    %850 = vector.load %arg17[%849, %c0_239, %c0_240] : memref<8x8x5xi32, #tpu.memory_space<vmem>>, vector<1x8x5xi32>
    %851 = vector.shape_cast %850 : vector<1x8x5xi32> to vector<8x5xi32>
    %852 = tpu.iota {dimensions = array<i32: 1>} : vector<8x5xi32>
    %853 = vector.broadcast %839 : vector<8x1xi32> to vector<8x5xi32>
    %854 = arith.cmpi eq, %852, %853 : vector<8x5xi32>
    %c0_i32_241 = arith.constant 0 : i32
    %855 = vector.broadcast %c0_i32_241 : i32 to vector<8x5xi32>
    %856 = arith.select %854, %851, %855 : vector<8x5xi1>, vector<8x5xi32>
    %cst_242 = arith.constant dense<0> : vector<8xi32>
    %857 = vector.multi_reduction <add>, %856, %cst_242 [1] : vector<8x5xi32> to vector<8xi32>
    %858 = vector.shape_cast %857 : vector<8xi32> to vector<8x1xi32>
    %859 = vector.broadcast %848 : i32 to vector<8x1xi32>
    %860 = arith.cmpi sle, %859, %349 : vector<8x1xi32>
    %861 = arith.select %860, %858, %839 : vector<8x1xi1>, vector<8x1xi32>
    %c1_i32_243 = arith.constant 1 : i32
    %862 = arith.subi %848, %c1_i32_243 : i32
    %863 = vector.broadcast %862 : i32 to vector<8x8xi32>
    %864 = arith.cmpi eq, %753, %863 : vector<8x8xi32>
    %865 = vector.broadcast %860 : vector<8x1xi1> to vector<8x8xi1>
    %866 = arith.andi %864, %865 : vector<8x8xi1>
    %867 = vector.shape_cast %861 : vector<8x1xi32> to vector<8x1xi32>
    %868 = vector.broadcast %867 : vector<8x1xi32> to vector<8x8xi32>
    %869 = arith.select %866, %868, %847 : vector<8x8xi1>, vector<8x8xi32>
    %c5_i32_244 = arith.constant 5 : i32
    %c7_i32_245 = arith.constant 7 : i32
    %870 = arith.subi %c7_i32_245, %c5_i32_244 : i32
    %871 = arith.index_cast %870 : i32 to index
    %c0_246 = arith.constant 0 : index
    %c0_247 = arith.constant 0 : index
    %872 = vector.load %arg17[%871, %c0_246, %c0_247] : memref<8x8x5xi32, #tpu.memory_space<vmem>>, vector<1x8x5xi32>
    %873 = vector.shape_cast %872 : vector<1x8x5xi32> to vector<8x5xi32>
    %874 = tpu.iota {dimensions = array<i32: 1>} : vector<8x5xi32>
    %875 = vector.broadcast %861 : vector<8x1xi32> to vector<8x5xi32>
    %876 = arith.cmpi eq, %874, %875 : vector<8x5xi32>
    %c0_i32_248 = arith.constant 0 : i32
    %877 = vector.broadcast %c0_i32_248 : i32 to vector<8x5xi32>
    %878 = arith.select %876, %873, %877 : vector<8x5xi1>, vector<8x5xi32>
    %cst_249 = arith.constant dense<0> : vector<8xi32>
    %879 = vector.multi_reduction <add>, %878, %cst_249 [1] : vector<8x5xi32> to vector<8xi32>
    %880 = vector.shape_cast %879 : vector<8xi32> to vector<8x1xi32>
    %881 = vector.broadcast %870 : i32 to vector<8x1xi32>
    %882 = arith.cmpi sle, %881, %349 : vector<8x1xi32>
    %883 = arith.select %882, %880, %861 : vector<8x1xi1>, vector<8x1xi32>
    %c1_i32_250 = arith.constant 1 : i32
    %884 = arith.subi %870, %c1_i32_250 : i32
    %885 = vector.broadcast %884 : i32 to vector<8x8xi32>
    %886 = arith.cmpi eq, %753, %885 : vector<8x8xi32>
    %887 = vector.broadcast %882 : vector<8x1xi1> to vector<8x8xi1>
    %888 = arith.andi %886, %887 : vector<8x8xi1>
    %889 = vector.shape_cast %883 : vector<8x1xi32> to vector<8x1xi32>
    %890 = vector.broadcast %889 : vector<8x1xi32> to vector<8x8xi32>
    %891 = arith.select %888, %890, %869 : vector<8x8xi1>, vector<8x8xi32>
    %c6_i32_251 = arith.constant 6 : i32
    %c7_i32_252 = arith.constant 7 : i32
    %892 = arith.subi %c7_i32_252, %c6_i32_251 : i32
    %893 = arith.index_cast %892 : i32 to index
    %c0_253 = arith.constant 0 : index
    %c0_254 = arith.constant 0 : index
    %894 = vector.load %arg17[%893, %c0_253, %c0_254] : memref<8x8x5xi32, #tpu.memory_space<vmem>>, vector<1x8x5xi32>
    %895 = vector.shape_cast %894 : vector<1x8x5xi32> to vector<8x5xi32>
    %896 = tpu.iota {dimensions = array<i32: 1>} : vector<8x5xi32>
    %897 = vector.broadcast %883 : vector<8x1xi32> to vector<8x5xi32>
    %898 = arith.cmpi eq, %896, %897 : vector<8x5xi32>
    %c0_i32_255 = arith.constant 0 : i32
    %899 = vector.broadcast %c0_i32_255 : i32 to vector<8x5xi32>
    %900 = arith.select %898, %895, %899 : vector<8x5xi1>, vector<8x5xi32>
    %cst_256 = arith.constant dense<0> : vector<8xi32>
    %901 = vector.multi_reduction <add>, %900, %cst_256 [1] : vector<8x5xi32> to vector<8xi32>
    %902 = vector.shape_cast %901 : vector<8xi32> to vector<8x1xi32>
    %903 = vector.broadcast %892 : i32 to vector<8x1xi32>
    %904 = arith.cmpi sle, %903, %349 : vector<8x1xi32>
    %905 = arith.select %904, %902, %883 : vector<8x1xi1>, vector<8x1xi32>
    %c1_i32_257 = arith.constant 1 : i32
    %906 = arith.subi %892, %c1_i32_257 : i32
    %907 = vector.broadcast %906 : i32 to vector<8x8xi32>
    %908 = arith.cmpi eq, %753, %907 : vector<8x8xi32>
    %909 = vector.broadcast %904 : vector<8x1xi1> to vector<8x8xi1>
    %910 = arith.andi %908, %909 : vector<8x8xi1>
    %911 = vector.shape_cast %905 : vector<8x1xi32> to vector<8x1xi32>
    %912 = vector.broadcast %911 : vector<8x1xi32> to vector<8x8xi32>
    %913 = arith.select %910, %912, %891 : vector<8x8xi1>, vector<8x8xi32>
    %c7_i32_258 = arith.constant 7 : i32
    %c0_259 = arith.constant 0 : index
    %c0_260 = arith.constant 0 : index
    %914 = vector.load %arg12[%c0_259, %c0_260] : memref<8x8xi32, #tpu.memory_space<vmem>>, vector<8x8xi32>
    tpu.vector_store %arg12[%c0_259, %c0_260], %913 {strides = array<i32>} : memref<8x8xi32, #tpu.memory_space<vmem>>, vector<8x8xi32>,
    return
  }
  func.func @transform_0(%arg0: i32) -> (i32, i32, i32) {
    %c0_i32 = arith.constant 0 : i32
    %c0_i32_0 = arith.constant 0 : i32
    %c0_i32_1 = arith.constant 0 : i32
    return %c0_i32, %arg0, %c0_i32_0 : i32, i32, i32
  }
  func.func @transform_1(%arg0: i32) -> (i32, i32) {
    %c0_i32 = arith.constant 0 : i32
    %c0_i32_0 = arith.constant 0 : i32
    return %arg0, %c0_i32 : i32, i32
  }
  func.func @transform_2(%arg0: i32) -> (i32, i32) {
    %c0_i32 = arith.constant 0 : i32
    %c0_i32_0 = arith.constant 0 : i32
    %c0_i32_1 = arith.constant 0 : i32
    return %c0_i32, %c0_i32_0 : i32, i32
  }
  func.func @transform_3(%arg0: i32) -> (i32, i32) {
    %c0_i32 = arith.constant 0 : i32
    %c0_i32_0 = arith.constant 0 : i32
    %c0_i32_1 = arith.constant 0 : i32
    return %c0_i32, %c0_i32_0 : i32, i32
  }
  func.func @transform_4(%arg0: i32) -> (i32, i32) {
    %c0_i32 = arith.constant 0 : i32
    %c0_i32_0 = arith.constant 0 : i32
    %c0_i32_1 = arith.constant 0 : i32
    return %c0_i32, %c0_i32_0 : i32, i32
  }
  func.func @transform_5(%arg0: i32) -> (i32, i32) {
    %c0_i32 = arith.constant 0 : i32
    %c0_i32_0 = arith.constant 0 : i32
    %c0_i32_1 = arith.constant 0 : i32
    return %c0_i32, %c0_i32_0 : i32, i32
  }
  func.func @transform_6(%arg0: i32) -> (i32, i32) {
    %c0_i32 = arith.constant 0 : i32
    %c0_i32_0 = arith.constant 0 : i32
    %c0_i32_1 = arith.constant 0 : i32
    return %c0_i32, %c0_i32_0 : i32, i32
  }
  func.func @transform_7(%arg0: i32) -> (i32, i32) {
    %c0_i32 = arith.constant 0 : i32
    %c0_i32_0 = arith.constant 0 : i32
    %c0_i32_1 = arith.constant 0 : i32
    return %c0_i32, %c0_i32_0 : i32, i32
  }
  func.func @transform_8(%arg0: i32) -> (i32, i32) {
    %c0_i32 = arith.constant 0 : i32
    %c0_i32_0 = arith.constant 0 : i32
    %c0_i32_1 = arith.constant 0 : i32
    return %c0_i32, %c0_i32_0 : i32, i32
  }
  func.func @transform_9(%arg0: i32) -> (i32, i32) {
    %c0_i32 = arith.constant 0 : i32
    %c0_i32_0 = arith.constant 0 : i32
    %c0_i32_1 = arith.constant 0 : i32
    return %c0_i32, %c0_i32_0 : i32, i32
  }
  func.func @transform_10(%arg0: i32) -> (i32, i32) {
    %c0_i32 = arith.constant 0 : i32
    %c0_i32_0 = arith.constant 0 : i32
    %c0_i32_1 = arith.constant 0 : i32
    return %c0_i32, %c0_i32_0 : i32, i32
  }
  func.func @transform_11(%arg0: i32) -> (i32, i32) {
    %c0_i32 = arith.constant 0 : i32
    %c0_i32_0 = arith.constant 0 : i32
    return %arg0, %c0_i32 : i32, i32
  }
}

</mosaic_0001>

<llo_original>
// kernel: tpu_custom_call.1
$region0: #{tpu_custom_call.1}
  #allocation0 [shape = 'u32[]', space=smem, size = 0x4, offset = 0x4, fixed_abs, tag = 'smem constant byte address 0x4 - core index']
  #allocation1 [shape = 'u32[144,128]{1,0:T(1,128)}', space=vmem, size = 0x12000, scoped, tag = 'internal scratch']
  #allocation2 [shape = 'f32[8,8,256]{2,1,0:T(8,128)}', space=vmem, size = 0x10000, scoped, tag = 'scratch operand']
  #allocation3 [shape = 'f32[8,8,32]{2,1,0:T(8,128)}', space=vmem, size = 0x8000, scoped, tag = 'scratch operand']
  #allocation4 [shape = 'f32[8,8,32]{2,1,0:T(8,128)}', space=vmem, size = 0x8000, scoped, tag = 'scratch operand']
  #allocation5 [shape = 'f32[8,8,5]{2,1,0:T(8,128)}', space=vmem, size = 0x8000, scoped, tag = 'scratch operand']
  #allocation6 [shape = 's32[8,8,5]{2,1,0:T(8,128)}', space=vmem, size = 0x8000, scoped, tag = 'scratch operand']
  %s0 = inlined_call_operand.hbm [shape: bf16[8,16,32], index: 0, kind: input, shape index: {}]
  %s1 = inlined_call_operand.hbm [shape: s32[16,1], index: 1, kind: input, shape index: {}]
  %s2 = inlined_call_operand.hbm [shape: bf16[32,256], index: 2, kind: input, shape index: {}]
  %s3 = inlined_call_operand.hbm [shape: bf16[64,256], index: 3, kind: input, shape index: {}]
  %s4 = inlined_call_operand.hbm [shape: f32[1,256], index: 4, kind: input, shape index: {}]
  %s5 = inlined_call_operand.hbm [shape: bf16[32,5], index: 5, kind: input, shape index: {}]
  %s6 = inlined_call_operand.hbm [shape: bf16[32,5], index: 6, kind: input, shape index: {}]
  %s7 = inlined_call_operand.hbm [shape: f32[1,5], index: 7, kind: input, shape index: {}]
  %s8 = inlined_call_operand.hbm [shape: f32[5,5], index: 8, kind: input, shape index: {}]
  %s9 = inlined_call_operand.hbm [shape: f32[1,5], index: 9, kind: input, shape index: {}]
  %s10 = inlined_call_operand.hbm [shape: f32[1,5], index: 10, kind: input, shape index: {}]
  %s11 = inlined_call_operand.hbm [shape: s32[16,8], index: 11, kind: output, shape index: {}]
  %s12 = sld [smem:[#allocation0]]
  $region121: #{tpu_custom_call.1} parent=0
    _
  %s14 = ssub.s32 1, %s12
  %s15 = scalar_select 0, %s14, %s12
  $region1: #{tpu_custom_call.1} parent=0
    #allocation7 [shape = 'u8[32768]{0}', space=vmem, size = 0x8000, scoped, tag = 'input window, operand 0']
    #allocation8 [shape = 's32[2]{0}', space=sflag, size = 0x8, scoped, tag = 'scoped memory for tpu_custom_call.1']
    #allocation9 [shape = 's32[2]{0}', space=sflag, size = 0x8, scoped, tag = 'scoped memory for tpu_custom_call.1']
    #allocation10 [shape = 'u8[8192]{0}', space=vmem, size = 0x2000, scoped, tag = 'input window, operand 1']
    #allocation11 [shape = 's32[2]{0}', space=sflag, size = 0x8, scoped, tag = 'scoped memory for tpu_custom_call.1']
    #allocation12 [shape = 'u8[16384]{0}', space=vmem, size = 0x4000, scoped, tag = 'input window, operand 2, single buffered']
    #allocation13 [shape = 'u8[32768]{0}', space=vmem, size = 0x8000, scoped, tag = 'input window, operand 3, single buffered']
    #allocation14 [shape = 's32[1]{0}', space=sflag, size = 0x4, scoped, tag = 'scoped memory for tpu_custom_call.1']
    #allocation15 [shape = 'u8[1024]{0}', space=vmem, size = 0x400, scoped, tag = 'input window, operand 4, single buffered']
    #allocation16 [shape = 'u8[8192]{0}', space=vmem, size = 0x2000, scoped, tag = 'input window, operand 5, single buffered']
    #allocation17 [shape = 's32[1]{0}', space=sflag, size = 0x4, scoped, tag = 'scoped memory for tpu_custom_call.1']
    #allocation18 [shape = 'u8[8192]{0}', space=vmem, size = 0x2000, scoped, tag = 'input window, operand 6, single buffered']
    #allocation19 [shape = 'u8[512]{0}', space=vmem, size = 0x400, scoped, tag = 'input window, operand 7, single buffered']
    #allocation20 [shape = 's32[1]{0}', space=sflag, size = 0x4, scoped, tag = 'scoped memory for tpu_custom_call.1']
    #allocation21 [shape = 'u8[4096]{0}', space=vmem, size = 0x1000, scoped, tag = 'input window, operand 8, single buffered']
    #allocation22 [shape = 'u8[512]{0}', space=vmem, size = 0x400, scoped, tag = 'input window, operand 9, single buffered']
    #allocation23 [shape = 's32[1]{0}', space=sflag, size = 0x4, scoped, tag = 'scoped memory for tpu_custom_call.1']
    #allocation24 [shape = 'u8[512]{0}', space=vmem, size = 0x400, scoped, tag = 'input window, operand 10, single buffered']
    #allocation25 [shape = 'u8[8192]{0}', space=vmem, size = 0x2000, scoped, tag = 'output window, operand 0']
    %16 = vsyncpa [#allocation8], 0
    %s17 = scalar_lea.sflag [#allocation8], 1
    %18 = vsyncpa %s17, 0
    %19 = vsyncpa [#allocation11], 0
    %s20 = scalar_lea.sflag [#allocation11], 1
    %21 = vsyncpa %s20, 0
    %22 = vsyncpa [#allocation14], 0
    %23 = vsyncpa [#allocation17], 0
    %24 = vsyncpa [#allocation20], 0
    %25 = vsyncpa [#allocation23], 0
    %26 = vsyncpa [#allocation9], 0
    %s27 = scalar_lea.sflag [#allocation9], 1
    %28 = vsyncpa %s27, 0
    loop: start=0, step=1, limit=4
    $region2: #{tpu_custom_call.1} parent=1 // loop_pre_header
      _
    $region3: #{tpu_custom_call.1} parent=1 // loop_header
      %s30 = sphi 0, %s34
      %p31 = scmp.ge.s32.totalorder %s30, 4
      %s40 = sphi 0, %s42
      %s43 = sphi 0, %s40
      %s44 = sphi 0, %s43
      %s60 = sphi 0, %s44
      %s66 = sphi 0, %s68
      %s69 = sphi 0, %s66
      %s70 = sphi 0, %s69
      %s86 = sphi 0, %s70
      %s90 = sphi 0, %s90
      %s92 = sphi 0, %s90
      %s93 = sphi 0, %s92
      %s107 = sphi 0, %s93
      %s111 = sphi 0, %s111
      %s113 = sphi 0, %s111
      %s114 = sphi 0, %s113
      %s128 = sphi 0, %s114
      %s132 = sphi 0, %s132
      %s134 = sphi 0, %s132
      %s135 = sphi 0, %s134
      %s149 = sphi 0, %s135
      %s153 = sphi 0, %s153
      %s155 = sphi 0, %s153
      %s156 = sphi 0, %s155
      %s170 = sphi 0, %s156
      %s174 = sphi 0, %s174
      %s176 = sphi 0, %s174
      %s177 = sphi 0, %s176
      %s191 = sphi 0, %s177
      %s195 = sphi 0, %s195
      %s197 = sphi 0, %s195
      %s198 = sphi 0, %s197
      %s212 = sphi 0, %s198
      %s216 = sphi 0, %s216
      %s218 = sphi 0, %s216
      %s219 = sphi 0, %s218
      %s233 = sphi 0, %s219
      %s237 = sphi 0, %s237
      %s239 = sphi 0, %s237
      %s240 = sphi 0, %s239
      %s254 = sphi 0, %s240
      %s258 = sphi 0, %s258
      %s260 = sphi 0, %s258
      %s261 = sphi 0, %s260
      %s275 = sphi 0, %s261
      %s281 = sphi 0, %s283
      %s284 = sphi 0, %s281
      %s285 = sphi 0, %s284
      %s301 = sphi 0, %s285
    $region4: #{tpu_custom_call.1} parent=1 // loop_header_branch
      %33 = sbr.rel (%p31) target = $region8
    $region5: #{tpu_custom_call.1} parent=1 // loop_body
      %s35 = ssub.s32 %s30, 1
      %s36 = ssub.s32 %s30, 2
      %s37 = sadd.s32 %s30, 1
      %s38 = ssub.s32 %s30, %s37
      %p39 = scmp.eq.s32.totalorder %s38, 0
      %s41 = sadd.s32 %s40, 1
      %s42 = scalar_select %p39, %s40, %s41
      %p45 = pneg %p39
      %p46 = scmp.eq.s32.totalorder %s30, 1
      %p47 = por %p45, %p46
      %p48 = scmp.ne.s32.totalorder %s40, %s43
      %p49 = scmp.eq.s32.totalorder %s30, 0
      %p50 = por %p48, %p49
      %p51 = scmp.ne.s32.totalorder %s40, %s43
      %p52 = scmp.eq.s32.totalorder %s35, 1
      %p53 = por %p51, %p52
      %p54 = scmp.ne.s32.totalorder %s43, %s44
      %p55 = scmp.eq.s32.totalorder %s35, 0
      %p56 = por %p54, %p55
      %p57 = scmp.ne.s32.totalorder %s43, %s44
      %p58 = scmp.eq.s32.totalorder %s36, 1
      %p59 = por %p57, %p58
      %p61 = scmp.ne.s32.totalorder %s44, %s60
      %p62 = scmp.eq.s32.totalorder %s36, 0
      %p63 = por %p61, %p62
      %s64 = ssub.s32 %s30, %s37
      %p65 = scmp.eq.s32.totalorder %s64, 0
      %s67 = sadd.s32 %s66, 1
      %s68 = scalar_select %p65, %s66, %s67
      %p71 = pneg %p65
      %p72 = scmp.eq.s32.totalorder %s30, 1
      %p73 = por %p71, %p72
      %p74 = scmp.ne.s32.totalorder %s66, %s69
      %p75 = scmp.eq.s32.totalorder %s30, 0
      %p76 = por %p74, %p75
      %p77 = scmp.ne.s32.totalorder %s66, %s69
      %p78 = scmp.eq.s32.totalorder %s35, 1
      %p79 = por %p77, %p78
      %p80 = scmp.ne.s32.totalorder %s69, %s70
      %p81 = scmp.eq.s32.totalorder %s35, 0
      %p82 = por %p80, %p81
      %p83 = scmp.ne.s32.totalorder %s69, %s70
      %p84 = scmp.eq.s32.totalorder %s36, 1
      %p85 = por %p83, %p84
      %p87 = scmp.ne.s32.totalorder %s70, %s86
      %p88 = scmp.eq.s32.totalorder %s36, 0
      %p89 = por %p87, %p88
      %s91 = sadd.s32 %s90, 1
      %p94 = scmp.eq.s32.totalorder %s30, 1
      %p95 = scmp.ne.s32.totalorder %s90, %s92
      %p96 = scmp.eq.s32.totalorder %s30, 0
      %p97 = por %p95, %p96
      %p98 = scmp.ne.s32.totalorder %s90, %s92
      %p99 = scmp.eq.s32.totalorder %s35, 1
      %p100 = por %p98, %p99
      %p101 = scmp.ne.s32.totalorder %s92, %s93
      %p102 = scmp.eq.s32.totalorder %s35, 0
      %p103 = por %p101, %p102
      %p104 = scmp.ne.s32.totalorder %s92, %s93
      %p105 = scmp.eq.s32.totalorder %s36, 1
      %p106 = por %p104, %p105
      %p108 = scmp.ne.s32.totalorder %s93, %s107
      %p109 = scmp.eq.s32.totalorder %s36, 0
      %p110 = por %p108, %p109
      %s112 = sadd.s32 %s111, 1
      %p115 = scmp.eq.s32.totalorder %s30, 1
      %p116 = scmp.ne.s32.totalorder %s111, %s113
      %p117 = scmp.eq.s32.totalorder %s30, 0
      %p118 = por %p116, %p117
      %p119 = scmp.ne.s32.totalorder %s111, %s113
      %p120 = scmp.eq.s32.totalorder %s35, 1
      %p121 = por %p119, %p120
      %p122 = scmp.ne.s32.totalorder %s113, %s114
      %p123 = scmp.eq.s32.totalorder %s35, 0
      %p124 = por %p122, %p123
      %p125 = scmp.ne.s32.totalorder %s113, %s114
      %p126 = scmp.eq.s32.totalorder %s36, 1
      %p127 = por %p125, %p126
      %p129 = scmp.ne.s32.totalorder %s114, %s128
      %p130 = scmp.eq.s32.totalorder %s36, 0
      %p131 = por %p129, %p130
      %s133 = sadd.s32 %s132, 1
      %p136 = scmp.eq.s32.totalorder %s30, 1
      %p137 = scmp.ne.s32.totalorder %s132, %s134
      %p138 = scmp.eq.s32.totalorder %s30, 0
      %p139 = por %p137, %p138
      %p140 = scmp.ne.s32.totalorder %s132, %s134
      %p141 = scmp.eq.s32.totalorder %s35, 1
      %p142 = por %p140, %p141
      %p143 = scmp.ne.s32.totalorder %s134, %s135
      %p144 = scmp.eq.s32.totalorder %s35, 0
      %p145 = por %p143, %p144
      %p146 = scmp.ne.s32.totalorder %s134, %s135
      %p147 = scmp.eq.s32.totalorder %s36, 1
      %p148 = por %p146, %p147
      %p150 = scmp.ne.s32.totalorder %s135, %s149
      %p151 = scmp.eq.s32.totalorder %s36, 0
      %p152 = por %p150, %p151
      %s154 = sadd.s32 %s153, 1
      %p157 = scmp.eq.s32.totalorder %s30, 1
      %p158 = scmp.ne.s32.totalorder %s153, %s155
      %p159 = scmp.eq.s32.totalorder %s30, 0
      %p160 = por %p158, %p159
      %p161 = scmp.ne.s32.totalorder %s153, %s155
      %p162 = scmp.eq.s32.totalorder %s35, 1
      %p163 = por %p161, %p162
      %p164 = scmp.ne.s32.totalorder %s155, %s156
      %p165 = scmp.eq.s32.totalorder %s35, 0
      %p166 = por %p164, %p165
      %p167 = scmp.ne.s32.totalorder %s155, %s156
      %p168 = scmp.eq.s32.totalorder %s36, 1
      %p169 = por %p167, %p168
      %p171 = scmp.ne.s32.totalorder %s156, %s170
      %p172 = scmp.eq.s32.totalorder %s36, 0
      %p173 = por %p171, %p172
      %s175 = sadd.s32 %s174, 1
      %p178 = scmp.eq.s32.totalorder %s30, 1
      %p179 = scmp.ne.s32.totalorder %s174, %s176
      %p180 = scmp.eq.s32.totalorder %s30, 0
      %p181 = por %p179, %p180
      %p182 = scmp.ne.s32.totalorder %s174, %s176
      %p183 = scmp.eq.s32.totalorder %s35, 1
      %p184 = por %p182, %p183
      %p185 = scmp.ne.s32.totalorder %s176, %s177
      %p186 = scmp.eq.s32.totalorder %s35, 0
      %p187 = por %p185, %p186
      %p188 = scmp.ne.s32.totalorder %s176, %s177
      %p189 = scmp.eq.s32.totalorder %s36, 1
      %p190 = por %p188, %p189
      %p192 = scmp.ne.s32.totalorder %s177, %s191
      %p193 = scmp.eq.s32.totalorder %s36, 0
      %p194 = por %p192, %p193
      %s196 = sadd.s32 %s195, 1
      %p199 = scmp.eq.s32.totalorder %s30, 1
      %p200 = scmp.ne.s32.totalorder %s195, %s197
      %p201 = scmp.eq.s32.totalorder %s30, 0
      %p202 = por %p200, %p201
      %p203 = scmp.ne.s32.totalorder %s195, %s197
      %p204 = scmp.eq.s32.totalorder %s35, 1
      %p205 = por %p203, %p204
      %p206 = scmp.ne.s32.totalorder %s197, %s198
      %p207 = scmp.eq.s32.totalorder %s35, 0
      %p208 = por %p206, %p207
      %p209 = scmp.ne.s32.totalorder %s197, %s198
      %p210 = scmp.eq.s32.totalorder %s36, 1
      %p211 = por %p209, %p210
      %p213 = scmp.ne.s32.totalorder %s198, %s212
      %p214 = scmp.eq.s32.totalorder %s36, 0
      %p215 = por %p213, %p214
      %s217 = sadd.s32 %s216, 1
      %p220 = scmp.eq.s32.totalorder %s30, 1
      %p221 = scmp.ne.s32.totalorder %s216, %s218
      %p222 = scmp.eq.s32.totalorder %s30, 0
      %p223 = por %p221, %p222
      %p224 = scmp.ne.s32.totalorder %s216, %s218
      %p225 = scmp.eq.s32.totalorder %s35, 1
      %p226 = por %p224, %p225
      %p227 = scmp.ne.s32.totalorder %s218, %s219
      %p228 = scmp.eq.s32.totalorder %s35, 0
      %p229 = por %p227, %p228
      %p230 = scmp.ne.s32.totalorder %s218, %s219
      %p231 = scmp.eq.s32.totalorder %s36, 1
      %p232 = por %p230, %p231
      %p234 = scmp.ne.s32.totalorder %s219, %s233
      %p235 = scmp.eq.s32.totalorder %s36, 0
      %p236 = por %p234, %p235
      %s238 = sadd.s32 %s237, 1
      %p241 = scmp.eq.s32.totalorder %s30, 1
      %p242 = scmp.ne.s32.totalorder %s237, %s239
      %p243 = scmp.eq.s32.totalorder %s30, 0
      %p244 = por %p242, %p243
      %p245 = scmp.ne.s32.totalorder %s237, %s239
      %p246 = scmp.eq.s32.totalorder %s35, 1
      %p247 = por %p245, %p246
      %p248 = scmp.ne.s32.totalorder %s239, %s240
      %p249 = scmp.eq.s32.totalorder %s35, 0
      %p250 = por %p248, %p249
      %p251 = scmp.ne.s32.totalorder %s239, %s240
      %p252 = scmp.eq.s32.totalorder %s36, 1
      %p253 = por %p251, %p252
      %p255 = scmp.ne.s32.totalorder %s240, %s254
      %p256 = scmp.eq.s32.totalorder %s36, 0
      %p257 = por %p255, %p256
      %s259 = sadd.s32 %s258, 1
      %p262 = scmp.eq.s32.totalorder %s30, 1
      %p263 = scmp.ne.s32.totalorder %s258, %s260
      %p264 = scmp.eq.s32.totalorder %s30, 0
      %p265 = por %p263, %p264
      %p266 = scmp.ne.s32.totalorder %s258, %s260
      %p267 = scmp.eq.s32.totalorder %s35, 1
      %p268 = por %p266, %p267
      %p269 = scmp.ne.s32.totalorder %s260, %s261
      %p270 = scmp.eq.s32.totalorder %s35, 0
      %p271 = por %p269, %p270
      %p272 = scmp.ne.s32.totalorder %s260, %s261
      %p273 = scmp.eq.s32.totalorder %s36, 1
      %p274 = por %p272, %p273
      %p276 = scmp.ne.s32.totalorder %s261, %s275
      %p277 = scmp.eq.s32.totalorder %s36, 0
      %p278 = por %p276, %p277
      %s279 = ssub.s32 %s30, %s37
      %p280 = scmp.eq.s32.totalorder %s279, 0
      %s282 = sadd.s32 %s281, 1
      %s283 = scalar_select %p280, %s281, %s282
      %p286 = pneg %p280
      %p287 = scmp.eq.s32.totalorder %s30, 1
      %p288 = por %p286, %p287
      %p289 = scmp.ne.s32.totalorder %s281, %s284
      %p290 = scmp.eq.s32.totalorder %s30, 0
      %p291 = por %p289, %p290
      %p292 = scmp.ne.s32.totalorder %s281, %s284
      %p293 = scmp.eq.s32.totalorder %s35, 1
      %p294 = por %p292, %p293
      %p295 = scmp.ne.s32.totalorder %s284, %s285
      %p296 = scmp.eq.s32.totalorder %s35, 0
      %p297 = por %p295, %p296
      %p298 = scmp.ne.s32.totalorder %s284, %s285
      %p299 = scmp.eq.s32.totalorder %s36, 1
      %p300 = por %p298, %p299
      %p302 = scmp.ne.s32.totalorder %s285, %s301
      %p303 = scmp.eq.s32.totalorder %s36, 0
      %p304 = por %p302, %p303
      %p305 = scmp.le.s32.totalorder 1, %s30
      %p306 = scmp.lt.s32.totalorder %s30, 3
      %p307 = pnand %p305, %p306
      %p308 = pneg %p307
      // Predicated region
      $region9: #{tpu_custom_call.1} parent=5 // pred_check
        _
      $region10: #{tpu_custom_call.1} parent=5 // pred_check_branch
        %310 = sbr.rel (%p307) target = $region12
      $region11: #{tpu_custom_call.1} parent=5 // pred_region
        %s311 = ssub.s32 %s30, 1
        // Predicated region
        $region13: #{tpu_custom_call.1} parent=11 // pred_check
          %p312 = pneg %p103
        $region14: #{tpu_custom_call.1} parent=11 // pred_check_branch
          %314 = sbr.rel (%p312) target = $region16
        $region15: #{tpu_custom_call.1} parent=11 // pred_region
          %s316 = ssub.s32 512, 512
          %317 = vsyncadd [#allocation11], %s316
          %s318 = sshll.u32 [#allocation12], 4
          %s319 = int_to_ptr.vmem [resolvable:$true] %s318
          %324 = dma.hbm_to_vmem [thread:$0]  %s2, 512, %s319, [#allocation11], 128, 128, 8
        $region16: #{tpu_custom_call.1} parent=11 // pred_fallthru
          _
        // Predicated region
        $region17: #{tpu_custom_call.1} parent=11 // pred_check
          %p325 = pneg %p124
        $region18: #{tpu_custom_call.1} parent=11 // pred_check_branch
          %327 = sbr.rel (%p325) target = $region20
        $region19: #{tpu_custom_call.1} parent=11 // pred_region
          %s329 = ssub.s32 1024, 1024
          %330 = vsyncadd [#allocation14], %s329
          %s331 = sshll.u32 [#allocation13], 4
          %s332 = int_to_ptr.vmem [resolvable:$true] %s331
          %337 = dma.hbm_to_vmem [thread:$0]  %s3, 1024, %s332, [#allocation14], 128, 128, 8
        $region20: #{tpu_custom_call.1} parent=11 // pred_fallthru
          _
        // Predicated region
        $region21: #{tpu_custom_call.1} parent=11 // pred_check
          %p338 = pneg %p145
        $region22: #{tpu_custom_call.1} parent=11 // pred_check_branch
          %340 = sbr.rel (%p338) target = $region24
        $region23: #{tpu_custom_call.1} parent=11 // pred_region
          %s342 = ssub.s32 32, 32
          %343 = vsyncadd [#allocation14], %s342
          %s345 = sshll.u32 [#allocation15], 4
          %s346 = int_to_ptr.vmem [resolvable:$true] %s345
          %348 = dma.hbm_to_vmem [thread:$0]  %s4, 32, %s346, [#allocation14]
        $region24: #{tpu_custom_call.1} parent=11 // pred_fallthru
          _
        // Predicated region
        $region25: #{tpu_custom_call.1} parent=11 // pred_check
          %p349 = pneg %p166
        $region26: #{tpu_custom_call.1} parent=11 // pred_check_branch
          %351 = sbr.rel (%p349) target = $region28
        $region27: #{tpu_custom_call.1} parent=11 // pred_region
          %s353 = ssub.s32 256, 256
          %354 = vsyncadd [#allocation17], %s353
          %s355 = sshll.u32 [#allocation16], 4
          %s356 = int_to_ptr.vmem [resolvable:$true] %s355
          %361 = dma.hbm_to_vmem [thread:$0]  %s5, 256, %s356, [#allocation17], 64, 64, 4
        $region28: #{tpu_custom_call.1} parent=11 // pred_fallthru
          _
        // Predicated region
        $region29: #{tpu_custom_call.1} parent=11 // pred_check
          %p362 = pneg %p187
        $region30: #{tpu_custom_call.1} parent=11 // pred_check_branch
          %364 = sbr.rel (%p362) target = $region32
        $region31: #{tpu_custom_call.1} parent=11 // pred_region
          %s366 = ssub.s32 256, 256
          %367 = vsyncadd [#allocation17], %s366
          %s368 = sshll.u32 [#allocation18], 4
          %s369 = int_to_ptr.vmem [resolvable:$true] %s368
          %374 = dma.hbm_to_vmem [thread:$0]  %s6, 256, %s369, [#allocation17], 64, 64, 4
        $region32: #{tpu_custom_call.1} parent=11 // pred_fallthru
          _
        // Predicated region
        $region33: #{tpu_custom_call.1} parent=11 // pred_check
          %p375 = pneg %p208
        $region34: #{tpu_custom_call.1} parent=11 // pred_check_branch
          %377 = sbr.rel (%p375) target = $region36
        $region35: #{tpu_custom_call.1} parent=11 // pred_region
          %s379 = ssub.s32 16, 16
          %380 = vsyncadd [#allocation20], %s379
          %s382 = sshll.u32 [#allocation19], 4
          %s383 = int_to_ptr.vmem [resolvable:$true] %s382
          %385 = dma.hbm_to_vmem [thread:$0]  %s7, 16, %s383, [#allocation20]
        $region36: #{tpu_custom_call.1} parent=11 // pred_fallthru
          _
        // Predicated region
        $region37: #{tpu_custom_call.1} parent=11 // pred_check
          %p386 = pneg %p229
        $region38: #{tpu_custom_call.1} parent=11 // pred_check_branch
          %388 = sbr.rel (%p386) target = $region40
        $region39: #{tpu_custom_call.1} parent=11 // pred_region
          %s390 = ssub.s32 128, 128
          %391 = vsyncadd [#allocation20], %s390
          %s393 = sshll.u32 [#allocation21], 4
          %s394 = int_to_ptr.vmem [resolvable:$true] %s393
          %396 = dma.hbm_to_vmem [thread:$0]  %s8, 128, %s394, [#allocation20]
        $region40: #{tpu_custom_call.1} parent=11 // pred_fallthru
          _
        // Predicated region
        $region41: #{tpu_custom_call.1} parent=11 // pred_check
          %p397 = pneg %p250
        $region42: #{tpu_custom_call.1} parent=11 // pred_check_branch
          %399 = sbr.rel (%p397) target = $region44
        $region43: #{tpu_custom_call.1} parent=11 // pred_region
          %s401 = ssub.s32 16, 16
          %402 = vsyncadd [#allocation23], %s401
          %s404 = sshll.u32 [#allocation22], 4
          %s405 = int_to_ptr.vmem [resolvable:$true] %s404
          %407 = dma.hbm_to_vmem [thread:$0]  %s9, 16, %s405, [#allocation23]
        $region44: #{tpu_custom_call.1} parent=11 // pred_fallthru
          _
        // Predicated region
        $region45: #{tpu_custom_call.1} parent=11 // pred_check
          %p408 = pneg %p271
        $region46: #{tpu_custom_call.1} parent=11 // pred_check_branch
          %410 = sbr.rel (%p408) target = $region48
        $region47: #{tpu_custom_call.1} parent=11 // pred_region
          %s412 = ssub.s32 16, 16
          %413 = vsyncadd [#allocation23], %s412
          %s415 = sshll.u32 [#allocation24], 4
          %s416 = int_to_ptr.vmem [resolvable:$true] %s415
          %418 = dma.hbm_to_vmem [thread:$0]  %s10, 16, %s416, [#allocation23]
        $region48: #{tpu_custom_call.1} parent=11 // pred_fallthru
          _
      $region12: #{tpu_custom_call.1} parent=5 // pred_fallthru
        _
      %p419 = scmp.lt.s32.totalorder %s30, 2
      // Predicated region
      $region49: #{tpu_custom_call.1} parent=5 // pred_check
        %p420 = pneg %p419
      $region50: #{tpu_custom_call.1} parent=5 // pred_check_branch
        %422 = sbr.rel (%p420) target = $region52
      $region51: #{tpu_custom_call.1} parent=5 // pred_region
        // Predicated region
        $region53: #{tpu_custom_call.1} parent=51 // pred_check
          %p423 = pneg %p50
        $region54: #{tpu_custom_call.1} parent=51 // pred_check_branch
          %425 = sbr.rel (%p423) target = $region56
        $region55: #{tpu_custom_call.1} parent=51 // pred_region
          %s426 = sand.u32 %s40, 1
          %s427 = scalar_lea.sflag [#allocation8], %s426
          %s428 = sand.u32 %s40, 1
          %s429 = smul.addr %s428, 32
          %s430 = scalar_lea.vmem [#allocation7], %s429
          %s432 = ssub.s32 512, 512
          %433 = vsyncadd %s427, %s432
          %s434 = smul.addr %s30, 64
          %s435 = scalar_lea.hbm %s0, %s434
          %s436 = sshll.u32 %s430, 4
          %s437 = int_to_ptr.vmem [resolvable:$true] %s436
          %442 = dma.hbm_to_vmem [thread:$0]  %s435, 512, %s437, %s427, 128, 64, 4
        $region56: #{tpu_custom_call.1} parent=51 // pred_fallthru
          _
        // Predicated region
        $region57: #{tpu_custom_call.1} parent=51 // pred_check
          %p443 = pneg %p76
        $region58: #{tpu_custom_call.1} parent=51 // pred_check_branch
          %445 = sbr.rel (%p443) target = $region60
        $region59: #{tpu_custom_call.1} parent=51 // pred_region
          %s446 = sand.u32 %s30, 1
          %s447 = scalar_lea.sflag [#allocation11], %s446
          %s448 = sand.u32 %s66, 1
          %s449 = smul.addr %s448, 8
          %s450 = scalar_lea.vmem [#allocation10], %s449
          %s452 = ssub.s32 128, 128
          %453 = vsyncadd %s447, %s452
          %s454 = smul.addr %s30, 128
          %s455 = scalar_lea.hbm %s1, %s454
          %s457 = sshll.u32 %s450, 4
          %s458 = int_to_ptr.vmem [resolvable:$true] %s457
          %460 = dma.hbm_to_vmem [thread:$0]  %s455, 128, %s458, %s447
        $region60: #{tpu_custom_call.1} parent=51 // pred_fallthru
          _
      $region52: #{tpu_custom_call.1} parent=5 // pred_fallthru
        _
      %p461 = scmp.le.s32.totalorder 1, %s30
      %p462 = scmp.lt.s32.totalorder %s30, 3
      %p463 = pnand %p461, %p462
      %p464 = pneg %p463
      // Predicated region
      $region61: #{tpu_custom_call.1} parent=5 // pred_check
        _
      $region62: #{tpu_custom_call.1} parent=5 // pred_check_branch
        %466 = sbr.rel (%p463) target = $region64
      $region63: #{tpu_custom_call.1} parent=5 // pred_region
        %s467 = ssub.s32 %s30, 1
        %s468 = sand.u32 %s43, 1
        %s469 = scalar_lea.sflag [#allocation8], %s468
        %s470 = sand.u32 %s43, 1
        %s471 = smul.addr %s470, 32
        %s472 = scalar_lea.vmem [#allocation7], %s471
        // Predicated region
        $region65: #{tpu_custom_call.1} parent=63 // pred_check
          %p473 = pneg %p56
        $region66: #{tpu_custom_call.1} parent=63 // pred_check_branch
          %475 = sbr.rel (%p473) target = $region68
        $region67: #{tpu_custom_call.1} parent=63 // pred_region
          %476 = dma.done %s469, 512
        $region68: #{tpu_custom_call.1} parent=63 // pred_fallthru
          _
        %s477 = sand.u32 %s35, 1
        %s478 = scalar_lea.sflag [#allocation11], %s477
        %s479 = sand.u32 %s69, 1
        %s480 = smul.addr %s479, 8
        %s481 = scalar_lea.vmem [#allocation10], %s480
        // Predicated region
        $region69: #{tpu_custom_call.1} parent=63 // pred_check
          %p482 = pneg %p82
        $region70: #{tpu_custom_call.1} parent=63 // pred_check_branch
          %484 = sbr.rel (%p482) target = $region72
        $region71: #{tpu_custom_call.1} parent=63 // pred_region
          %485 = dma.done %s478, 128
        $region72: #{tpu_custom_call.1} parent=63 // pred_fallthru
          _
        // Predicated region
        $region73: #{tpu_custom_call.1} parent=63 // pred_check
          %p486 = pneg %p103
        $region74: #{tpu_custom_call.1} parent=63 // pred_check_branch
          %488 = sbr.rel (%p486) target = $region76
        $region75: #{tpu_custom_call.1} parent=63 // pred_region
          %489 = dma.done [#allocation11], 512
        $region76: #{tpu_custom_call.1} parent=63 // pred_fallthru
          _
        // Predicated region
        $region77: #{tpu_custom_call.1} parent=63 // pred_check
          %p490 = pneg %p124
        $region78: #{tpu_custom_call.1} parent=63 // pred_check_branch
          %492 = sbr.rel (%p490) target = $region80
        $region79: #{tpu_custom_call.1} parent=63 // pred_region
          %493 = dma.done [#allocation14], 1024
        $region80: #{tpu_custom_call.1} parent=63 // pred_fallthru
          _
        // Predicated region
        $region81: #{tpu_custom_call.1} parent=63 // pred_check
          %p494 = pneg %p145
        $region82: #{tpu_custom_call.1} parent=63 // pred_check_branch
          %496 = sbr.rel (%p494) target = $region84
        $region83: #{tpu_custom_call.1} parent=63 // pred_region
          %497 = dma.done [#allocation14], 32
        $region84: #{tpu_custom_call.1} parent=63 // pred_fallthru
          _
        // Predicated region
        $region85: #{tpu_custom_call.1} parent=63 // pred_check
          %p498 = pneg %p166
        $region86: #{tpu_custom_call.1} parent=63 // pred_check_branch
          %500 = sbr.rel (%p498) target = $region88
        $region87: #{tpu_custom_call.1} parent=63 // pred_region
          %501 = dma.done [#allocation17], 256
        $region88: #{tpu_custom_call.1} parent=63 // pred_fallthru
          _
        // Predicated region
        $region89: #{tpu_custom_call.1} parent=63 // pred_check
          %p502 = pneg %p187
        $region90: #{tpu_custom_call.1} parent=63 // pred_check_branch
          %504 = sbr.rel (%p502) target = $region92
        $region91: #{tpu_custom_call.1} parent=63 // pred_region
          %505 = dma.done [#allocation17], 256
        $region92: #{tpu_custom_call.1} parent=63 // pred_fallthru
          _
        // Predicated region
        $region93: #{tpu_custom_call.1} parent=63 // pred_check
          %p506 = pneg %p208
        $region94: #{tpu_custom_call.1} parent=63 // pred_check_branch
          %508 = sbr.rel (%p506) target = $region96
        $region95: #{tpu_custom_call.1} parent=63 // pred_region
          %509 = dma.done [#allocation20], 16
        $region96: #{tpu_custom_call.1} parent=63 // pred_fallthru
          _
        // Predicated region
        $region97: #{tpu_custom_call.1} parent=63 // pred_check
          %p510 = pneg %p229
        $region98: #{tpu_custom_call.1} parent=63 // pred_check_branch
          %512 = sbr.rel (%p510) target = $region100
        $region99: #{tpu_custom_call.1} parent=63 // pred_region
          %513 = dma.done [#allocation20], 128
        $region100: #{tpu_custom_call.1} parent=63 // pred_fallthru
          _
        // Predicated region
        $region101: #{tpu_custom_call.1} parent=63 // pred_check
          %p514 = pneg %p250
        $region102: #{tpu_custom_call.1} parent=63 // pred_check_branch
          %516 = sbr.rel (%p514) target = $region104
        $region103: #{tpu_custom_call.1} parent=63 // pred_region
          %517 = dma.done [#allocation23], 16
        $region104: #{tpu_custom_call.1} parent=63 // pred_fallthru
          _
        // Predicated region
        $region105: #{tpu_custom_call.1} parent=63 // pred_check
          %p518 = pneg %p271
        $region106: #{tpu_custom_call.1} parent=63 // pred_check_branch
          %520 = sbr.rel (%p518) target = $region108
        $region107: #{tpu_custom_call.1} parent=63 // pred_region
          %521 = dma.done [#allocation23], 16
        $region108: #{tpu_custom_call.1} parent=63 // pred_fallthru
          _
        %s522 = sand.u32 %s43, 1
        %s523 = scalar_lea.sflag [#allocation8], %s522
        %s524 = sand.u32 %s43, 1
        %s525 = smul.addr %s524, 32
        %s526 = scalar_lea.vmem [#allocation7], %s525
        %p527 = pneg %p56
        %p528 = pneg %p53
        %s529 = sand.u32 %s35, 1
        %s530 = scalar_lea.sflag [#allocation11], %s529
        %s531 = sand.u32 %s69, 1
        %s532 = smul.addr %s531, 8
        %s533 = scalar_lea.vmem [#allocation10], %s532
        %p534 = pneg %p82
        %p535 = pneg %p79
        %p536 = pneg %p103
        %p537 = pneg %p100
        %p538 = pneg %p124
        %p539 = pneg %p121
        %p540 = pneg %p145
        %p541 = pneg %p142
        %p542 = pneg %p166
        %p543 = pneg %p163
        %p544 = pneg %p187
        %p545 = pneg %p184
        %p546 = pneg %p208
        %p547 = pneg %p205
        %p548 = pneg %p229
        %p549 = pneg %p226
        %p550 = pneg %p250
        %p551 = pneg %p247
        %p552 = pneg %p271
        %p553 = pneg %p268
        %p554 = pneg %p297
        %p555 = pneg %p294
        %s556 = sand.u32 %s284, 1
        %s557 = scalar_lea.sflag [#allocation9], %s556
        %s558 = sand.u32 %s284, 1
        %s559 = smul.addr %s558, 8
        %s560 = scalar_lea.vmem [#allocation25], %s559
        %v562 = vld [vmem:[%s472] sm:$0xf]
        %v563 = vld [vmem:[%s472 + $0x4] sm:$0xf]
        %v564 = vld [vmem:[%s472 + $0x8] sm:$0xf]
        %v565 = vld [vmem:[%s472 + $0xc] sm:$0xf]
        %v566 = vld [vmem:[%s472 + $0x10] sm:$0xf]
        %v567 = vld [vmem:[%s472 + $0x14] sm:$0xf]
        %v568 = vld [vmem:[%s472 + $0x18] sm:$0xf]
        %v569 = vld [vmem:[%s472 + $0x1c] sm:$0xf]
        %v570 = vld [vmem:[#allocation12] sm:$0xff]
        %v571 = vld [vmem:[#allocation12 + $0x8] sm:$0xff]
        %v572 = vld [vmem:[#allocation12 + $0x10] sm:$0xff]
        %v573 = vld [vmem:[#allocation12 + $0x18] sm:$0xff]
        %v574 = vld [vmem:[#allocation15] sm:$0x3]
        %v576 = vlaneseq
        %v577 = vshrl.u32 %v576, 7
        %v578 = vsub.s32 0, %v577
        %v579 = vrot.slane %v574, %v578
        %v580 = vlaneseq
        %v581 = vshrl.u32 %v580, 7
        %v582 = vsub.s32 1, %v581
        %v583 = vrot.slane %v574, %v582
        %v594 = vunpack.c.l.b16 %v562
        %v595 = vunpack.c.l.b16 %v563
        %v596 = vunpack.c.l.b16 %v564
        %v597 = vunpack.c.l.b16 %v565
        %v598 = vunpack.c.l.b16 %v566
        %v599 = vunpack.c.l.b16 %v567
        %v600 = vunpack.c.l.b16 %v568
        %v601 = vunpack.c.l.b16 %v569
        %v602 = vpack.c.b16 %v595, %v594
        %v603 = vpack.c.b16 %v597, %v596
        %v604 = vpack.c.b16 %v599, %v598
        %v605 = vpack.c.b16 %v601, %v600
        %v610 = vunpack.c.l.b16 %v570
        %v611 = vunpack.c.h.b16 %v570
        %v612 = vunpack.c.l.b16 %v571
        %v613 = vunpack.c.h.b16 %v571
        %v614 = vunpack.c.l.b16 %v572
        %v615 = vunpack.c.h.b16 %v572
        %v616 = vunpack.c.l.b16 %v573
        %v617 = vunpack.c.h.b16 %v573
        %v618 = vpack.c.b16 %v612, %v610
        %v619 = vpack.c.b16 %v613, %v611
        %v620 = vpack.c.b16 %v616, %v614
        %v621 = vpack.c.b16 %v617, %v615
        %vm626 = vcmask 261120
        %v628 = vsel %vm626, %v602, 0
        %v631 = vsel %vm626, %v603, 0
        %v634 = vsel %vm626, %v604, 0
        %v637 = vsel %vm626, %v605, 0
        %639 = vmatprep.subr.bf16.mxu0 %v619
        %640 = vmatpush1.bf16.msra.mxu0 %v618
        %641 = vmatprep.subr.bf16.mxu0 %v621
        %642 = vmatpush1.bf16.msra.mxu0 %v620
        %643 = vmatprep.subr.bf16.mxu0 0
        %644 = vmatpush1.bf16.msra.mxu0 0
        %645 = vmatprep.subr.bf16.mxu0 0
        %646 = vmatpush1.bf16.msra.mxu0 0
        %647 = vmatprep.subr.bf16.mxu0 0
        %648 = vmatpush1.bf16.msra.mxu0 0
        %649 = vmatprep.subr.bf16.mxu0 0
        %650 = vmatpush1.bf16.msra.mxu0 0
        %651 = vmatprep.subr.bf16.mxu0 0
        %652 = vmatpush1.bf16.msra.mxu0 0
        %653 = vmatprep.subr.bf16.mxu0 0
        %654 = vmatpush1.bf16.msra.mxu0 0
        %655 = vmatprep.subr.bf16.mxu0 0
        %656 = vmatpush1.bf16.msra.mxu0 0
        %657 = vmatprep.subr.bf16.mxu0 0
        %658 = vmatpush1.bf16.msra.mxu0 0
        %659 = vmatprep.subr.bf16.mxu0 0
        %660 = vmatpush1.bf16.msra.mxu0 0
        %661 = vmatprep.subr.bf16.mxu0 0
        %662 = vmatpush1.bf16.msra.mxu0 0
        %663 = vmatprep.subr.bf16.mxu0 0
        %664 = vmatpush1.bf16.msra.mxu0 0
        %665 = vmatprep.subr.bf16.mxu0 0
        %666 = vmatpush1.bf16.msra.mxu0 0
        %667 = vmatprep.subr.bf16.mxu0 0
        %668 = vmatpush1.bf16.msra.mxu0 0
        %669 = vmatprep.subr.bf16.mxu0 0
        %670 = vmatpush1.bf16.msra.mxu0 0
        %671 = vmatprep.mubr.bf16.mxu0 0
        %672 = vmatmul.mubr.bf16.gmra.mrb[0].mxu0 %v628
        %v673 = vpop.f32.mrb[0].mxu0
        %v674 = vadd.f32 %v579, %v673
        %v675 = vpop.f32.mrb[0].mxu0
        %v676 = vadd.f32 %v583, %v675
        %v677 = vpop.f32.mrb[0].mxu0
        %v678 = vadd.f32 %v579, %v677
        %v679 = vpop.f32.mrb[0].mxu0
        %v680 = vadd.f32 %v583, %v679
        %681 = vmatprep.mubr.bf16.mxu0 0
        %682 = vmatmul.mubr.bf16.gmra.mrb[0].mxu0 %v631
        %v683 = vpop.f32.mrb[0].mxu0
        %v684 = vadd.f32 %v579, %v683
        %v685 = vpop.f32.mrb[0].mxu0
        %v686 = vadd.f32 %v583, %v685
        %v687 = vpop.f32.mrb[0].mxu0
        %v688 = vadd.f32 %v579, %v687
        %v689 = vpop.f32.mrb[0].mxu0
        %v690 = vadd.f32 %v583, %v689
        %691 = vmatprep.mubr.bf16.mxu0 0
        %692 = vmatmul.mubr.bf16.gmra.mrb[0].mxu0 %v634
        %v693 = vpop.f32.mrb[0].mxu0
        %v694 = vadd.f32 %v579, %v693
        %v695 = vpop.f32.mrb[0].mxu0
        %v696 = vadd.f32 %v583, %v695
        %v697 = vpop.f32.mrb[0].mxu0
        %v698 = vadd.f32 %v579, %v697
        %v699 = vpop.f32.mrb[0].mxu0
        %v700 = vadd.f32 %v583, %v699
        %701 = vmatprep.mubr.bf16.mxu0 0
        %702 = vmatmul.mubr.bf16.gmra.mrb[0].mxu0 %v637
        %v703 = vpop.f32.mrb[0].mxu0
        %v704 = vadd.f32 %v579, %v703
        %v705 = vpop.f32.mrb[0].mxu0
        %v706 = vadd.f32 %v583, %v705
        %v707 = vpop.f32.mrb[0].mxu0
        %v708 = vadd.f32 %v579, %v707
        %v709 = vpop.f32.mrb[0].mxu0
        %v710 = vadd.f32 %v583, %v709
        %711 = vdwg.mxu0
        %712 = vst [vmem:[#allocation2] sm:$0xff] %v674
        %713 = vst [vmem:[#allocation2 + $0x8] sm:$0xff] %v676
        %714 = vst [vmem:[#allocation2 + $0x10] sm:$0xff] %v678
        %715 = vst [vmem:[#allocation2 + $0x18] sm:$0xff] %v680
        %716 = vst [vmem:[#allocation2 + $0x20] sm:$0xff] %v684
        %717 = vst [vmem:[#allocation2 + $0x28] sm:$0xff] %v686
        %718 = vst [vmem:[#allocation2 + $0x30] sm:$0xff] %v688
        %719 = vst [vmem:[#allocation2 + $0x38] sm:$0xff] %v690
        %720 = vst [vmem:[#allocation2 + $0x40] sm:$0xff] %v694
        %721 = vst [vmem:[#allocation2 + $0x48] sm:$0xff] %v696
        %722 = vst [vmem:[#allocation2 + $0x50] sm:$0xff] %v698
        %723 = vst [vmem:[#allocation2 + $0x58] sm:$0xff] %v700
        %724 = vst [vmem:[#allocation2 + $0x60] sm:$0xff] %v704
        %725 = vst [vmem:[#allocation2 + $0x68] sm:$0xff] %v706
        %726 = vst [vmem:[#allocation2 + $0x70] sm:$0xff] %v708
        %727 = vst [vmem:[#allocation2 + $0x78] sm:$0xff] %v710
        %v728 = vld [vmem:[#allocation13] sm:$0xff]
        %v729 = vld [vmem:[#allocation13 + $0x8] sm:$0xff]
        %v730 = vld [vmem:[#allocation13 + $0x10] sm:$0xff]
        %v731 = vld [vmem:[#allocation13 + $0x18] sm:$0xff]
        %v732 = vld [vmem:[#allocation13 + $0x20] sm:$0xff]
        %v733 = vld [vmem:[#allocation13 + $0x28] sm:$0xff]
        %v734 = vld [vmem:[#allocation13 + $0x30] sm:$0xff]
        %v735 = vld [vmem:[#allocation13 + $0x38] sm:$0xff]
        %v736 = vlaneseq
        %v737 = vand.u32 %v736, 127
        %v738 = vadd.s32 %v737, 128
        %vm739 = vcmp.lt.s32.totalorder %v737, 0
        %v740 = vsub.s32 0, %v737
        %v741 = vsel %vm739, %v740, %v737
        %v742 = vshrl.u32 %v741, 6
        %v743 = vand.u32 %v741, 63
        %v744 = vsub.s32 0, %v743
        %v745 = vsel %vm739, %v744, %v743
        %vm746 = vcmp.lt.s32.totalorder %v738, 0
        %v747 = vsub.s32 0, %v738
        %v748 = vsel %vm746, %v747, %v738
        %v749 = vshrl.u32 %v748, 6
        %v750 = vand.u32 %v748, 63
        %v751 = vsub.s32 0, %v750
        %v752 = vsel %vm746, %v751, %v750
        %vm753 = vcmp.ne.s32.totalorder %v745, 0
        %vm754 = vcmp.ne.s32.totalorder %v752, 0
        %vm755 = vcmp.lt.s32.totalorder %v745, 0
        %vm756 = vcmp.lt.s32.totalorder %v752, 0
        %vm757 = vmand %vm755, %vm753
        %vm758 = vmand %vm756, %vm754
        %v759 = vadd.s32 %v745, 64
        %v760 = vadd.s32 %v752, 64
        %v761 = vsel %vm757, %v759, %v745
        %v762 = vsel %vm758, %v760, %v752
        %vm763 = vcmp.lt.s32.totalorder %v761, 32
        %vm764 = vcmp.lt.s32.totalorder %v762, 32
        %vm765 = vcmp.ge.s32.totalorder %v737, 128
        %vm766 = vcmp.ge.s32.totalorder %v738, 128
        %vm767 = vcmp.lt.s32.totalorder %v737, 192
        %vm768 = vcmp.lt.s32.totalorder %v738, 192
        %vm769 = vmand %vm765, %vm767
        %vm770 = vmand %vm766, %vm768
        %v771 = vld [vmem:[#allocation2] sm:$0xff]
        %v772 = vld [vmem:[#allocation2 + $0x8] sm:$0xff]
        %s773 = scalar_lea.vmem [#allocation2], 112
        %v774 = vld [vmem:[%s773] sm:$0xff]
        %v775 = vld [vmem:[%s773 + $0x8] sm:$0xff]
        %v776 = vsel %vm763, %v771, %v774
        %v777 = vsel %vm764, %v772, %v775
        %v786 = vunpack.c.l.b16 %v728
        %v787 = vunpack.c.h.b16 %v728
        %v788 = vunpack.c.l.b16 %v729
        %v789 = vunpack.c.h.b16 %v729
        %v790 = vunpack.c.l.b16 %v730
        %v791 = vunpack.c.h.b16 %v730
        %v792 = vunpack.c.l.b16 %v731
        %v793 = vunpack.c.h.b16 %v731
        %v794 = vunpack.c.l.b16 %v732
        %v795 = vunpack.c.h.b16 %v732
        %v796 = vunpack.c.l.b16 %v733
        %v797 = vunpack.c.h.b16 %v733
        %v798 = vunpack.c.l.b16 %v734
        %v799 = vunpack.c.h.b16 %v734
        %v800 = vunpack.c.l.b16 %v735
        %v801 = vunpack.c.h.b16 %v735
        %v802 = vpack.c.b16 %v788, %v786
        %v803 = vpack.c.b16 %v789, %v787
        %v804 = vpack.c.b16 %v792, %v790
        %v805 = vpack.c.b16 %v793, %v791
        %v806 = vpack.c.b16 %v796, %v794
        %v807 = vpack.c.b16 %v797, %v795
        %v808 = vpack.c.b16 %v800, %v798
        %v809 = vpack.c.b16 %v801, %v799
        %vm818 = vcmask 523264
        %v820 = vsel %vm818, 0, 0
        %822 = vmatprep.subr.bf16.mxu0 %v803
        %823 = vmatpush1.bf16.msra.mxu0 %v802
        %824 = vmatprep.subr.bf16.mxu0 %v805
        %825 = vmatpush1.bf16.msra.mxu0 %v804
        %826 = vmatprep.subr.bf16.mxu0 %v807
        %827 = vmatpush1.bf16.msra.mxu0 %v806
        %828 = vmatprep.subr.bf16.mxu0 %v809
        %829 = vmatpush1.bf16.msra.mxu0 %v808
        %830 = vmatprep.subr.bf16.mxu0 0
        %831 = vmatpush1.bf16.msra.mxu0 0
        %832 = vmatprep.subr.bf16.mxu0 0
        %833 = vmatpush1.bf16.msra.mxu0 0
        %834 = vmatprep.subr.bf16.mxu0 0
        %835 = vmatpush1.bf16.msra.mxu0 0
        %836 = vmatprep.subr.bf16.mxu0 0
        %837 = vmatpush1.bf16.msra.mxu0 0
        %838 = vmatprep.subr.bf16.mxu0 0
        %839 = vmatpush1.bf16.msra.mxu0 0
        %840 = vmatprep.subr.bf16.mxu0 0
        %841 = vmatpush1.bf16.msra.mxu0 0
        %842 = vmatprep.subr.bf16.mxu0 0
        %843 = vmatpush1.bf16.msra.mxu0 0
        %844 = vmatprep.subr.bf16.mxu0 0
        %845 = vmatpush1.bf16.msra.mxu0 0
        %846 = vmatprep.subr.bf16.mxu0 0
        %847 = vmatpush1.bf16.msra.mxu0 0
        %848 = vmatprep.subr.bf16.mxu0 0
        %849 = vmatpush1.bf16.msra.mxu0 0
        %850 = vmatprep.subr.bf16.mxu0 0
        %851 = vmatpush1.bf16.msra.mxu0 0
        %852 = vmatprep.subr.bf16.mxu0 0
        %853 = vmatpush1.bf16.msra.mxu0 0
        %854 = vmatprep.mubr.bf16.mxu0 0
        %855 = vmatmul.mubr.bf16.gmra.mrb[0].mxu0 %v820
        %v856 = vpop.f32.mrb[0].mxu0
        %v857 = vadd.f32 0.0, %v856
        %v858 = vpop.f32.mrb[0].mxu0
        %v859 = vadd.f32 0.0, %v858
        %v860 = vpop.f32.mrb[0].mxu0
        %v861 = vpop.f32.mrb[0].mxu0
        %862 = vdwg.mxu0
        %v863 = vadd.f32 %v776, %v857
        %v864 = vadd.f32 %v777, %v859
        %v865 = vtanh.pop %v863
        %v866 = vtanh.pop %v864
        %v867 = vxor.u32 %v863, 2147483648
        %v868 = vxor.u32 %v864, 2147483648
        %v869 = vmul.f32 %v867, 1.442695
        %v870 = vpow.pop %v869
        %v871 = vmul.f32 %v868, 1.442695
        %v872 = vpow.pop %v871
        %v873 = vadd.f32 %v870, 1.0
        %v874 = vadd.f32 %v872, 1.0
        %v875 = vrcp.pop %v873
        %v876 = vmul.f32 1.0, %v875
        %v877 = vrcp.pop %v874
        %v878 = vmul.f32 1.0, %v877
        %v879 = vsel %vm769, %v865, %v876
        %v880 = vsel %vm770, %v866, %v878
        %v881 = vmul.f32 %v879, 0.0
        %v882 = vmul.f32 %v879, %v880
        %884 = vrot.lane.b32.xlu0 %v882, 64
        %v885 = vpop.permute.xlu0 %884
        %v887 = vadd.f32 %v881, %v885
        %v888 = vtanh.pop %v887
        %v889 = vmul.f32 %v880, %v888
        %891 = vrot.lane.b32.xlu0 %v889, 64
        %v892 = vpop.permute.xlu0 %891
        %894 = vst.msk [vmem:[#allocation3] sm:$0xff] %vm626, %v892
        %895 = vrot.lane.b32.xlu0 %v889, 32
        %v896 = vpop.permute.xlu0 %895
        %s898 = scalar_lea.vmem [#allocation4], 56
        %899 = vst.msk [vmem:[%s898] sm:$0xff] %vm626, %v896
        %s900 = scalar_lea.vmem [#allocation2], 16
        %v901 = vld [vmem:[%s900] sm:$0xff]
        %v902 = vld [vmem:[%s900 + $0x8] sm:$0xff]
        %s903 = scalar_lea.vmem [#allocation2], 96
        %v904 = vld [vmem:[%s903] sm:$0xff]
        %v905 = vld [vmem:[%s903 + $0x8] sm:$0xff]
        %v906 = vsel %vm763, %v901, %v904
        %v907 = vsel %vm764, %v902, %v905
        %v908 = vpack.c.bf16 %v889, %v889
        %910 = vrot.lane.b32.xlu0 %v908, 64
        %v911 = vpop.permute.xlu0 %910
        %v913 = vsel %vm818, %v911, 0
        %915 = vmatprep.subr.bf16.mxu0 %v803
        %916 = vmatpush1.bf16.msra.mxu0 %v802
        %917 = vmatprep.subr.bf16.mxu0 %v805
        %918 = vmatpush1.bf16.msra.mxu0 %v804
        %919 = vmatprep.subr.bf16.mxu0 %v807
        %920 = vmatpush1.bf16.msra.mxu0 %v806
        %921 = vmatprep.subr.bf16.mxu0 %v809
        %922 = vmatpush1.bf16.msra.mxu0 %v808
        %923 = vmatprep.subr.bf16.mxu0 0
        %924 = vmatpush1.bf16.msra.mxu0 0
        %925 = vmatprep.subr.bf16.mxu0 0
        %926 = vmatpush1.bf16.msra.mxu0 0
        %927 = vmatprep.subr.bf16.mxu0 0
        %928 = vmatpush1.bf16.msra.mxu0 0
        %929 = vmatprep.subr.bf16.mxu0 0
        %930 = vmatpush1.bf16.msra.mxu0 0
        %931 = vmatprep.subr.bf16.mxu0 0
        %932 = vmatpush1.bf16.msra.mxu0 0
        %933 = vmatprep.subr.bf16.mxu0 0
        %934 = vmatpush1.bf16.msra.mxu0 0
        %935 = vmatprep.subr.bf16.mxu0 0
        %936 = vmatpush1.bf16.msra.mxu0 0
        %937 = vmatprep.subr.bf16.mxu0 0
        %938 = vmatpush1.bf16.msra.mxu0 0
        %939 = vmatprep.subr.bf16.mxu0 0
        %940 = vmatpush1.bf16.msra.mxu0 0
        %941 = vmatprep.subr.bf16.mxu0 0
        %942 = vmatpush1.bf16.msra.mxu0 0
        %943 = vmatprep.subr.bf16.mxu0 0
        %944 = vmatpush1.bf16.msra.mxu0 0
        %945 = vmatprep.subr.bf16.mxu0 0
        %946 = vmatpush1.bf16.msra.mxu0 0
        %947 = vmatprep.mubr.bf16.mxu0 0
        %948 = vmatmul.mubr.bf16.gmra.mrb[0].mxu0 %v913
        %v949 = vpop.f32.mrb[0].mxu0
        %v950 = vadd.f32 0.0, %v949
        %v951 = vpop.f32.mrb[0].mxu0
        %v952 = vadd.f32 0.0, %v951
        %v953 = vpop.f32.mrb[0].mxu0
        %v954 = vpop.f32.mrb[0].mxu0
        %955 = vdwg.mxu0
        %v956 = vadd.f32 %v906, %v950
        %v957 = vadd.f32 %v907, %v952
        %v958 = vtanh.pop %v956
        %v959 = vtanh.pop %v957
        %v960 = vxor.u32 %v956, 2147483648
        %v961 = vxor.u32 %v957, 2147483648
        %v962 = vmul.f32 %v960, 1.442695
        %v963 = vpow.pop %v962
        %v964 = vmul.f32 %v961, 1.442695
        %v965 = vpow.pop %v964
        %v966 = vadd.f32 %v963, 1.0
        %v967 = vadd.f32 %v965, 1.0
        %v968 = vrcp.pop %v966
        %v969 = vmul.f32 1.0, %v968
        %v970 = vrcp.pop %v967
        %v971 = vmul.f32 1.0, %v970
        %v972 = vsel %vm769, %v958, %v969
        %v973 = vsel %vm770, %v959, %v971
        %v974 = vmul.f32 %v972, %v887
        %v975 = vmul.f32 %v972, %v973
        %977 = vrot.lane.b32.xlu0 %v975, 64
        %v978 = vpop.permute.xlu0 %977
        %v980 = vadd.f32 %v974, %v978
        %v981 = vtanh.pop %v980
        %v982 = vmul.f32 %v973, %v981
        %984 = vrot.lane.b32.xlu0 %v982, 64
        %v985 = vpop.permute.xlu0 %984
        %s987 = scalar_lea.vmem [#allocation3], 8
        %988 = vst.msk [vmem:[%s987] sm:$0xff] %vm626, %v985
        %989 = vrot.lane.b32.xlu0 %v982, 32
        %v990 = vpop.permute.xlu0 %989
        %s992 = scalar_lea.vmem [#allocation4], 48
        %993 = vst.msk [vmem:[%s992] sm:$0xff] %vm626, %v990
        %s994 = scalar_lea.vmem [#allocation2], 32
        %v995 = vld [vmem:[%s994] sm:$0xff]
        %v996 = vld [vmem:[%s994 + $0x8] sm:$0xff]
        %s997 = scalar_lea.vmem [#allocation2], 80
        %v998 = vld [vmem:[%s997] sm:$0xff]
        %v999 = vld [vmem:[%s997 + $0x8] sm:$0xff]
        %v1000 = vsel %vm763, %v995, %v998
        %v1001 = vsel %vm764, %v996, %v999
        %v1002 = vpack.c.bf16 %v982, %v982
        %1004 = vrot.lane.b32.xlu0 %v1002, 64
        %v1005 = vpop.permute.xlu0 %1004
        %v1007 = vsel %vm818, %v1005, 0
        %1009 = vmatprep.subr.bf16.mxu0 %v803
        %1010 = vmatpush1.bf16.msra.mxu0 %v802
        %1011 = vmatprep.subr.bf16.mxu0 %v805
        %1012 = vmatpush1.bf16.msra.mxu0 %v804
        %1013 = vmatprep.subr.bf16.mxu0 %v807
        %1014 = vmatpush1.bf16.msra.mxu0 %v806
        %1015 = vmatprep.subr.bf16.mxu0 %v809
        %1016 = vmatpush1.bf16.msra.mxu0 %v808
        %1017 = vmatprep.subr.bf16.mxu0 0
        %1018 = vmatpush1.bf16.msra.mxu0 0
        %1019 = vmatprep.subr.bf16.mxu0 0
        %1020 = vmatpush1.bf16.msra.mxu0 0
        %1021 = vmatprep.subr.bf16.mxu0 0
        %1022 = vmatpush1.bf16.msra.mxu0 0
        %1023 = vmatprep.subr.bf16.mxu0 0
        %1024 = vmatpush1.bf16.msra.mxu0 0
        %1025 = vmatprep.subr.bf16.mxu0 0
        %1026 = vmatpush1.bf16.msra.mxu0 0
        %1027 = vmatprep.subr.bf16.mxu0 0
        %1028 = vmatpush1.bf16.msra.mxu0 0
        %1029 = vmatprep.subr.bf16.mxu0 0
        %1030 = vmatpush1.bf16.msra.mxu0 0
        %1031 = vmatprep.subr.bf16.mxu0 0
        %1032 = vmatpush1.bf16.msra.mxu0 0
        %1033 = vmatprep.subr.bf16.mxu0 0
        %1034 = vmatpush1.bf16.msra.mxu0 0
        %1035 = vmatprep.subr.bf16.mxu0 0
        %1036 = vmatpush1.bf16.msra.mxu0 0
        %1037 = vmatprep.subr.bf16.mxu0 0
        %1038 = vmatpush1.bf16.msra.mxu0 0
        %1039 = vmatprep.subr.bf16.mxu0 0
        %1040 = vmatpush1.bf16.msra.mxu0 0
        %1041 = vmatprep.mubr.bf16.mxu0 0
        %1042 = vmatmul.mubr.bf16.gmra.mrb[0].mxu0 %v1007
        %v1043 = vpop.f32.mrb[0].mxu0
        %v1044 = vadd.f32 0.0, %v1043
        %v1045 = vpop.f32.mrb[0].mxu0
        %v1046 = vadd.f32 0.0, %v1045
        %v1047 = vpop.f32.mrb[0].mxu0
        %v1048 = vpop.f32.mrb[0].mxu0
        %1049 = vdwg.mxu0
        %v1050 = vadd.f32 %v1000, %v1044
        %v1051 = vadd.f32 %v1001, %v1046
        %v1052 = vtanh.pop %v1050
        %v1053 = vtanh.pop %v1051
        %v1054 = vxor.u32 %v1050, 2147483648
        %v1055 = vxor.u32 %v1051, 2147483648
        %v1056 = vmul.f32 %v1054, 1.442695
        %v1057 = vpow.pop %v1056
        %v1058 = vmul.f32 %v1055, 1.442695
        %v1059 = vpow.pop %v1058
        %v1060 = vadd.f32 %v1057, 1.0
        %v1061 = vadd.f32 %v1059, 1.0
        %v1062 = vrcp.pop %v1060
        %v1063 = vmul.f32 1.0, %v1062
        %v1064 = vrcp.pop %v1061
        %v1065 = vmul.f32 1.0, %v1064
        %v1066 = vsel %vm769, %v1052, %v1063
        %v1067 = vsel %vm770, %v1053, %v1065
        %v1068 = vmul.f32 %v1066, %v980
        %v1069 = vmul.f32 %v1066, %v1067
        %1071 = vrot.lane.b32.xlu0 %v1069, 64
        %v1072 = vpop.permute.xlu0 %1071
        %v1074 = vadd.f32 %v1068, %v1072
        %v1075 = vtanh.pop %v1074
        %v1076 = vmul.f32 %v1067, %v1075
        %1078 = vrot.lane.b32.xlu0 %v1076, 64
        %v1079 = vpop.permute.xlu0 %1078
        %s1081 = scalar_lea.vmem [#allocation3], 16
        %1082 = vst.msk [vmem:[%s1081] sm:$0xff] %vm626, %v1079
        %1083 = vrot.lane.b32.xlu0 %v1076, 32
        %v1084 = vpop.permute.xlu0 %1083
        %s1086 = scalar_lea.vmem [#allocation4], 40
        %1087 = vst.msk [vmem:[%s1086] sm:$0xff] %vm626, %v1084
        %s1088 = scalar_lea.vmem [#allocation2], 48
        %v1089 = vld [vmem:[%s1088] sm:$0xff]
        %v1090 = vld [vmem:[%s1088 + $0x8] sm:$0xff]
        %s1091 = scalar_lea.vmem [#allocation2], 64
        %v1092 = vld [vmem:[%s1091] sm:$0xff]
        %v1093 = vld [vmem:[%s1091 + $0x8] sm:$0xff]
        %v1094 = vsel %vm763, %v1089, %v1092
        %v1095 = vsel %vm764, %v1090, %v1093
        %v1096 = vpack.c.bf16 %v1076, %v1076
        %1098 = vrot.lane.b32.xlu0 %v1096, 64
        %v1099 = vpop.permute.xlu0 %1098
        %v1101 = vsel %vm818, %v1099, 0
        %1103 = vmatprep.subr.bf16.mxu0 %v803
        %1104 = vmatpush1.bf16.msra.mxu0 %v802
        %1105 = vmatprep.subr.bf16.mxu0 %v805
        %1106 = vmatpush1.bf16.msra.mxu0 %v804
        %1107 = vmatprep.subr.bf16.mxu0 %v807
        %1108 = vmatpush1.bf16.msra.mxu0 %v806
        %1109 = vmatprep.subr.bf16.mxu0 %v809
        %1110 = vmatpush1.bf16.msra.mxu0 %v808
        %1111 = vmatprep.subr.bf16.mxu0 0
        %1112 = vmatpush1.bf16.msra.mxu0 0
        %1113 = vmatprep.subr.bf16.mxu0 0
        %1114 = vmatpush1.bf16.msra.mxu0 0
        %1115 = vmatprep.subr.bf16.mxu0 0
        %1116 = vmatpush1.bf16.msra.mxu0 0
        %1117 = vmatprep.subr.bf16.mxu0 0
        %1118 = vmatpush1.bf16.msra.mxu0 0
        %1119 = vmatprep.subr.bf16.mxu0 0
        %1120 = vmatpush1.bf16.msra.mxu0 0
        %1121 = vmatprep.subr.bf16.mxu0 0
        %1122 = vmatpush1.bf16.msra.mxu0 0
        %1123 = vmatprep.subr.bf16.mxu0 0
        %1124 = vmatpush1.bf16.msra.mxu0 0
        %1125 = vmatprep.subr.bf16.mxu0 0
        %1126 = vmatpush1.bf16.msra.mxu0 0
        %1127 = vmatprep.subr.bf16.mxu0 0
        %1128 = vmatpush1.bf16.msra.mxu0 0
        %1129 = vmatprep.subr.bf16.mxu0 0
        %1130 = vmatpush1.bf16.msra.mxu0 0
        %1131 = vmatprep.subr.bf16.mxu0 0
        %1132 = vmatpush1.bf16.msra.mxu0 0
        %1133 = vmatprep.subr.bf16.mxu0 0
        %1134 = vmatpush1.bf16.msra.mxu0 0
        %1135 = vmatprep.mubr.bf16.mxu0 0
        %1136 = vmatmul.mubr.bf16.gmra.mrb[0].mxu0 %v1101
        %v1137 = vpop.f32.mrb[0].mxu0
        %v1138 = vadd.f32 0.0, %v1137
        %v1139 = vpop.f32.mrb[0].mxu0
        %v1140 = vadd.f32 0.0, %v1139
        %v1141 = vpop.f32.mrb[0].mxu0
        %v1142 = vpop.f32.mrb[0].mxu0
        %1143 = vdwg.mxu0
        %v1144 = vadd.f32 %v1094, %v1138
        %v1145 = vadd.f32 %v1095, %v1140
        %v1146 = vtanh.pop %v1144
        %v1147 = vtanh.pop %v1145
        %v1148 = vxor.u32 %v1144, 2147483648
        %v1149 = vxor.u32 %v1145, 2147483648
        %v1150 = vmul.f32 %v1148, 1.442695
        %v1151 = vpow.pop %v1150
        %v1152 = vmul.f32 %v1149, 1.442695
        %v1153 = vpow.pop %v1152
        %v1154 = vadd.f32 %v1151, 1.0
        %v1155 = vadd.f32 %v1153, 1.0
        %v1156 = vrcp.pop %v1154
        %v1157 = vmul.f32 1.0, %v1156
        %v1158 = vrcp.pop %v1155
        %v1159 = vmul.f32 1.0, %v1158
        %v1160 = vsel %vm769, %v1146, %v1157
        %v1161 = vsel %vm770, %v1147, %v1159
        %v1162 = vmul.f32 %v1160, %v1074
        %v1163 = vmul.f32 %v1160, %v1161
        %1165 = vrot.lane.b32.xlu0 %v1163, 64
        %v1166 = vpop.permute.xlu0 %1165
        %v1168 = vadd.f32 %v1162, %v1166
        %v1169 = vtanh.pop %v1168
        %v1170 = vmul.f32 %v1161, %v1169
        %1172 = vrot.lane.b32.xlu0 %v1170, 64
        %v1173 = vpop.permute.xlu0 %1172
        %s1175 = scalar_lea.vmem [#allocation3], 24
        %1176 = vst.msk [vmem:[%s1175] sm:$0xff] %vm626, %v1173
        %1177 = vrot.lane.b32.xlu0 %v1170, 32
        %v1178 = vpop.permute.xlu0 %1177
        %s1180 = scalar_lea.vmem [#allocation4], 32
        %1181 = vst.msk [vmem:[%s1180] sm:$0xff] %vm626, %v1178
        %v1182 = vld [vmem:[%s1091] sm:$0xff]
        %v1183 = vld [vmem:[%s1091 + $0x8] sm:$0xff]
        %v1184 = vld [vmem:[%s1088] sm:$0xff]
        %v1185 = vld [vmem:[%s1088 + $0x8] sm:$0xff]
        %v1186 = vsel %vm763, %v1182, %v1184
        %v1187 = vsel %vm764, %v1183, %v1185
        %v1188 = vpack.c.bf16 %v1170, %v1170
        %1190 = vrot.lane.b32.xlu0 %v1188, 64
        %v1191 = vpop.permute.xlu0 %1190
        %v1193 = vsel %vm818, %v1191, 0
        %1195 = vmatprep.subr.bf16.mxu0 %v803
        %1196 = vmatpush1.bf16.msra.mxu0 %v802
        %1197 = vmatprep.subr.bf16.mxu0 %v805
        %1198 = vmatpush1.bf16.msra.mxu0 %v804
        %1199 = vmatprep.subr.bf16.mxu0 %v807
        %1200 = vmatpush1.bf16.msra.mxu0 %v806
        %1201 = vmatprep.subr.bf16.mxu0 %v809
        %1202 = vmatpush1.bf16.msra.mxu0 %v808
        %1203 = vmatprep.subr.bf16.mxu0 0
        %1204 = vmatpush1.bf16.msra.mxu0 0
        %1205 = vmatprep.subr.bf16.mxu0 0
        %1206 = vmatpush1.bf16.msra.mxu0 0
        %1207 = vmatprep.subr.bf16.mxu0 0
        %1208 = vmatpush1.bf16.msra.mxu0 0
        %1209 = vmatprep.subr.bf16.mxu0 0
        %1210 = vmatpush1.bf16.msra.mxu0 0
        %1211 = vmatprep.subr.bf16.mxu0 0
        %1212 = vmatpush1.bf16.msra.mxu0 0
        %1213 = vmatprep.subr.bf16.mxu0 0
        %1214 = vmatpush1.bf16.msra.mxu0 0
        %1215 = vmatprep.subr.bf16.mxu0 0
        %1216 = vmatpush1.bf16.msra.mxu0 0
        %1217 = vmatprep.subr.bf16.mxu0 0
        %1218 = vmatpush1.bf16.msra.mxu0 0
        %1219 = vmatprep.subr.bf16.mxu0 0
        %1220 = vmatpush1.bf16.msra.mxu0 0
        %1221 = vmatprep.subr.bf16.mxu0 0
        %1222 = vmatpush1.bf16.msra.mxu0 0
        %1223 = vmatprep.subr.bf16.mxu0 0
        %1224 = vmatpush1.bf16.msra.mxu0 0
        %1225 = vmatprep.subr.bf16.mxu0 0
        %1226 = vmatpush1.bf16.msra.mxu0 0
        %1227 = vmatprep.mubr.bf16.mxu0 0
        %1228 = vmatmul.mubr.bf16.gmra.mrb[0].mxu0 %v1193
        %v1229 = vpop.f32.mrb[0].mxu0
        %v1230 = vadd.f32 0.0, %v1229
        %v1231 = vpop.f32.mrb[0].mxu0
        %v1232 = vadd.f32 0.0, %v1231
        %v1233 = vpop.f32.mrb[0].mxu0
        %v1234 = vpop.f32.mrb[0].mxu0
        %1235 = vdwg.mxu0
        %v1236 = vadd.f32 %v1186, %v1230
        %v1237 = vadd.f32 %v1187, %v1232
        %v1238 = vtanh.pop %v1236
        %v1239 = vtanh.pop %v1237
        %v1240 = vxor.u32 %v1236, 2147483648
        %v1241 = vxor.u32 %v1237, 2147483648
        %v1242 = vmul.f32 %v1240, 1.442695
        %v1243 = vpow.pop %v1242
        %v1244 = vmul.f32 %v1241, 1.442695
        %v1245 = vpow.pop %v1244
        %v1246 = vadd.f32 %v1243, 1.0
        %v1247 = vadd.f32 %v1245, 1.0
        %v1248 = vrcp.pop %v1246
        %v1249 = vmul.f32 1.0, %v1248
        %v1250 = vrcp.pop %v1247
        %v1251 = vmul.f32 1.0, %v1250
        %v1252 = vsel %vm769, %v1238, %v1249
        %v1253 = vsel %vm770, %v1239, %v1251
        %v1254 = vmul.f32 %v1252, %v1168
        %v1255 = vmul.f32 %v1252, %v1253
        %1257 = vrot.lane.b32.xlu0 %v1255, 64
        %v1258 = vpop.permute.xlu0 %1257
        %v1260 = vadd.f32 %v1254, %v1258
        %v1261 = vtanh.pop %v1260
        %v1262 = vmul.f32 %v1253, %v1261
        %1264 = vrot.lane.b32.xlu0 %v1262, 64
        %v1265 = vpop.permute.xlu0 %1264
        %s1267 = scalar_lea.vmem [#allocation3], 32
        %1268 = vst.msk [vmem:[%s1267] sm:$0xff] %vm626, %v1265
        %1269 = vrot.lane.b32.xlu0 %v1262, 32
        %v1270 = vpop.permute.xlu0 %1269
        %s1272 = scalar_lea.vmem [#allocation4], 24
        %1273 = vst.msk [vmem:[%s1272] sm:$0xff] %vm626, %v1270
        %v1274 = vld [vmem:[%s997] sm:$0xff]
        %v1275 = vld [vmem:[%s997 + $0x8] sm:$0xff]
        %v1276 = vld [vmem:[%s994] sm:$0xff]
        %v1277 = vld [vmem:[%s994 + $0x8] sm:$0xff]
        %v1278 = vsel %vm763, %v1274, %v1276
        %v1279 = vsel %vm764, %v1275, %v1277
        %v1280 = vpack.c.bf16 %v1262, %v1262
        %1282 = vrot.lane.b32.xlu0 %v1280, 64
        %v1283 = vpop.permute.xlu0 %1282
        %v1285 = vsel %vm818, %v1283, 0
        %1287 = vmatprep.subr.bf16.mxu0 %v803
        %1288 = vmatpush1.bf16.msra.mxu0 %v802
        %1289 = vmatprep.subr.bf16.mxu0 %v805
        %1290 = vmatpush1.bf16.msra.mxu0 %v804
        %1291 = vmatprep.subr.bf16.mxu0 %v807
        %1292 = vmatpush1.bf16.msra.mxu0 %v806
        %1293 = vmatprep.subr.bf16.mxu0 %v809
        %1294 = vmatpush1.bf16.msra.mxu0 %v808
        %1295 = vmatprep.subr.bf16.mxu0 0
        %1296 = vmatpush1.bf16.msra.mxu0 0
        %1297 = vmatprep.subr.bf16.mxu0 0
        %1298 = vmatpush1.bf16.msra.mxu0 0
        %1299 = vmatprep.subr.bf16.mxu0 0
        %1300 = vmatpush1.bf16.msra.mxu0 0
        %1301 = vmatprep.subr.bf16.mxu0 0
        %1302 = vmatpush1.bf16.msra.mxu0 0
        %1303 = vmatprep.subr.bf16.mxu0 0
        %1304 = vmatpush1.bf16.msra.mxu0 0
        %1305 = vmatprep.subr.bf16.mxu0 0
        %1306 = vmatpush1.bf16.msra.mxu0 0
        %1307 = vmatprep.subr.bf16.mxu0 0
        %1308 = vmatpush1.bf16.msra.mxu0 0
        %1309 = vmatprep.subr.bf16.mxu0 0
        %1310 = vmatpush1.bf16.msra.mxu0 0
        %1311 = vmatprep.subr.bf16.mxu0 0
        %1312 = vmatpush1.bf16.msra.mxu0 0
        %1313 = vmatprep.subr.bf16.mxu0 0
        %1314 = vmatpush1.bf16.msra.mxu0 0
        %1315 = vmatprep.subr.bf16.mxu0 0
        %1316 = vmatpush1.bf16.msra.mxu0 0
        %1317 = vmatprep.subr.bf16.mxu0 0
        %1318 = vmatpush1.bf16.msra.mxu0 0
        %1319 = vmatprep.mubr.bf16.mxu0 0
        %1320 = vmatmul.mubr.bf16.gmra.mrb[0].mxu0 %v1285
        %v1321 = vpop.f32.mrb[0].mxu0
        %v1322 = vadd.f32 0.0, %v1321
        %v1323 = vpop.f32.mrb[0].mxu0
        %v1324 = vadd.f32 0.0, %v1323
        %v1325 = vpop.f32.mrb[0].mxu0
        %v1326 = vpop.f32.mrb[0].mxu0
        %1327 = vdwg.mxu0
        %v1328 = vadd.f32 %v1278, %v1322
        %v1329 = vadd.f32 %v1279, %v1324
        %v1330 = vtanh.pop %v1328
        %v1331 = vtanh.pop %v1329
        %v1332 = vxor.u32 %v1328, 2147483648
        %v1333 = vxor.u32 %v1329, 2147483648
        %v1334 = vmul.f32 %v1332, 1.442695
        %v1335 = vpow.pop %v1334
        %v1336 = vmul.f32 %v1333, 1.442695
        %v1337 = vpow.pop %v1336
        %v1338 = vadd.f32 %v1335, 1.0
        %v1339 = vadd.f32 %v1337, 1.0
        %v1340 = vrcp.pop %v1338
        %v1341 = vmul.f32 1.0, %v1340
        %v1342 = vrcp.pop %v1339
        %v1343 = vmul.f32 1.0, %v1342
        %v1344 = vsel %vm769, %v1330, %v1341
        %v1345 = vsel %vm770, %v1331, %v1343
        %v1346 = vmul.f32 %v1344, %v1260
        %v1347 = vmul.f32 %v1344, %v1345
        %1349 = vrot.lane.b32.xlu0 %v1347, 64
        %v1350 = vpop.permute.xlu0 %1349
        %v1352 = vadd.f32 %v1346, %v1350
        %v1353 = vtanh.pop %v1352
        %v1354 = vmul.f32 %v1345, %v1353
        %1356 = vrot.lane.b32.xlu0 %v1354, 64
        %v1357 = vpop.permute.xlu0 %1356
        %s1359 = scalar_lea.vmem [#allocation3], 40
        %1360 = vst.msk [vmem:[%s1359] sm:$0xff] %vm626, %v1357
        %1361 = vrot.lane.b32.xlu0 %v1354, 32
        %v1362 = vpop.permute.xlu0 %1361
        %s1364 = scalar_lea.vmem [#allocation4], 16
        %1365 = vst.msk [vmem:[%s1364] sm:$0xff] %vm626, %v1362
        %v1366 = vld [vmem:[%s903] sm:$0xff]
        %v1367 = vld [vmem:[%s903 + $0x8] sm:$0xff]
        %v1368 = vld [vmem:[%s900] sm:$0xff]
        %v1369 = vld [vmem:[%s900 + $0x8] sm:$0xff]
        %v1370 = vsel %vm763, %v1366, %v1368
        %v1371 = vsel %vm764, %v1367, %v1369
        %v1372 = vpack.c.bf16 %v1354, %v1354
        %1374 = vrot.lane.b32.xlu0 %v1372, 64
        %v1375 = vpop.permute.xlu0 %1374
        %v1377 = vsel %vm818, %v1375, 0
        %1379 = vmatprep.subr.bf16.mxu0 %v803
        %1380 = vmatpush1.bf16.msra.mxu0 %v802
        %1381 = vmatprep.subr.bf16.mxu0 %v805
        %1382 = vmatpush1.bf16.msra.mxu0 %v804
        %1383 = vmatprep.subr.bf16.mxu0 %v807
        %1384 = vmatpush1.bf16.msra.mxu0 %v806
        %1385 = vmatprep.subr.bf16.mxu0 %v809
        %1386 = vmatpush1.bf16.msra.mxu0 %v808
        %1387 = vmatprep.subr.bf16.mxu0 0
        %1388 = vmatpush1.bf16.msra.mxu0 0
        %1389 = vmatprep.subr.bf16.mxu0 0
        %1390 = vmatpush1.bf16.msra.mxu0 0
        %1391 = vmatprep.subr.bf16.mxu0 0
        %1392 = vmatpush1.bf16.msra.mxu0 0
        %1393 = vmatprep.subr.bf16.mxu0 0
        %1394 = vmatpush1.bf16.msra.mxu0 0
        %1395 = vmatprep.subr.bf16.mxu0 0
        %1396 = vmatpush1.bf16.msra.mxu0 0
        %1397 = vmatprep.subr.bf16.mxu0 0
        %1398 = vmatpush1.bf16.msra.mxu0 0
        %1399 = vmatprep.subr.bf16.mxu0 0
        %1400 = vmatpush1.bf16.msra.mxu0 0
        %1401 = vmatprep.subr.bf16.mxu0 0
        %1402 = vmatpush1.bf16.msra.mxu0 0
        %1403 = vmatprep.subr.bf16.mxu0 0
        %1404 = vmatpush1.bf16.msra.mxu0 0
        %1405 = vmatprep.subr.bf16.mxu0 0
        %1406 = vmatpush1.bf16.msra.mxu0 0
        %1407 = vmatprep.subr.bf16.mxu0 0
        %1408 = vmatpush1.bf16.msra.mxu0 0
        %1409 = vmatprep.subr.bf16.mxu0 0
        %1410 = vmatpush1.bf16.msra.mxu0 0
        %1411 = vmatprep.mubr.bf16.mxu0 0
        %1412 = vmatmul.mubr.bf16.gmra.mrb[0].mxu0 %v1377
        %v1413 = vpop.f32.mrb[0].mxu0
        %v1414 = vadd.f32 0.0, %v1413
        %v1415 = vpop.f32.mrb[0].mxu0
        %v1416 = vadd.f32 0.0, %v1415
        %v1417 = vpop.f32.mrb[0].mxu0
        %v1418 = vpop.f32.mrb[0].mxu0
        %1419 = vdwg.mxu0
        %v1420 = vadd.f32 %v1370, %v1414
        %v1421 = vadd.f32 %v1371, %v1416
        %v1422 = vtanh.pop %v1420
        %v1423 = vtanh.pop %v1421
        %v1424 = vxor.u32 %v1420, 2147483648
        %v1425 = vxor.u32 %v1421, 2147483648
        %v1426 = vmul.f32 %v1424, 1.442695
        %v1427 = vpow.pop %v1426
        %v1428 = vmul.f32 %v1425, 1.442695
        %v1429 = vpow.pop %v1428
        %v1430 = vadd.f32 %v1427, 1.0
        %v1431 = vadd.f32 %v1429, 1.0
        %v1432 = vrcp.pop %v1430
        %v1433 = vmul.f32 1.0, %v1432
        %v1434 = vrcp.pop %v1431
        %v1435 = vmul.f32 1.0, %v1434
        %v1436 = vsel %vm769, %v1422, %v1433
        %v1437 = vsel %vm770, %v1423, %v1435
        %v1438 = vmul.f32 %v1436, %v1352
        %v1439 = vmul.f32 %v1436, %v1437
        %1441 = vrot.lane.b32.xlu0 %v1439, 64
        %v1442 = vpop.permute.xlu0 %1441
        %v1444 = vadd.f32 %v1438, %v1442
        %v1445 = vtanh.pop %v1444
        %v1446 = vmul.f32 %v1437, %v1445
        %1448 = vrot.lane.b32.xlu0 %v1446, 64
        %v1449 = vpop.permute.xlu0 %1448
        %s1451 = scalar_lea.vmem [#allocation3], 48
        %1452 = vst.msk [vmem:[%s1451] sm:$0xff] %vm626, %v1449
        %1453 = vrot.lane.b32.xlu0 %v1446, 32
        %v1454 = vpop.permute.xlu0 %1453
        %s1456 = scalar_lea.vmem [#allocation4], 8
        %1457 = vst.msk [vmem:[%s1456] sm:$0xff] %vm626, %v1454
        %v1458 = vld [vmem:[%s773] sm:$0xff]
        %v1459 = vld [vmem:[%s773 + $0x8] sm:$0xff]
        %v1460 = vld [vmem:[#allocation2] sm:$0xff]
        %v1461 = vld [vmem:[#allocation2 + $0x8] sm:$0xff]
        %v1462 = vsel %vm763, %v1458, %v1460
        %v1463 = vsel %vm764, %v1459, %v1461
        %v1464 = vpack.c.bf16 %v1446, %v1446
        %1466 = vrot.lane.b32.xlu0 %v1464, 64
        %v1467 = vpop.permute.xlu0 %1466
        %v1469 = vsel %vm818, %v1467, 0
        %1471 = vmatprep.subr.bf16.mxu0 %v803
        %1472 = vmatpush1.bf16.msra.mxu0 %v802
        %1473 = vmatprep.subr.bf16.mxu0 %v805
        %1474 = vmatpush1.bf16.msra.mxu0 %v804
        %1475 = vmatprep.subr.bf16.mxu0 %v807
        %1476 = vmatpush1.bf16.msra.mxu0 %v806
        %1477 = vmatprep.subr.bf16.mxu0 %v809
        %1478 = vmatpush1.bf16.msra.mxu0 %v808
        %1479 = vmatprep.subr.bf16.mxu0 0
        %1480 = vmatpush1.bf16.msra.mxu0 0
        %1481 = vmatprep.subr.bf16.mxu0 0
        %1482 = vmatpush1.bf16.msra.mxu0 0
        %1483 = vmatprep.subr.bf16.mxu0 0
        %1484 = vmatpush1.bf16.msra.mxu0 0
        %1485 = vmatprep.subr.bf16.mxu0 0
        %1486 = vmatpush1.bf16.msra.mxu0 0
        %1487 = vmatprep.subr.bf16.mxu0 0
        %1488 = vmatpush1.bf16.msra.mxu0 0
        %1489 = vmatprep.subr.bf16.mxu0 0
        %1490 = vmatpush1.bf16.msra.mxu0 0
        %1491 = vmatprep.subr.bf16.mxu0 0
        %1492 = vmatpush1.bf16.msra.mxu0 0
        %1493 = vmatprep.subr.bf16.mxu0 0
        %1494 = vmatpush1.bf16.msra.mxu0 0
        %1495 = vmatprep.subr.bf16.mxu0 0
        %1496 = vmatpush1.bf16.msra.mxu0 0
        %1497 = vmatprep.subr.bf16.mxu0 0
        %1498 = vmatpush1.bf16.msra.mxu0 0
        %1499 = vmatprep.subr.bf16.mxu0 0
        %1500 = vmatpush1.bf16.msra.mxu0 0
        %1501 = vmatprep.subr.bf16.mxu0 0
        %1502 = vmatpush1.bf16.msra.mxu0 0
        %1503 = vmatprep.mubr.bf16.mxu0 0
        %1504 = vmatmul.mubr.bf16.gmra.mrb[0].mxu0 %v1469
        %v1505 = vpop.f32.mrb[0].mxu0
        %v1506 = vadd.f32 0.0, %v1505
        %v1507 = vpop.f32.mrb[0].mxu0
        %v1508 = vadd.f32 0.0, %v1507
        %v1509 = vpop.f32.mrb[0].mxu0
        %v1510 = vpop.f32.mrb[0].mxu0
        %1511 = vdwg.mxu0
        %v1512 = vadd.f32 %v1462, %v1506
        %v1513 = vadd.f32 %v1463, %v1508
        %v1514 = vtanh.pop %v1512
        %v1515 = vtanh.pop %v1513
        %v1516 = vxor.u32 %v1512, 2147483648
        %v1517 = vxor.u32 %v1513, 2147483648
        %v1518 = vmul.f32 %v1516, 1.442695
        %v1519 = vpow.pop %v1518
        %v1520 = vmul.f32 %v1517, 1.442695
        %v1521 = vpow.pop %v1520
        %v1522 = vadd.f32 %v1519, 1.0
        %v1523 = vadd.f32 %v1521, 1.0
        %v1524 = vrcp.pop %v1522
        %v1525 = vmul.f32 1.0, %v1524
        %v1526 = vrcp.pop %v1523
        %v1527 = vmul.f32 1.0, %v1526
        %v1528 = vsel %vm769, %v1514, %v1525
        %v1529 = vsel %vm770, %v1515, %v1527
        %v1530 = vmul.f32 %v1528, %v1444
        %v1531 = vmul.f32 %v1528, %v1529
        %1533 = vrot.lane.b32.xlu0 %v1531, 64
        %v1534 = vpop.permute.xlu0 %1533
        %v1536 = vadd.f32 %v1530, %v1534
        %v1537 = vtanh.pop %v1536
        %v1538 = vmul.f32 %v1529, %v1537
        %1540 = vrot.lane.b32.xlu0 %v1538, 64
        %v1541 = vpop.permute.xlu0 %1540
        %s1543 = scalar_lea.vmem [#allocation3], 56
        %1544 = vst.msk [vmem:[%s1543] sm:$0xff] %vm626, %v1541
        %1545 = vrot.lane.b32.xlu0 %v1538, 32
        %v1546 = vpop.permute.xlu0 %1545
        %1548 = vst.msk [vmem:[#allocation4] sm:$0xff] %vm626, %v1546
        %v1549 = vld [vmem:[#allocation3] sm:$0xff]
        %v1550 = vld [vmem:[#allocation3 + $0x8] sm:$0xff]
        %v1551 = vld [vmem:[#allocation3 + $0x10] sm:$0xff]
        %v1552 = vld [vmem:[#allocation3 + $0x18] sm:$0xff]
        %v1553 = vld [vmem:[#allocation3 + $0x20] sm:$0xff]
        %v1554 = vld [vmem:[#allocation3 + $0x28] sm:$0xff]
        %v1555 = vld [vmem:[#allocation3 + $0x30] sm:$0xff]
        %v1556 = vld [vmem:[#allocation3 + $0x38] sm:$0xff]
        %v1557 = vpack.c.bf16 %v1550, %v1549
        %v1558 = vpack.c.bf16 %v1552, %v1551
        %v1559 = vpack.c.bf16 %v1554, %v1553
        %v1560 = vpack.c.bf16 %v1556, %v1555
        %v1561 = vld [vmem:[#allocation4] sm:$0xff]
        %v1562 = vld [vmem:[#allocation4 + $0x8] sm:$0xff]
        %v1563 = vld [vmem:[#allocation4 + $0x10] sm:$0xff]
        %v1564 = vld [vmem:[#allocation4 + $0x18] sm:$0xff]
        %v1565 = vld [vmem:[#allocation4 + $0x20] sm:$0xff]
        %v1566 = vld [vmem:[#allocation4 + $0x28] sm:$0xff]
        %v1567 = vld [vmem:[#allocation4 + $0x30] sm:$0xff]
        %v1568 = vld [vmem:[#allocation4 + $0x38] sm:$0xff]
        %v1569 = vpack.c.bf16 %v1562, %v1561
        %v1570 = vpack.c.bf16 %v1564, %v1563
        %v1571 = vpack.c.bf16 %v1566, %v1565
        %v1572 = vpack.c.bf16 %v1568, %v1567
        %v1573 = vld [vmem:[#allocation16] sm:$0xf]
        %v1574 = vld [vmem:[#allocation16 + $0x4] sm:$0xf]
        %v1575 = vld [vmem:[#allocation16 + $0x8] sm:$0xf]
        %v1576 = vld [vmem:[#allocation16 + $0xc] sm:$0xf]
        %v1577 = vld [vmem:[#allocation18] sm:$0xf]
        %v1578 = vld [vmem:[#allocation18 + $0x4] sm:$0xf]
        %v1579 = vld [vmem:[#allocation18 + $0x8] sm:$0xf]
        %v1580 = vld [vmem:[#allocation18 + $0xc] sm:$0xf]
        %v1585 = vunpack.c.l.b16 %v1577
        %v1586 = vunpack.c.l.b16 %v1578
        %v1587 = vunpack.c.l.b16 %v1579
        %v1588 = vunpack.c.l.b16 %v1580
        %v1589 = vpack.c.b16 %v1586, %v1585
        %v1590 = vpack.c.b16 %v1588, %v1587
        %v1594 = vsel %vm626, %v1569, 0
        %v1597 = vsel %vm626, %v1570, 0
        %v1600 = vsel %vm626, %v1571, 0
        %v1603 = vsel %vm626, %v1572, 0
        %1605 = vmatprep.subr.bf16.mxu0 0
        %1606 = vmatpush1.bf16.msra.mxu0 %v1589
        %1607 = vmatprep.subr.bf16.mxu0 0
        %1608 = vmatpush1.bf16.msra.mxu0 %v1590
        %1609 = vmatprep.subr.bf16.mxu0 0
        %1610 = vmatpush1.bf16.msra.mxu0 0
        %1611 = vmatprep.subr.bf16.mxu0 0
        %1612 = vmatpush1.bf16.msra.mxu0 0
        %1613 = vmatprep.subr.bf16.mxu0 0
        %1614 = vmatpush1.bf16.msra.mxu0 0
        %1615 = vmatprep.subr.bf16.mxu0 0
        %1616 = vmatpush1.bf16.msra.mxu0 0
        %1617 = vmatprep.subr.bf16.mxu0 0
        %1618 = vmatpush1.bf16.msra.mxu0 0
        %1619 = vmatprep.subr.bf16.mxu0 0
        %1620 = vmatpush1.bf16.msra.mxu0 0
        %1621 = vmatprep.subr.bf16.mxu0 0
        %1622 = vmatpush1.bf16.msra.mxu0 0
        %1623 = vmatprep.subr.bf16.mxu0 0
        %1624 = vmatpush1.bf16.msra.mxu0 0
        %1625 = vmatprep.subr.bf16.mxu0 0
        %1626 = vmatpush1.bf16.msra.mxu0 0
        %1627 = vmatprep.subr.bf16.mxu0 0
        %1628 = vmatpush1.bf16.msra.mxu0 0
        %1629 = vmatprep.subr.bf16.mxu0 0
        %1630 = vmatpush1.bf16.msra.mxu0 0
        %1631 = vmatprep.subr.bf16.mxu0 0
        %1632 = vmatpush1.bf16.msra.mxu0 0
        %1633 = vmatprep.subr.bf16.mxu0 0
        %1634 = vmatpush1.bf16.msra.mxu0 0
        %1635 = vmatprep.subr.bf16.mxu0 0
        %1636 = vmatpush1.bf16.msra.mxu0 0
        %1637 = vmatprep.mubr.bf16.mxu0 0
        %1638 = vmatmul.mubr.bf16.gmra.mrb[0].mxu0 %v1594
        %v1639 = vpop.f32.mrb[0].mxu0
        %v1640 = vadd.f32 0.0, %v1639
        %v1641 = vpop.f32.mrb[0].mxu0
        %v1642 = vpop.f32.mrb[0].mxu0
        %v1643 = vadd.f32 0.0, %v1642
        %v1644 = vpop.f32.mrb[0].mxu0
        %1645 = vmatprep.mubr.bf16.mxu0 0
        %1646 = vmatmul.mubr.bf16.gmra.mrb[0].mxu0 %v1597
        %v1647 = vpop.f32.mrb[0].mxu0
        %v1648 = vadd.f32 0.0, %v1647
        %v1649 = vpop.f32.mrb[0].mxu0
        %v1650 = vpop.f32.mrb[0].mxu0
        %v1651 = vadd.f32 0.0, %v1650
        %v1652 = vpop.f32.mrb[0].mxu0
        %1653 = vmatprep.mubr.bf16.mxu0 0
        %1654 = vmatmul.mubr.bf16.gmra.mrb[0].mxu0 %v1600
        %v1655 = vpop.f32.mrb[0].mxu0
        %v1656 = vadd.f32 0.0, %v1655
        %v1657 = vpop.f32.mrb[0].mxu0
        %v1658 = vpop.f32.mrb[0].mxu0
        %v1659 = vadd.f32 0.0, %v1658
        %v1660 = vpop.f32.mrb[0].mxu0
        %1661 = vmatprep.mubr.bf16.mxu0 0
        %1662 = vmatmul.mubr.bf16.gmra.mrb[0].mxu0 %v1603
        %v1663 = vpop.f32.mrb[0].mxu0
        %v1664 = vadd.f32 0.0, %v1663
        %v1665 = vpop.f32.mrb[0].mxu0
        %v1666 = vpop.f32.mrb[0].mxu0
        %v1667 = vadd.f32 0.0, %v1666
        %v1668 = vpop.f32.mrb[0].mxu0
        %1669 = vdwg.mxu0
        %v1674 = vunpack.c.l.b16 %v1573
        %v1675 = vunpack.c.l.b16 %v1574
        %v1676 = vunpack.c.l.b16 %v1575
        %v1677 = vunpack.c.l.b16 %v1576
        %v1678 = vpack.c.b16 %v1675, %v1674
        %v1679 = vpack.c.b16 %v1677, %v1676
        %v1683 = vsel %vm626, %v1557, 0
        %v1686 = vsel %vm626, %v1558, 0
        %v1689 = vsel %vm626, %v1559, 0
        %v1692 = vsel %vm626, %v1560, 0
        %1694 = vmatprep.subr.bf16.mxu0 0
        %1695 = vmatpush1.bf16.msra.mxu0 %v1678
        %1696 = vmatprep.subr.bf16.mxu0 0
        %1697 = vmatpush1.bf16.msra.mxu0 %v1679
        %1698 = vmatprep.subr.bf16.mxu0 0
        %1699 = vmatpush1.bf16.msra.mxu0 0
        %1700 = vmatprep.subr.bf16.mxu0 0
        %1701 = vmatpush1.bf16.msra.mxu0 0
        %1702 = vmatprep.subr.bf16.mxu0 0
        %1703 = vmatpush1.bf16.msra.mxu0 0
        %1704 = vmatprep.subr.bf16.mxu0 0
        %1705 = vmatpush1.bf16.msra.mxu0 0
        %1706 = vmatprep.subr.bf16.mxu0 0
        %1707 = vmatpush1.bf16.msra.mxu0 0
        %1708 = vmatprep.subr.bf16.mxu0 0
        %1709 = vmatpush1.bf16.msra.mxu0 0
        %1710 = vmatprep.subr.bf16.mxu0 0
        %1711 = vmatpush1.bf16.msra.mxu0 0
        %1712 = vmatprep.subr.bf16.mxu0 0
        %1713 = vmatpush1.bf16.msra.mxu0 0
        %1714 = vmatprep.subr.bf16.mxu0 0
        %1715 = vmatpush1.bf16.msra.mxu0 0
        %1716 = vmatprep.subr.bf16.mxu0 0
        %1717 = vmatpush1.bf16.msra.mxu0 0
        %1718 = vmatprep.subr.bf16.mxu0 0
        %1719 = vmatpush1.bf16.msra.mxu0 0
        %1720 = vmatprep.subr.bf16.mxu0 0
        %1721 = vmatpush1.bf16.msra.mxu0 0
        %1722 = vmatprep.subr.bf16.mxu0 0
        %1723 = vmatpush1.bf16.msra.mxu0 0
        %1724 = vmatprep.subr.bf16.mxu0 0
        %1725 = vmatpush1.bf16.msra.mxu0 0
        %1726 = vmatprep.mubr.bf16.mxu0 0
        %1727 = vmatmul.mubr.bf16.gmra.mrb[0].mxu0 %v1683
        %v1728 = vpop.f32.mrb[0].mxu0
        %v1729 = vadd.f32 %v1640, %v1728
        %v1730 = vpop.f32.mrb[0].mxu0
        %v1731 = vpop.f32.mrb[0].mxu0
        %v1732 = vadd.f32 %v1643, %v1731
        %v1733 = vpop.f32.mrb[0].mxu0
        %1734 = vmatprep.mubr.bf16.mxu0 0
        %1735 = vmatmul.mubr.bf16.gmra.mrb[0].mxu0 %v1686
        %v1736 = vpop.f32.mrb[0].mxu0
        %v1737 = vadd.f32 %v1648, %v1736
        %v1738 = vpop.f32.mrb[0].mxu0
        %v1739 = vpop.f32.mrb[0].mxu0
        %v1740 = vadd.f32 %v1651, %v1739
        %v1741 = vpop.f32.mrb[0].mxu0
        %1742 = vmatprep.mubr.bf16.mxu0 0
        %1743 = vmatmul.mubr.bf16.gmra.mrb[0].mxu0 %v1689
        %v1744 = vpop.f32.mrb[0].mxu0
        %v1745 = vadd.f32 %v1656, %v1744
        %v1746 = vpop.f32.mrb[0].mxu0
        %v1747 = vpop.f32.mrb[0].mxu0
        %v1748 = vadd.f32 %v1659, %v1747
        %v1749 = vpop.f32.mrb[0].mxu0
        %1750 = vmatprep.mubr.bf16.mxu0 0
        %1751 = vmatmul.mubr.bf16.gmra.mrb[0].mxu0 %v1692
        %v1752 = vpop.f32.mrb[0].mxu0
        %v1753 = vadd.f32 %v1664, %v1752
        %v1754 = vpop.f32.mrb[0].mxu0
        %v1755 = vpop.f32.mrb[0].mxu0
        %v1756 = vadd.f32 %v1667, %v1755
        %v1757 = vpop.f32.mrb[0].mxu0
        %1758 = vdwg.mxu0
        %v1759 = vld [vmem:[#allocation19] sm:$0x1]
        %v1761 = vlaneseq
        %v1762 = vshrl.u32 %v1761, 7
        %v1763 = vsub.s32 0, %v1762
        %v1764 = vrot.slane %v1759, %v1763
        %v1766 = vadd.f32 %v1729, %v1764
        %v1767 = vadd.f32 %v1732, %v1764
        %v1768 = vadd.f32 %v1737, %v1764
        %v1769 = vadd.f32 %v1740, %v1764
        %v1770 = vadd.f32 %v1745, %v1764
        %v1771 = vadd.f32 %v1748, %v1764
        %v1772 = vadd.f32 %v1753, %v1764
        %v1773 = vadd.f32 %v1756, %v1764
        %vm1774 = vcmask 39936
        %1775 = vst.msk [vmem:[#allocation5] sm:$0xff] %vm1774, %v1766
        %1776 = vst.msk [vmem:[#allocation5 + $0x8] sm:$0xff] %vm1774, %v1767
        %1777 = vst.msk [vmem:[#allocation5 + $0x10] sm:$0xff] %vm1774, %v1768
        %1778 = vst.msk [vmem:[#allocation5 + $0x18] sm:$0xff] %vm1774, %v1769
        %1779 = vst.msk [vmem:[#allocation5 + $0x20] sm:$0xff] %vm1774, %v1770
        %1780 = vst.msk [vmem:[#allocation5 + $0x28] sm:$0xff] %vm1774, %v1771
        %1781 = vst.msk [vmem:[#allocation5 + $0x30] sm:$0xff] %vm1774, %v1772
        %1782 = vst.msk [vmem:[#allocation5 + $0x38] sm:$0xff] %vm1774, %v1773
        %v1783 = vld [vmem:[%s481] sm:$0xff]
        %v1784 = vsub.s32 %v1783, 1
        %v1785 = vld [vmem:[#allocation21] sm:$0x1f]
        %v1786 = vld [vmem:[#allocation22] sm:$0x1]
        %v1787 = vld [vmem:[#allocation5] sm:$0xff]
        %v1789 = vlaneseq
        %v1790 = vshrl.u32 %v1789, 7
        %v1791 = vsub.s32 0, %v1790
        %v1792 = vrot.slane %v1786, %v1791
        %v1794 = vadd.f32 %v1792, %v1787
        %1796 = vset.pattern.permute.xlu0 0
        %1797 = vperm.xlu0 %1796, %v1794
        %v1798 = vpop.permute.xlu0 %1797
        %v1800 = vlaneseq
        %v1801 = vshrl.u32 %v1800, 7
        %v1802 = vsub.s32 0, %v1801
        %v1803 = vrot.slane %v1785, %v1802
        %v1804 = vadd.f32 %v1798, %v1803
        %1805 = vset.pattern.permute.xlu0 1
        %1806 = vperm.xlu0 %1805, %v1794
        %v1807 = vpop.permute.xlu0 %1806
        %v1809 = vlaneseq
        %v1810 = vshrl.u32 %v1809, 7
        %v1811 = vsub.s32 1, %v1810
        %v1812 = vrot.slane %v1785, %v1811
        %v1813 = vadd.f32 %v1807, %v1812
        %vm1814 = vcmp.gt.f32.partialorder %v1813, %v1804
        %v1815 = vsel %vm1814, 1, 0
        %v1816 = vmax.f32 %v1804, %v1813
        %1817 = vset.pattern.permute.xlu0 2
        %1818 = vperm.xlu0 %1817, %v1794
        %v1819 = vpop.permute.xlu0 %1818
        %v1821 = vlaneseq
        %v1822 = vshrl.u32 %v1821, 7
        %v1823 = vsub.s32 2, %v1822
        %v1824 = vrot.slane %v1785, %v1823
        %v1825 = vadd.f32 %v1819, %v1824
        %vm1826 = vcmp.gt.f32.partialorder %v1825, %v1816
        %v1827 = vsel %vm1826, 2, %v1815
        %v1828 = vmax.f32 %v1816, %v1825
        %1829 = vset.pattern.permute.xlu0 3
        %1830 = vperm.xlu0 %1829, %v1794
        %v1831 = vpop.permute.xlu0 %1830
        %v1833 = vlaneseq
        %v1834 = vshrl.u32 %v1833, 7
        %v1835 = vsub.s32 3, %v1834
        %v1836 = vrot.slane %v1785, %v1835
        %v1837 = vadd.f32 %v1831, %v1836
        %vm1838 = vcmp.gt.f32.partialorder %v1837, %v1828
        %v1839 = vsel %vm1838, 3, %v1827
        %v1840 = vmax.f32 %v1828, %v1837
        %1841 = vset.pattern.permute.xlu0 4
        %1842 = vperm.xlu0 %1841, %v1794
        %v1843 = vpop.permute.xlu0 %1842
        %v1845 = vlaneseq
        %v1846 = vshrl.u32 %v1845, 7
        %v1847 = vsub.s32 4, %v1846
        %v1848 = vrot.slane %v1785, %v1847
        %v1849 = vadd.f32 %v1843, %v1848
        %vm1850 = vcmp.gt.f32.partialorder %v1849, %v1840
        %v1851 = vsel %vm1850, 4, %v1839
        %v1852 = vmax.f32 %v1840, %v1849
        %s1853 = scalar_lea.vmem [#allocation6], 8
        %1854 = vst.msk [vmem:[%s1853] sm:$0xff] %vm1774, %v1851
        %s1855 = scalar_lea.vmem [#allocation5], 8
        %v1856 = vld [vmem:[%s1855] sm:$0xff]
        %v1857 = vadd.f32 %v1852, %v1856
        %vm1858 = vcmp.gt.s32.totalorder %v1783, 1
        %v1859 = vsel %vm1858, 1, 0
        %1860 = vset.pattern.permute.xlu0 0
        %1861 = vperm.xlu0 %1860, %v1859
        %v1862 = vpop.permute.xlu0 %1861
        %vm1863 = vcmp.eq.s32.totalorder %v1862, 1
        %v1864 = vsel %vm1863, %v1857, %v1794
        %1866 = vset.pattern.permute.xlu0 0
        %1867 = vperm.xlu0 %1866, %v1864
        %v1868 = vpop.permute.xlu0 %1867
        %v1870 = vadd.f32 %v1868, %v1803
        %1871 = vset.pattern.permute.xlu0 1
        %1872 = vperm.xlu0 %1871, %v1864
        %v1873 = vpop.permute.xlu0 %1872
        %v1875 = vadd.f32 %v1873, %v1812
        %vm1876 = vcmp.gt.f32.partialorder %v1875, %v1870
        %v1877 = vsel %vm1876, 1, 0
        %v1878 = vmax.f32 %v1870, %v1875
        %1879 = vset.pattern.permute.xlu0 2
        %1880 = vperm.xlu0 %1879, %v1864
        %v1881 = vpop.permute.xlu0 %1880
        %v1883 = vadd.f32 %v1881, %v1824
        %vm1884 = vcmp.gt.f32.partialorder %v1883, %v1878
        %v1885 = vsel %vm1884, 2, %v1877
        %v1886 = vmax.f32 %v1878, %v1883
        %1887 = vset.pattern.permute.xlu0 3
        %1888 = vperm.xlu0 %1887, %v1864
        %v1889 = vpop.permute.xlu0 %1888
        %v1891 = vadd.f32 %v1889, %v1836
        %vm1892 = vcmp.gt.f32.partialorder %v1891, %v1886
        %v1893 = vsel %vm1892, 3, %v1885
        %v1894 = vmax.f32 %v1886, %v1891
        %1895 = vset.pattern.permute.xlu0 4
        %1896 = vperm.xlu0 %1895, %v1864
        %v1897 = vpop.permute.xlu0 %1896
        %v1899 = vadd.f32 %v1897, %v1848
        %vm1900 = vcmp.gt.f32.partialorder %v1899, %v1894
        %v1901 = vsel %vm1900, 4, %v1893
        %v1902 = vmax.f32 %v1894, %v1899
        %s1903 = scalar_lea.vmem [#allocation6], 16
        %1904 = vst.msk [vmem:[%s1903] sm:$0xff] %vm1774, %v1901
        %s1905 = scalar_lea.vmem [#allocation5], 16
        %v1906 = vld [vmem:[%s1905] sm:$0xff]
        %v1907 = vadd.f32 %v1902, %v1906
        %vm1908 = vcmp.gt.s32.totalorder %v1783, 2
        %v1909 = vsel %vm1908, 1, 0
        %1910 = vset.pattern.permute.xlu0 0
        %1911 = vperm.xlu0 %1910, %v1909
        %v1912 = vpop.permute.xlu0 %1911
        %vm1913 = vcmp.eq.s32.totalorder %v1912, 1
        %v1914 = vsel %vm1913, %v1907, %v1864
        %1916 = vset.pattern.permute.xlu0 0
        %1917 = vperm.xlu0 %1916, %v1914
        %v1918 = vpop.permute.xlu0 %1917
        %v1920 = vadd.f32 %v1918, %v1803
        %1921 = vset.pattern.permute.xlu0 1
        %1922 = vperm.xlu0 %1921, %v1914
        %v1923 = vpop.permute.xlu0 %1922
        %v1925 = vadd.f32 %v1923, %v1812
        %vm1926 = vcmp.gt.f32.partialorder %v1925, %v1920
        %v1927 = vsel %vm1926, 1, 0
        %v1928 = vmax.f32 %v1920, %v1925
        %1929 = vset.pattern.permute.xlu0 2
        %1930 = vperm.xlu0 %1929, %v1914
        %v1931 = vpop.permute.xlu0 %1930
        %v1933 = vadd.f32 %v1931, %v1824
        %vm1934 = vcmp.gt.f32.partialorder %v1933, %v1928
        %v1935 = vsel %vm1934, 2, %v1927
        %v1936 = vmax.f32 %v1928, %v1933
        %1937 = vset.pattern.permute.xlu0 3
        %1938 = vperm.xlu0 %1937, %v1914
        %v1939 = vpop.permute.xlu0 %1938
        %v1941 = vadd.f32 %v1939, %v1836
        %vm1942 = vcmp.gt.f32.partialorder %v1941, %v1936
        %v1943 = vsel %vm1942, 3, %v1935
        %v1944 = vmax.f32 %v1936, %v1941
        %1945 = vset.pattern.permute.xlu0 4
        %1946 = vperm.xlu0 %1945, %v1914
        %v1947 = vpop.permute.xlu0 %1946
        %v1949 = vadd.f32 %v1947, %v1848
        %vm1950 = vcmp.gt.f32.partialorder %v1949, %v1944
        %v1951 = vsel %vm1950, 4, %v1943
        %v1952 = vmax.f32 %v1944, %v1949
        %s1953 = scalar_lea.vmem [#allocation6], 24
        %1954 = vst.msk [vmem:[%s1953] sm:$0xff] %vm1774, %v1951
        %s1955 = scalar_lea.vmem [#allocation5], 24
        %v1956 = vld [vmem:[%s1955] sm:$0xff]
        %v1957 = vadd.f32 %v1952, %v1956
        %vm1958 = vcmp.gt.s32.totalorder %v1783, 3
        %v1959 = vsel %vm1958, 1, 0
        %1960 = vset.pattern.permute.xlu0 0
        %1961 = vperm.xlu0 %1960, %v1959
        %v1962 = vpop.permute.xlu0 %1961
        %vm1963 = vcmp.eq.s32.totalorder %v1962, 1
        %v1964 = vsel %vm1963, %v1957, %v1914
        %1966 = vset.pattern.permute.xlu0 0
        %1967 = vperm.xlu0 %1966, %v1964
        %v1968 = vpop.permute.xlu0 %1967
        %v1970 = vadd.f32 %v1968, %v1803
        %1971 = vset.pattern.permute.xlu0 1
        %1972 = vperm.xlu0 %1971, %v1964
        %v1973 = vpop.permute.xlu0 %1972
        %v1975 = vadd.f32 %v1973, %v1812
        %vm1976 = vcmp.gt.f32.partialorder %v1975, %v1970
        %v1977 = vsel %vm1976, 1, 0
        %v1978 = vmax.f32 %v1970, %v1975
        %1979 = vset.pattern.permute.xlu0 2
        %1980 = vperm.xlu0 %1979, %v1964
        %v1981 = vpop.permute.xlu0 %1980
        %v1983 = vadd.f32 %v1981, %v1824
        %vm1984 = vcmp.gt.f32.partialorder %v1983, %v1978
        %v1985 = vsel %vm1984, 2, %v1977
        %v1986 = vmax.f32 %v1978, %v1983
        %1987 = vset.pattern.permute.xlu0 3
        %1988 = vperm.xlu0 %1987, %v1964
        %v1989 = vpop.permute.xlu0 %1988
        %v1991 = vadd.f32 %v1989, %v1836
        %vm1992 = vcmp.gt.f32.partialorder %v1991, %v1986
        %v1993 = vsel %vm1992, 3, %v1985
        %v1994 = vmax.f32 %v1986, %v1991
        %1995 = vset.pattern.permute.xlu0 4
        %1996 = vperm.xlu0 %1995, %v1964
        %v1997 = vpop.permute.xlu0 %1996
        %v1999 = vadd.f32 %v1997, %v1848
        %vm2000 = vcmp.gt.f32.partialorder %v1999, %v1994
        %v2001 = vsel %vm2000, 4, %v1993
        %v2002 = vmax.f32 %v1994, %v1999
        %s2003 = scalar_lea.vmem [#allocation6], 32
        %2004 = vst.msk [vmem:[%s2003] sm:$0xff] %vm1774, %v2001
        %s2005 = scalar_lea.vmem [#allocation5], 32
        %v2006 = vld [vmem:[%s2005] sm:$0xff]
        %v2007 = vadd.f32 %v2002, %v2006
        %vm2008 = vcmp.gt.s32.totalorder %v1783, 4
        %v2009 = vsel %vm2008, 1, 0
        %2010 = vset.pattern.permute.xlu0 0
        %2011 = vperm.xlu0 %2010, %v2009
        %v2012 = vpop.permute.xlu0 %2011
        %vm2013 = vcmp.eq.s32.totalorder %v2012, 1
        %v2014 = vsel %vm2013, %v2007, %v1964
        %2016 = vset.pattern.permute.xlu0 0
        %2017 = vperm.xlu0 %2016, %v2014
        %v2018 = vpop.permute.xlu0 %2017
        %v2020 = vadd.f32 %v2018, %v1803
        %2021 = vset.pattern.permute.xlu0 1
        %2022 = vperm.xlu0 %2021, %v2014
        %v2023 = vpop.permute.xlu0 %2022
        %v2025 = vadd.f32 %v2023, %v1812
        %vm2026 = vcmp.gt.f32.partialorder %v2025, %v2020
        %v2027 = vsel %vm2026, 1, 0
        %v2028 = vmax.f32 %v2020, %v2025
        %2029 = vset.pattern.permute.xlu0 2
        %2030 = vperm.xlu0 %2029, %v2014
        %v2031 = vpop.permute.xlu0 %2030
        %v2033 = vadd.f32 %v2031, %v1824
        %vm2034 = vcmp.gt.f32.partialorder %v2033, %v2028
        %v2035 = vsel %vm2034, 2, %v2027
        %v2036 = vmax.f32 %v2028, %v2033
        %2037 = vset.pattern.permute.xlu0 3
        %2038 = vperm.xlu0 %2037, %v2014
        %v2039 = vpop.permute.xlu0 %2038
        %v2041 = vadd.f32 %v2039, %v1836
        %vm2042 = vcmp.gt.f32.partialorder %v2041, %v2036
        %v2043 = vsel %vm2042, 3, %v2035
        %v2044 = vmax.f32 %v2036, %v2041
        %2045 = vset.pattern.permute.xlu0 4
        %2046 = vperm.xlu0 %2045, %v2014
        %v2047 = vpop.permute.xlu0 %2046
        %v2049 = vadd.f32 %v2047, %v1848
        %vm2050 = vcmp.gt.f32.partialorder %v2049, %v2044
        %v2051 = vsel %vm2050, 4, %v2043
        %v2052 = vmax.f32 %v2044, %v2049
        %s2053 = scalar_lea.vmem [#allocation6], 40
        %2054 = vst.msk [vmem:[%s2053] sm:$0xff] %vm1774, %v2051
        %s2055 = scalar_lea.vmem [#allocation5], 40
        %v2056 = vld [vmem:[%s2055] sm:$0xff]
        %v2057 = vadd.f32 %v2052, %v2056
        %vm2058 = vcmp.gt.s32.totalorder %v1783, 5
        %v2059 = vsel %vm2058, 1, 0
        %2060 = vset.pattern.permute.xlu0 0
        %2061 = vperm.xlu0 %2060, %v2059
        %v2062 = vpop.permute.xlu0 %2061
        %vm2063 = vcmp.eq.s32.totalorder %v2062, 1
        %v2064 = vsel %vm2063, %v2057, %v2014
        %2066 = vset.pattern.permute.xlu0 0
        %2067 = vperm.xlu0 %2066, %v2064
        %v2068 = vpop.permute.xlu0 %2067
        %v2070 = vadd.f32 %v2068, %v1803
        %2071 = vset.pattern.permute.xlu0 1
        %2072 = vperm.xlu0 %2071, %v2064
        %v2073 = vpop.permute.xlu0 %2072
        %v2075 = vadd.f32 %v2073, %v1812
        %vm2076 = vcmp.gt.f32.partialorder %v2075, %v2070
        %v2077 = vsel %vm2076, 1, 0
        %v2078 = vmax.f32 %v2070, %v2075
        %2079 = vset.pattern.permute.xlu0 2
        %2080 = vperm.xlu0 %2079, %v2064
        %v2081 = vpop.permute.xlu0 %2080
        %v2083 = vadd.f32 %v2081, %v1824
        %vm2084 = vcmp.gt.f32.partialorder %v2083, %v2078
        %v2085 = vsel %vm2084, 2, %v2077
        %v2086 = vmax.f32 %v2078, %v2083
        %2087 = vset.pattern.permute.xlu0 3
        %2088 = vperm.xlu0 %2087, %v2064
        %v2089 = vpop.permute.xlu0 %2088
        %v2091 = vadd.f32 %v2089, %v1836
        %vm2092 = vcmp.gt.f32.partialorder %v2091, %v2086
        %v2093 = vsel %vm2092, 3, %v2085
        %v2094 = vmax.f32 %v2086, %v2091
        %2095 = vset.pattern.permute.xlu0 4
        %2096 = vperm.xlu0 %2095, %v2064
        %v2097 = vpop.permute.xlu0 %2096
        %v2099 = vadd.f32 %v2097, %v1848
        %vm2100 = vcmp.gt.f32.partialorder %v2099, %v2094
        %v2101 = vsel %vm2100, 4, %v2093
        %v2102 = vmax.f32 %v2094, %v2099
        %s2103 = scalar_lea.vmem [#allocation6], 48
        %2104 = vst.msk [vmem:[%s2103] sm:$0xff] %vm1774, %v2101
        %s2105 = scalar_lea.vmem [#allocation5], 48
        %v2106 = vld [vmem:[%s2105] sm:$0xff]
        %v2107 = vadd.f32 %v2102, %v2106
        %vm2108 = vcmp.gt.s32.totalorder %v1783, 6
        %v2109 = vsel %vm2108, 1, 0
        %2110 = vset.pattern.permute.xlu0 0
        %2111 = vperm.xlu0 %2110, %v2109
        %v2112 = vpop.permute.xlu0 %2111
        %vm2113 = vcmp.eq.s32.totalorder %v2112, 1
        %v2114 = vsel %vm2113, %v2107, %v2064
        %2116 = vset.pattern.permute.xlu0 0
        %2117 = vperm.xlu0 %2116, %v2114
        %v2118 = vpop.permute.xlu0 %2117
        %v2120 = vadd.f32 %v2118, %v1803
        %2121 = vset.pattern.permute.xlu0 1
        %2122 = vperm.xlu0 %2121, %v2114
        %v2123 = vpop.permute.xlu0 %2122
        %v2125 = vadd.f32 %v2123, %v1812
        %vm2126 = vcmp.gt.f32.partialorder %v2125, %v2120
        %v2127 = vsel %vm2126, 1, 0
        %v2128 = vmax.f32 %v2120, %v2125
        %2129 = vset.pattern.permute.xlu0 2
        %2130 = vperm.xlu0 %2129, %v2114
        %v2131 = vpop.permute.xlu0 %2130
        %v2133 = vadd.f32 %v2131, %v1824
        %vm2134 = vcmp.gt.f32.partialorder %v2133, %v2128
        %v2135 = vsel %vm2134, 2, %v2127
        %v2136 = vmax.f32 %v2128, %v2133
        %2137 = vset.pattern.permute.xlu0 3
        %2138 = vperm.xlu0 %2137, %v2114
        %v2139 = vpop.permute.xlu0 %2138
        %v2141 = vadd.f32 %v2139, %v1836
        %vm2142 = vcmp.gt.f32.partialorder %v2141, %v2136
        %v2143 = vsel %vm2142, 3, %v2135
        %v2144 = vmax.f32 %v2136, %v2141
        %2145 = vset.pattern.permute.xlu0 4
        %2146 = vperm.xlu0 %2145, %v2114
        %v2147 = vpop.permute.xlu0 %2146
        %v2149 = vadd.f32 %v2147, %v1848
        %vm2150 = vcmp.gt.f32.partialorder %v2149, %v2144
        %v2151 = vsel %vm2150, 4, %v2143
        %v2152 = vmax.f32 %v2144, %v2149
        %s2153 = scalar_lea.vmem [#allocation6], 56
        %2154 = vst.msk [vmem:[%s2153] sm:$0xff] %vm1774, %v2151
        %s2155 = scalar_lea.vmem [#allocation5], 56
        %v2156 = vld [vmem:[%s2155] sm:$0xff]
        %v2157 = vadd.f32 %v2152, %v2156
        %vm2158 = vcmp.gt.s32.totalorder %v1783, 7
        %v2159 = vsel %vm2158, 1, 0
        %2160 = vset.pattern.permute.xlu0 0
        %2161 = vperm.xlu0 %2160, %v2159
        %v2162 = vpop.permute.xlu0 %2161
        %vm2163 = vcmp.eq.s32.totalorder %v2162, 1
        %v2164 = vsel %vm2163, %v2157, %v2114
        %v2165 = vld [vmem:[#allocation24] sm:$0x1]
        %v2167 = vlaneseq
        %v2168 = vshrl.u32 %v2167, 7
        %v2169 = vsub.s32 0, %v2168
        %v2170 = vrot.slane %v2165, %v2169
        %v2172 = vadd.f32 %v2164, %v2170
        %v2173 = vsel %vm1774, %v2172, -inf
        %2174 = vmax.xlane.f32.xlu0 %v2173
        %v2175 = vpop.xlane.xlu0 %2174
        %vm2176 = vcmp.eq.f32.partialorder %v2172, %v2175
        %v2177 = vsel %vm2176, %v737, 5
        %v2178 = vsel %vm1774, %v2177, 2147483647
        %v2179 = vand.u32 %v2178, 65535
        %v2180 = vshra.s32 %v2178, 16
        %v2181 = vcvt.s32.f32 %v2179
        %v2182 = vcvt.s32.f32 %v2180
        %2183 = vmin.xlane.f32.xlu0 %v2182
        %v2184 = vpop.xlane.xlu0 %2183
        %vm2185 = vcmp.eq.f32.partialorder %v2182, %v2184
        %v2186 = vsel %vm2185, %v2181, inf
        %2187 = vmin.xlane.f32.xlu0 %v2186
        %v2188 = vpop.xlane.xlu0 %2187
        %v2189 = vcvt.f32.s32 %v2188
        %v2190 = vcvt.f32.s32 %v2184
        %v2191 = vshll.u32 %v2190, 16
        %v2192 = vadd.s32 %v2191, %v2189
        %2193 = vset.pattern.permute.xlu0 0
        %2194 = vperm.xlu0 %2193, %v1784
        %v2195 = vpop.permute.xlu0 %2194
        %vm2196 = vcmp.eq.s32.totalorder %v737, %v2195
        %v2197 = vsel %vm2196, %v2192, 0
        %v2198 = vld [vmem:[%s2153] sm:$0xff]
        %vm2199 = vcmp.eq.s32.totalorder %v737, %v2192
        %v2200 = vsel %vm2199, %v2198, 0
        %v2201 = vsel %vm1774, %v2200, 0
        %v2202 = vand.u32 %v2201, 65535
        %v2203 = vshrl.u32 %v2201, 16
        %v2204 = vcvt.s32.f32 %v2202
        %v2205 = vcvt.s32.f32 %v2203
        %2206 = vadd.xlane.f32.xlu0 %v2204
        %v2207 = vpop.xlane.xlu0 %2206
        %2208 = vadd.xlane.f32.xlu0 %v2205
        %v2209 = vpop.xlane.xlu0 %2208
        %v2210 = vcvt.f32.s32 %v2207
        %v2211 = vcvt.f32.s32 %v2209
        %v2212 = vshll.u32 %v2211, 16
        %v2213 = vadd.s32 %v2212, %v2210
        %vm2214 = vcmp.ge.s32.totalorder %v1784, 7
        %v2215 = vsel %vm2214, %v2213, %v2192
        %vm2216 = vcmp.eq.s32.totalorder %v737, 6
        %v2217 = vsel %vm2214, 1, 0
        %2218 = vset.pattern.permute.xlu0 0
        %2219 = vperm.xlu0 %2218, %v2217
        %v2220 = vpop.permute.xlu0 %2219
        %vm2221 = vcmp.eq.s32.totalorder %v2220, 1
        %vm2222 = vmand %vm2216, %vm2221
        %2223 = vset.pattern.permute.xlu0 0
        %2224 = vperm.xlu0 %2223, %v2215
        %v2225 = vpop.permute.xlu0 %2224
        %v2226 = vsel %vm2222, %v2225, %v2197
        %v2227 = vld [vmem:[%s2103] sm:$0xff]
        %vm2228 = vcmp.eq.s32.totalorder %v737, %v2225
        %v2229 = vsel %vm2228, %v2227, 0
        %v2230 = vsel %vm1774, %v2229, 0
        %v2231 = vand.u32 %v2230, 65535
        %v2232 = vshrl.u32 %v2230, 16
        %v2233 = vcvt.s32.f32 %v2231
        %v2234 = vcvt.s32.f32 %v2232
        %2235 = vadd.xlane.f32.xlu0 %v2233
        %v2236 = vpop.xlane.xlu0 %2235
        %2237 = vadd.xlane.f32.xlu0 %v2234
        %v2238 = vpop.xlane.xlu0 %2237
        %v2239 = vcvt.f32.s32 %v2236
        %v2240 = vcvt.f32.s32 %v2238
        %v2241 = vshll.u32 %v2240, 16
        %v2242 = vadd.s32 %v2241, %v2239
        %vm2243 = vcmp.ge.s32.totalorder %v1784, 6
        %v2244 = vsel %vm2243, %v2242, %v2215
        %vm2245 = vcmp.eq.s32.totalorder %v737, 5
        %v2246 = vsel %vm2243, 1, 0
        %2247 = vset.pattern.permute.xlu0 0
        %2248 = vperm.xlu0 %2247, %v2246
        %v2249 = vpop.permute.xlu0 %2248
        %vm2250 = vcmp.eq.s32.totalorder %v2249, 1
        %vm2251 = vmand %vm2245, %vm2250
        %2252 = vset.pattern.permute.xlu0 0
        %2253 = vperm.xlu0 %2252, %v2244
        %v2254 = vpop.permute.xlu0 %2253
        %v2255 = vsel %vm2251, %v2254, %v2226
        %v2256 = vld [vmem:[%s2053] sm:$0xff]
        %vm2257 = vcmp.eq.s32.totalorder %v737, %v2254
        %v2258 = vsel %vm2257, %v2256, 0
        %v2259 = vsel %vm1774, %v2258, 0
        %v2260 = vand.u32 %v2259, 65535
        %v2261 = vshrl.u32 %v2259, 16
        %v2262 = vcvt.s32.f32 %v2260
        %v2263 = vcvt.s32.f32 %v2261
        %2264 = vadd.xlane.f32.xlu0 %v2262
        %v2265 = vpop.xlane.xlu0 %2264
        %2266 = vadd.xlane.f32.xlu0 %v2263
        %v2267 = vpop.xlane.xlu0 %2266
        %v2268 = vcvt.f32.s32 %v2265
        %v2269 = vcvt.f32.s32 %v2267
        %v2270 = vshll.u32 %v2269, 16
        %v2271 = vadd.s32 %v2270, %v2268
        %vm2272 = vcmp.ge.s32.totalorder %v1784, 5
        %v2273 = vsel %vm2272, %v2271, %v2244
        %vm2274 = vcmp.eq.s32.totalorder %v737, 4
        %v2275 = vsel %vm2272, 1, 0
        %2276 = vset.pattern.permute.xlu0 0
        %2277 = vperm.xlu0 %2276, %v2275
        %v2278 = vpop.permute.xlu0 %2277
        %vm2279 = vcmp.eq.s32.totalorder %v2278, 1
        %vm2280 = vmand %vm2274, %vm2279
        %2281 = vset.pattern.permute.xlu0 0
        %2282 = vperm.xlu0 %2281, %v2273
        %v2283 = vpop.permute.xlu0 %2282
        %v2284 = vsel %vm2280, %v2283, %v2255
        %v2285 = vld [vmem:[%s2003] sm:$0xff]
        %vm2286 = vcmp.eq.s32.totalorder %v737, %v2283
        %v2287 = vsel %vm2286, %v2285, 0
        %v2288 = vsel %vm1774, %v2287, 0
        %v2289 = vand.u32 %v2288, 65535
        %v2290 = vshrl.u32 %v2288, 16
        %v2291 = vcvt.s32.f32 %v2289
        %v2292 = vcvt.s32.f32 %v2290
        %2293 = vadd.xlane.f32.xlu0 %v2291
        %v2294 = vpop.xlane.xlu0 %2293
        %2295 = vadd.xlane.f32.xlu0 %v2292
        %v2296 = vpop.xlane.xlu0 %2295
        %v2297 = vcvt.f32.s32 %v2294
        %v2298 = vcvt.f32.s32 %v2296
        %v2299 = vshll.u32 %v2298, 16
        %v2300 = vadd.s32 %v2299, %v2297
        %vm2301 = vcmp.ge.s32.totalorder %v1784, 4
        %v2302 = vsel %vm2301, %v2300, %v2273
        %vm2303 = vcmp.eq.s32.totalorder %v737, 3
        %v2304 = vsel %vm2301, 1, 0
        %2305 = vset.pattern.permute.xlu0 0
        %2306 = vperm.xlu0 %2305, %v2304
        %v2307 = vpop.permute.xlu0 %2306
        %vm2308 = vcmp.eq.s32.totalorder %v2307, 1
        %vm2309 = vmand %vm2303, %vm2308
        %2310 = vset.pattern.permute.xlu0 0
        %2311 = vperm.xlu0 %2310, %v2302
        %v2312 = vpop.permute.xlu0 %2311
        %v2313 = vsel %vm2309, %v2312, %v2284
        %v2314 = vld [vmem:[%s1953] sm:$0xff]
        %vm2315 = vcmp.eq.s32.totalorder %v737, %v2312
        %v2316 = vsel %vm2315, %v2314, 0
        %v2317 = vsel %vm1774, %v2316, 0
        %v2318 = vand.u32 %v2317, 65535
        %v2319 = vshrl.u32 %v2317, 16
        %v2320 = vcvt.s32.f32 %v2318
        %v2321 = vcvt.s32.f32 %v2319
        %2322 = vadd.xlane.f32.xlu0 %v2320
        %v2323 = vpop.xlane.xlu0 %2322
        %2324 = vadd.xlane.f32.xlu0 %v2321
        %v2325 = vpop.xlane.xlu0 %2324
        %v2326 = vcvt.f32.s32 %v2323
        %v2327 = vcvt.f32.s32 %v2325
        %v2328 = vshll.u32 %v2327, 16
        %v2329 = vadd.s32 %v2328, %v2326
        %vm2330 = vcmp.ge.s32.totalorder %v1784, 3
        %v2331 = vsel %vm2330, %v2329, %v2302
        %vm2332 = vcmp.eq.s32.totalorder %v737, 2
        %v2333 = vsel %vm2330, 1, 0
        %2334 = vset.pattern.permute.xlu0 0
        %2335 = vperm.xlu0 %2334, %v2333
        %v2336 = vpop.permute.xlu0 %2335
        %vm2337 = vcmp.eq.s32.totalorder %v2336, 1
        %vm2338 = vmand %vm2332, %vm2337
        %2339 = vset.pattern.permute.xlu0 0
        %2340 = vperm.xlu0 %2339, %v2331
        %v2341 = vpop.permute.xlu0 %2340
        %v2342 = vsel %vm2338, %v2341, %v2313
        %v2343 = vld [vmem:[%s1903] sm:$0xff]
        %vm2344 = vcmp.eq.s32.totalorder %v737, %v2341
        %v2345 = vsel %vm2344, %v2343, 0
        %v2346 = vsel %vm1774, %v2345, 0
        %v2347 = vand.u32 %v2346, 65535
        %v2348 = vshrl.u32 %v2346, 16
        %v2349 = vcvt.s32.f32 %v2347
        %v2350 = vcvt.s32.f32 %v2348
        %2351 = vadd.xlane.f32.xlu0 %v2349
        %v2352 = vpop.xlane.xlu0 %2351
        %2353 = vadd.xlane.f32.xlu0 %v2350
        %v2354 = vpop.xlane.xlu0 %2353
        %v2355 = vcvt.f32.s32 %v2352
        %v2356 = vcvt.f32.s32 %v2354
        %v2357 = vshll.u32 %v2356, 16
        %v2358 = vadd.s32 %v2357, %v2355
        %vm2359 = vcmp.ge.s32.totalorder %v1784, 2
        %v2360 = vsel %vm2359, %v2358, %v2331
        %vm2361 = vcmp.eq.s32.totalorder %v737, 1
        %v2362 = vsel %vm2359, 1, 0
        %2363 = vset.pattern.permute.xlu0 0
        %2364 = vperm.xlu0 %2363, %v2362
        %v2365 = vpop.permute.xlu0 %2364
        %vm2366 = vcmp.eq.s32.totalorder %v2365, 1
        %vm2367 = vmand %vm2361, %vm2366
        %2368 = vset.pattern.permute.xlu0 0
        %2369 = vperm.xlu0 %2368, %v2360
        %v2370 = vpop.permute.xlu0 %2369
        %v2371 = vsel %vm2367, %v2370, %v2342
        %v2372 = vld [vmem:[%s1853] sm:$0xff]
        %vm2373 = vcmp.eq.s32.totalorder %v737, %v2370
        %v2374 = vsel %vm2373, %v2372, 0
        %v2375 = vsel %vm1774, %v2374, 0
        %v2376 = vand.u32 %v2375, 65535
        %v2377 = vshrl.u32 %v2375, 16
        %v2378 = vcvt.s32.f32 %v2376
        %v2379 = vcvt.s32.f32 %v2377
        %2380 = vadd.xlane.f32.xlu0 %v2378
        %v2381 = vpop.xlane.xlu0 %2380
        %2382 = vadd.xlane.f32.xlu0 %v2379
        %v2383 = vpop.xlane.xlu0 %2382
        %v2384 = vcvt.f32.s32 %v2381
        %v2385 = vcvt.f32.s32 %v2383
        %v2386 = vshll.u32 %v2385, 16
        %v2387 = vadd.s32 %v2386, %v2384
        %vm2388 = vcmp.ge.s32.totalorder %v1784, 1
        %v2389 = vsel %vm2388, %v2387, %v2360
        %vm2390 = vcmp.eq.s32.totalorder %v737, 0
        %v2391 = vsel %vm2388, 1, 0
        %2392 = vset.pattern.permute.xlu0 0
        %2393 = vperm.xlu0 %2392, %v2391
        %v2394 = vpop.permute.xlu0 %2393
        %vm2395 = vcmp.eq.s32.totalorder %v2394, 1
        %vm2396 = vmand %vm2390, %vm2395
        %2397 = vset.pattern.permute.xlu0 0
        %2398 = vperm.xlu0 %2397, %v2389
        %v2399 = vpop.permute.xlu0 %2398
        %v2400 = vsel %vm2396, %v2399, %v2371
        %vm2401 = vcmask 64512
        %2402 = vst.msk [vmem:[%s560] sm:$0xff] %vm2401, %v2400
        %s2403 = sand.u32 %s284, 1
        %s2404 = scalar_lea.sflag [#allocation9], %s2403
        %s2405 = sand.u32 %s284, 1
        %s2406 = smul.addr %s2405, 8
        %s2407 = scalar_lea.vmem [#allocation25], %s2406
        // Predicated region
        $region109: #{tpu_custom_call.1} parent=63 // pred_check
          %p2408 = pneg %p294
        $region110: #{tpu_custom_call.1} parent=63 // pred_check_branch
          %2410 = sbr.rel (%p2408) target = $region112
        $region111: #{tpu_custom_call.1} parent=63 // pred_region
          %s2412 = ssub.s32 128, 128
          %2413 = vsyncadd %s2404, %s2412
          %s2414 = smul.addr %s35, 128
          %s2415 = scalar_lea.hbm %s11, %s2414
          %s2417 = sshll.u32 %s2407, 4
          %s2418 = int_to_ptr.vmem [resolvable:$true] %s2417
          %2420 = dma.vmem_to_hbm [thread:$0]  %s2418, 128, %s2415, %s2404
        $region112: #{tpu_custom_call.1} parent=63 // pred_fallthru
          _
      $region64: #{tpu_custom_call.1} parent=5 // pred_fallthru
        _
      %p2421 = scmp.le.s32.totalorder 2, %s30
      // Predicated region
      $region113: #{tpu_custom_call.1} parent=5 // pred_check
        %p2422 = pneg %p2421
      $region114: #{tpu_custom_call.1} parent=5 // pred_check_branch
        %2424 = sbr.rel (%p2422) target = $region116
      $region115: #{tpu_custom_call.1} parent=5 // pred_region
        %s2425 = ssub.s32 %s30, 2
        // Predicated region
        $region117: #{tpu_custom_call.1} parent=115 // pred_check
          %p2426 = pneg %p300
        $region118: #{tpu_custom_call.1} parent=115 // pred_check_branch
          %2428 = sbr.rel (%p2426) target = $region120
        $region119: #{tpu_custom_call.1} parent=115 // pred_region
          %s2429 = sand.u32 %s285, 1
          %s2430 = scalar_lea.sflag [#allocation9], %s2429
          %s2431 = sand.u32 %s285, 1
          %s2432 = smul.addr %s2431, 8
          %s2433 = scalar_lea.vmem [#allocation25], %s2432
          %2434 = dma.done %s2430, 128
        $region120: #{tpu_custom_call.1} parent=115 // pred_fallthru
          _
      $region116: #{tpu_custom_call.1} parent=5 // pred_fallthru
        _
    $region6: #{tpu_custom_call.1} parent=1 // loop_footer
      %s34 = sadd.s32 1, %s30
    $region7: #{tpu_custom_call.1} parent=1 // loop_footer_branch
      %29 = sbr.rel target = $region3
    $region8: #{tpu_custom_call.1} parent=1 // loop_exit
      _
    %2435 = vsyncpa [#allocation8], 1
    %s2436 = scalar_lea.sflag [#allocation8], 1
    %2437 = vsyncpa %s2436, 1
    %2438 = vsyncpa [#allocation11], 1
    %s2439 = scalar_lea.sflag [#allocation11], 1
    %2440 = vsyncpa %s2439, 1
    %2441 = vsyncpa [#allocation14], 1
    %2442 = vsyncpa [#allocation17], 1
    %2443 = vsyncpa [#allocation20], 1
    %2444 = vsyncpa [#allocation23], 1
    %2445 = vsyncpa [#allocation9], 1
    %s2446 = scalar_lea.sflag [#allocation9], 1
    %2447 = vsyncpa %s2446, 1

</llo_original>
